<compile_context>
chip_gen: v5e
topology: v5e:2x2
jax: 0.10.0
libtpu: 0.0.40
codegen_flags: <defaults>
</compile_context>

<pallas_src>
import functools

import jax
import jax.numpy as jnp
from jax.experimental import pallas as pl
from jax.experimental.pallas import tpu as pltpu

INPUT_DIM = 784
HIDDEN_DIM = 400
LATENT_DIM = 20

# Zero-padded ("lane dense") dims used inside the kernel.  Padding is all zeros,
# so the first 400 / 20 channels are mathematically identical to the unpadded
# model; the extra channels stay exactly zero through ReLU and the zero weight
# rows of the next layer.
HIDDEN_PAD = 512   # 400 -> 512 (multiple of the 256-wide MXU pass)
LATENT_PAD = 128   # 20  -> 128 (one full lane group -> unmasked z stores)


def _round_up(n, m):
    return ((n + m - 1) // m) * m


# ----------------------------------------------------------------------------
# Fused WAE forward kernel: encoder + decoder for one row-tile of the batch.
# ----------------------------------------------------------------------------
def _wae_fwd_kernel(x_ref, w1_ref, b1_ref, w2_ref, b2_ref,
                    w3_ref, b3_ref, w4_ref, b4_ref,
                    recon_ref, z_ref):
    x = x_ref[...].astype(jnp.bfloat16)                                   # (TM, 784)

    # ---- encoder: Linear(784,400) -> ReLU -> Linear(400,20) (padded dims) ----
    h = jnp.dot(x, w1_ref[...], preferred_element_type=jnp.float32) + b1_ref[...]
    h = jnp.maximum(h, 0.0)                                               # (TM, 512) f32
    z = jnp.dot(h.astype(jnp.bfloat16), w2_ref[...],
                preferred_element_type=jnp.float32) + b2_ref[...]         # (TM, 128) f32

    # ---- decoder: Linear(20,400) -> ReLU -> Linear(400,784) -> Sigmoid ----
    d = jnp.dot(z.astype(jnp.bfloat16), w3_ref[...],
                preferred_element_type=jnp.float32) + b3_ref[...]
    d = jnp.maximum(d, 0.0)                                               # (TM, 512) f32
    r = jnp.dot(d.astype(jnp.bfloat16), w4_ref[...],
                preferred_element_type=jnp.float32) + b4_ref[...]         # (TM, 784) f32

    recon_ref[...] = jax.nn.sigmoid(r).astype(recon_ref.dtype)
    z_ref[...] = z


@functools.partial(jax.jit, static_argnames=("recon_dtype",))
def wae_forward(params, x, recon_dtype=jnp.bfloat16):
    """Mirrors WAE.forward: returns (recon_x, z).

    Accepts any x reshapable to (-1, 784), in its native dtype (feed bf16 to
    halve the input HBM stream).  recon_x is emitted in `recon_dtype`
    (bf16 default; pass jnp.float32 for strict parity with the PyTorch f32
    output contract).
    """
    x = x.reshape(-1, INPUT_DIM)
    B = x.shape[0]

    # Row tile: whole batch when tiny (block dims == array dims, so the (8,128)
    # rule is satisfied); otherwise split into >=2 tiles of at most 512 rows so
    # both v7x TensorCores get work and per-step overhead is amortized.  Ragged
    # last tiles are write-masked by Pallas (OOB reads of x are never stored).
    if B <= 16:
        tm = B
    else:
        tm = min(512, _round_up((B + 1) // 2, 8))
    grid_m = pl.cdiv(B, tm)

    def full(shape):
        # Whole (small) weight / bias array as one block with a constant
        # index_map: DMA'd once, VMEM-resident across all batch tiles.
        return pl.BlockSpec(shape, lambda i: (0, 0))

    param_bytes = sum(int(v.size) * v.dtype.itemsize for v in params.values())
    cost = pl.CostEstimate(
        flops=2 * B * (INPUT_DIM * HIDDEN_PAD + HIDDEN_PAD * LATENT_PAD
                       + LATENT_PAD * HIDDEN_PAD + HIDDEN_PAD * INPUT_DIM),
        transcendentals=B * INPUT_DIM,                       # sigmoid
        bytes_accessed=(B * INPUT_DIM * x.dtype.itemsize     # x read
                        + B * INPUT_DIM * jnp.dtype(recon_dtype).itemsize  # recon write
                        + B * LATENT_PAD * 4                 # z write
                        + param_bytes),
    )

    recon, z_pad = pl.pallas_call(
        _wae_fwd_kernel,
        grid=(grid_m,),
        in_specs=[
            pl.BlockSpec((tm, INPUT_DIM), lambda i: (i, 0)),   # x tile
            full((INPUT_DIM, HIDDEN_PAD)),                     # w1 (bf16)
            full((1, HIDDEN_PAD)),                             # b1 (f32)
            full((HIDDEN_PAD, LATENT_PAD)),                    # w2 (bf16)
            full((1, LATENT_PAD)),                             # b2 (f32)
            full((LATENT_PAD, HIDDEN_PAD)),                    # w3 (bf16)
            full((1, HIDDEN_PAD)),                             # b3 (f32)
            full((HIDDEN_PAD, INPUT_DIM)),                     # w4 (bf16)
            full((1, INPUT_DIM)),                              # b4 (f32)
        ],
        out_specs=(
            pl.BlockSpec((tm, INPUT_DIM), lambda i: (i, 0)),   # recon_x
            pl.BlockSpec((tm, LATENT_PAD), lambda i: (i, 0)),  # z (padded, lane-dense)
        ),
        out_shape=(
            jax.ShapeDtypeStruct((B, INPUT_DIM), recon_dtype),
            jax.ShapeDtypeStruct((B, LATENT_PAD), jnp.float32),
        ),
        compiler_params=pltpu.CompilerParams(
            dimension_semantics=("parallel",),
            vmem_limit_bytes=32 * 1024 * 1024),
        cost_estimate=cost,
    )(x, params["w1"], params["b1"], params["w2"], params["b2"],
      params["w3"], params["b3"], params["w4"], params["b4"])

    return recon, z_pad[:, :LATENT_DIM]


# ----------------------------------------------------------------------------
# Parameters: nn.Linear-style init at the true dims, zero-padded to the lane-
# dense kernel dims.  Weights stored transposed as (in, out) and pre-cast to
# bf16 (half-width MXU operands / DMAs); biases stay f32 for the f32 epilogue.
# ----------------------------------------------------------------------------
def init_params(key):
    ks = jax.random.split(key, 8)

    def linear(kw, kb, fan_in, fan_out, pad_in, pad_out):
        bound = 1.0 / (fan_in ** 0.5)
        w = jax.random.uniform(kw, (fan_in, fan_out), jnp.float32, -bound, bound)
        b = jax.random.uniform(kb, (1, fan_out), jnp.float32, -bound, bound)
        w = jnp.zeros((pad_in, pad_out), jnp.float32).at[:fan_in, :fan_out].set(w)
        b = jnp.zeros((1, pad_out), jnp.float32).at[:, :fan_out].set(b)
        return w.astype(jnp.bfloat16), b

    p = {}
    p["w1"], p["b1"] = linear(ks[0], ks[1], INPUT_DIM, HIDDEN_DIM, INPUT_DIM, HIDDEN_PAD)
    p["w2"], p["b2"] = linear(ks[2], ks[3], HIDDEN_DIM, LATENT_DIM, HIDDEN_PAD, LATENT_PAD)
    p["w3"], p["b3"] = linear(ks[4], ks[5], LATENT_DIM, HIDDEN_DIM, LATENT_PAD, HIDDEN_PAD)
    p["w4"], p["b4"] = linear(ks[6], ks[7], HIDDEN_DIM, INPUT_DIM, HIDDEN_PAD, INPUT_DIM)
    return p


def wae_reference(params, x):
    """Pure-JAX f32 reference using the same (padded, bf16) weights."""
    xf = x.reshape(-1, INPUT_DIM).astype(jnp.float32)
    h = jnp.maximum(xf @ params["w1"].astype(jnp.float32) + params["b1"], 0.0)
    z = h @ params["w2"].astype(jnp.float32) + params["b2"]
    d = jnp.maximum(z @ params["w3"].astype(jnp.float32) + params["b3"], 0.0)
    r = jax.nn.sigmoid(d @ params["w4"].astype(jnp.float32) + params["b4"])
    return r, z[:, :LATENT_DIM]


if __name__ == "__main__":
    key = jax.random.PRNGKey(0)
    pkey, xkey = jax.random.split(key)
    params = init_params(pkey)

    # batch=2 MNIST-shaped input (flattened 784, matching x.view(-1, 784)),
    # produced directly in bf16 so the x HBM stream is already half-width.
    x = jax.random.uniform(xkey, (2, INPUT_DIM), dtype=jnp.bfloat16)

    recon, z = wae_forward(params, x)
    jax.block_until_ready((recon, z))

    assert recon.shape == (2, INPUT_DIM) and recon.dtype == jnp.bfloat16
    assert z.shape == (2, LATENT_DIM) and z.dtype == jnp.float32
    assert bool(jnp.all(jnp.isfinite(recon))) and bool(jnp.all(jnp.isfinite(z)))
    assert bool(jnp.all((recon >= 0.0) & (recon <= 1.0)))

    # Loose parity check against the pure-JAX reference (bf16 matmul operands
    # deviate from a strict f32 PyTorch run by ~1e-2 relative).
    recon_ref, z_ref = wae_reference(params, x)
    assert bool(jnp.allclose(recon.astype(jnp.float32), recon_ref, atol=3e-2))
    assert bool(jnp.allclose(z, z_ref, atol=3e-2))

    print("KERNEL_OK")
</pallas_src>

<mosaic_0001>
module attributes {stable_mosaic.version = 11 : i64} {
  func.func @_wae_fwd_kernel(%arg0: i32, %arg1: memref<2x784xbf16, #tpu.memory_space<vmem>>, %arg2: memref<784x512xbf16, #tpu.memory_space<vmem>>, %arg3: memref<1x512xf32, #tpu.memory_space<vmem>>, %arg4: memref<512x128xbf16, #tpu.memory_space<vmem>>, %arg5: memref<1x128xf32, #tpu.memory_space<vmem>>, %arg6: memref<128x512xbf16, #tpu.memory_space<vmem>>, %arg7: memref<1x512xf32, #tpu.memory_space<vmem>>, %arg8: memref<512x784xbf16, #tpu.memory_space<vmem>>, %arg9: memref<1x784xf32, #tpu.memory_space<vmem>>, %arg10: memref<2x784xbf16, #tpu.memory_space<vmem>>, %arg11: memref<2x128xf32, #tpu.memory_space<vmem>>) attributes {dimension_semantics = [#tpu.dimension_semantics<parallel>], iteration_bounds = array<i64: 1>, scalar_prefetch = 0 : i64, scratch_operands = 0 : i64, tpu.core_type = #tpu.core_type<tc>, window_params = [{transform_indices = @transform_0, window_bounds = array<i64: 2, 784>}, {pipeline_mode = #tpu.pipeline_mode<synchronous>, transform_indices = @transform_1, window_bounds = array<i64: 784, 512>}, {pipeline_mode = #tpu.pipeline_mode<synchronous>, transform_indices = @transform_2, window_bounds = array<i64: 1, 512>}, {pipeline_mode = #tpu.pipeline_mode<synchronous>, transform_indices = @transform_3, window_bounds = array<i64: 512, 128>}, {pipeline_mode = #tpu.pipeline_mode<synchronous>, transform_indices = @transform_4, window_bounds = array<i64: 1, 128>}, {pipeline_mode = #tpu.pipeline_mode<synchronous>, transform_indices = @transform_5, window_bounds = array<i64: 128, 512>}, {pipeline_mode = #tpu.pipeline_mode<synchronous>, transform_indices = @transform_6, window_bounds = array<i64: 1, 512>}, {pipeline_mode = #tpu.pipeline_mode<synchronous>, transform_indices = @transform_7, window_bounds = array<i64: 512, 784>}, {pipeline_mode = #tpu.pipeline_mode<synchronous>, transform_indices = @transform_8, window_bounds = array<i64: 1, 784>}, {transform_indices = @transform_9, window_bounds = array<i64: 2, 784>}, {transform_indices = @transform_10, window_bounds = array<i64: 2, 128>}]} {
    %c0 = arith.constant 0 : index
    %c0_0 = arith.constant 0 : index
    %0 = vector.load %arg1[%c0, %c0_0] : memref<2x784xbf16, #tpu.memory_space<vmem>>, vector<2x784xbf16>
    %c0_1 = arith.constant 0 : index
    %c0_2 = arith.constant 0 : index
    %1 = vector.load %arg2[%c0_1, %c0_2] : memref<784x512xbf16, #tpu.memory_space<vmem>>, vector<784x512xbf16>
    %cst = arith.constant dense<0.000000e+00> : vector<2x512xf32>
    %2 = tpu.matmul %0, %1, %cst {dimension_numbers = #tpu.dot_dimension_numbers<[1], [0], [0], [1], [0, 0, 1, 1], [], []>} : vector<2x784xbf16>, vector<784x512xbf16>, vector<2x512xf32> -> vector<2x512xf32>
    %c0_3 = arith.constant 0 : index
    %c0_4 = arith.constant 0 : index
    %3 = vector.load %arg3[%c0_3, %c0_4] : memref<1x512xf32, #tpu.memory_space<vmem>>, vector<1x512xf32>
    %4 = vector.broadcast %3 : vector<1x512xf32> to vector<2x512xf32>
    %5 = arith.addf %2, %4 : vector<2x512xf32>
    %cst_5 = arith.constant 0.000000e+00 : f32
    %6 = vector.broadcast %cst_5 : f32 to vector<2x512xf32>
    %7 = arith.maximumf %5, %6 : vector<2x512xf32>
    %8 = arith.truncf %7 : vector<2x512xf32> to vector<2x512xbf16>
    %c0_6 = arith.constant 0 : index
    %c0_7 = arith.constant 0 : index
    %9 = vector.load %arg4[%c0_6, %c0_7] : memref<512x128xbf16, #tpu.memory_space<vmem>>, vector<512x128xbf16>
    %cst_8 = arith.constant dense<0.000000e+00> : vector<2x128xf32>
    %10 = tpu.matmul %8, %9, %cst_8 {dimension_numbers = #tpu.dot_dimension_numbers<[1], [0], [0], [1], [0, 0, 1, 1], [], []>} : vector<2x512xbf16>, vector<512x128xbf16>, vector<2x128xf32> -> vector<2x128xf32>
    %c0_9 = arith.constant 0 : index
    %c0_10 = arith.constant 0 : index
    %11 = vector.load %arg5[%c0_9, %c0_10] : memref<1x128xf32, #tpu.memory_space<vmem>>, vector<1x128xf32>
    %12 = vector.broadcast %11 : vector<1x128xf32> to vector<2x128xf32>
    %13 = arith.addf %10, %12 : vector<2x128xf32>
    %14 = arith.truncf %13 : vector<2x128xf32> to vector<2x128xbf16>
    %c0_11 = arith.constant 0 : index
    %c0_12 = arith.constant 0 : index
    %15 = vector.load %arg6[%c0_11, %c0_12] : memref<128x512xbf16, #tpu.memory_space<vmem>>, vector<128x512xbf16>
    %cst_13 = arith.constant dense<0.000000e+00> : vector<2x512xf32>
    %16 = tpu.matmul %14, %15, %cst_13 {dimension_numbers = #tpu.dot_dimension_numbers<[1], [0], [0], [1], [0, 0, 1, 1], [], []>} : vector<2x128xbf16>, vector<128x512xbf16>, vector<2x512xf32> -> vector<2x512xf32>
    %c0_14 = arith.constant 0 : index
    %c0_15 = arith.constant 0 : index
    %17 = vector.load %arg7[%c0_14, %c0_15] : memref<1x512xf32, #tpu.memory_space<vmem>>, vector<1x512xf32>
    %18 = vector.broadcast %17 : vector<1x512xf32> to vector<2x512xf32>
    %19 = arith.addf %16, %18 : vector<2x512xf32>
    %cst_16 = arith.constant 0.000000e+00 : f32
    %20 = vector.broadcast %cst_16 : f32 to vector<2x512xf32>
    %21 = arith.maximumf %19, %20 : vector<2x512xf32>
    %22 = arith.truncf %21 : vector<2x512xf32> to vector<2x512xbf16>
    %c0_17 = arith.constant 0 : index
    %c0_18 = arith.constant 0 : index
    %23 = vector.load %arg8[%c0_17, %c0_18] : memref<512x784xbf16, #tpu.memory_space<vmem>>, vector<512x784xbf16>
    %cst_19 = arith.constant dense<0.000000e+00> : vector<2x784xf32>
    %24 = tpu.matmul %22, %23, %cst_19 {dimension_numbers = #tpu.dot_dimension_numbers<[1], [0], [0], [1], [0, 0, 1, 1], [], []>} : vector<2x512xbf16>, vector<512x784xbf16>, vector<2x784xf32> -> vector<2x784xf32>
    %c0_20 = arith.constant 0 : index
    %c0_21 = arith.constant 0 : index
    %25 = vector.load %arg9[%c0_20, %c0_21] : memref<1x784xf32, #tpu.memory_space<vmem>>, vector<1x784xf32>
    %26 = vector.broadcast %25 : vector<1x784xf32> to vector<2x784xf32>
    %27 = arith.addf %24, %26 : vector<2x784xf32>
    %28 = arith.negf %27 : vector<2x784xf32>
    %29 = math.exp %28 : vector<2x784xf32>
    %cst_22 = arith.constant 1.000000e+00 : f32
    %30 = vector.broadcast %cst_22 : f32 to vector<2x784xf32>
    %31 = arith.addf %30, %29 : vector<2x784xf32>
    %32 = arith.divf %30, %31 : vector<2x784xf32>
    %33 = arith.truncf %32 : vector<2x784xf32> to vector<2x784xbf16>
    %c0_23 = arith.constant 0 : index
    %c0_24 = arith.constant 0 : index
    %34 = vector.load %arg10[%c0_23, %c0_24] : memref<2x784xbf16, #tpu.memory_space<vmem>>, vector<2x784xbf16>
    tpu.vector_store %arg10[%c0_23, %c0_24], %33 {strides = array<i32>} : memref<2x784xbf16, #tpu.memory_space<vmem>>, vector<2x784xbf16>,
    %c0_25 = arith.constant 0 : index
    %c0_26 = arith.constant 0 : index
    %35 = vector.load %arg11[%c0_25, %c0_26] : memref<2x128xf32, #tpu.memory_space<vmem>>, vector<2x128xf32>
    tpu.vector_store %arg11[%c0_25, %c0_26], %13 {strides = array<i32>} : memref<2x128xf32, #tpu.memory_space<vmem>>, vector<2x128xf32>,
    return
  }
  func.func @transform_0(%arg0: i32) -> (i32, i32) {
    %c0_i32 = arith.constant 0 : i32
    %c0_i32_0 = arith.constant 0 : i32
    return %arg0, %c0_i32 : i32, i32
  }
  func.func @transform_1(%arg0: i32) -> (i32, i32) {
    %c0_i32 = arith.constant 0 : i32
    %c0_i32_0 = arith.constant 0 : i32
    %c0_i32_1 = arith.constant 0 : i32
    return %c0_i32, %c0_i32_0 : i32, i32
  }
  func.func @transform_2(%arg0: i32) -> (i32, i32) {
    %c0_i32 = arith.constant 0 : i32
    %c0_i32_0 = arith.constant 0 : i32
    %c0_i32_1 = arith.constant 0 : i32
    return %c0_i32, %c0_i32_0 : i32, i32
  }
  func.func @transform_3(%arg0: i32) -> (i32, i32) {
    %c0_i32 = arith.constant 0 : i32
    %c0_i32_0 = arith.constant 0 : i32
    %c0_i32_1 = arith.constant 0 : i32
    return %c0_i32, %c0_i32_0 : i32, i32
  }
  func.func @transform_4(%arg0: i32) -> (i32, i32) {
    %c0_i32 = arith.constant 0 : i32
    %c0_i32_0 = arith.constant 0 : i32
    %c0_i32_1 = arith.constant 0 : i32
    return %c0_i32, %c0_i32_0 : i32, i32
  }
  func.func @transform_5(%arg0: i32) -> (i32, i32) {
    %c0_i32 = arith.constant 0 : i32
    %c0_i32_0 = arith.constant 0 : i32
    %c0_i32_1 = arith.constant 0 : i32
    return %c0_i32, %c0_i32_0 : i32, i32
  }
  func.func @transform_6(%arg0: i32) -> (i32, i32) {
    %c0_i32 = arith.constant 0 : i32
    %c0_i32_0 = arith.constant 0 : i32
    %c0_i32_1 = arith.constant 0 : i32
    return %c0_i32, %c0_i32_0 : i32, i32
  }
  func.func @transform_7(%arg0: i32) -> (i32, i32) {
    %c0_i32 = arith.constant 0 : i32
    %c0_i32_0 = arith.constant 0 : i32
    %c0_i32_1 = arith.constant 0 : i32
    return %c0_i32, %c0_i32_0 : i32, i32
  }
  func.func @transform_8(%arg0: i32) -> (i32, i32) {
    %c0_i32 = arith.constant 0 : i32
    %c0_i32_0 = arith.constant 0 : i32
    %c0_i32_1 = arith.constant 0 : i32
    return %c0_i32, %c0_i32_0 : i32, i32
  }
  func.func @transform_9(%arg0: i32) -> (i32, i32) {
    %c0_i32 = arith.constant 0 : i32
    %c0_i32_0 = arith.constant 0 : i32
    return %arg0, %c0_i32 : i32, i32
  }
  func.func @transform_10(%arg0: i32) -> (i32, i32) {
    %c0_i32 = arith.constant 0 : i32
    %c0_i32_0 = arith.constant 0 : i32
    return %arg0, %c0_i32 : i32, i32
  }
}

</mosaic_0001>

<llo_original>
// kernel: wae_forward.1
$region0: #{wae_forward.1}
  #allocation0 [shape = 'u32[]', space=smem, size = 0x4, offset = 0x4, fixed_abs, tag = 'smem constant byte address 0x4 - core index']
  #allocation1 [shape = 'u32[72,128]{1,0:T(1,128)}', space=vmem, size = 0x9000, scoped, tag = 'internal scratch']
  %s0 = inlined_call_operand.vmem [shape: bf16[2,784], index: 0, kind: input, shape index: {}]
  %s1 = inlined_call_operand.vmem [shape: bf16[784,512], index: 1, kind: input, shape index: {}]
  %s2 = inlined_call_operand.vmem [shape: f32[1,512], index: 2, kind: input, shape index: {}]
  %s3 = inlined_call_operand.vmem [shape: bf16[512,128], index: 3, kind: input, shape index: {}]
  %s4 = inlined_call_operand.vmem [shape: f32[1,128], index: 4, kind: input, shape index: {}]
  %s5 = inlined_call_operand.vmem [shape: bf16[128,512], index: 5, kind: input, shape index: {}]
  %s6 = inlined_call_operand.vmem [shape: f32[1,512], index: 6, kind: input, shape index: {}]
  %s7 = inlined_call_operand.vmem [shape: bf16[512,784], index: 7, kind: input, shape index: {}]
  %s8 = inlined_call_operand.vmem [shape: f32[1,784], index: 8, kind: input, shape index: {}]
  %s9 = inlined_call_operand.hbm [shape: bf16[2,784], index: 9, kind: output, shape index: {0}]
  %s10 = inlined_call_operand.hbm [shape: f32[2,128], index: 10, kind: output, shape index: {1}]
  %11 = xla_tuple %s9, %s10
  %s12 = sld [smem:[#allocation0]]
  $region54: #{wae_forward.1} parent=0
    _
  %s14 = ssub.s32 1, %s12
  %s15 = scalar_select 0, %s14, %s12
  $region1: #{wae_forward.1} parent=0
    #allocation2 [shape = 'u8[3584]{0}', space=vmem, size = 0x1000, scoped, tag = 'output window, operand 0, single buffered']
    #allocation3 [shape = 's32[1]{0}', space=sflag, size = 0x4, scoped, tag = 'scoped memory for wae_forward.1']
    #allocation4 [shape = 'u8[1024]{0}', space=vmem, size = 0x400, scoped, tag = 'output window, operand 1, single buffered']
    #allocation5 [shape = 's32[1]{0}', space=sflag, size = 0x4, scoped, tag = 'scoped memory for wae_forward.1']
    %16 = vsyncpa [#allocation3], 0
    %17 = vsyncpa [#allocation5], 0
    // Predicated region
    $region2: #{wae_forward.1} parent=1 // pred_check
      _
    $region3: #{wae_forward.1} parent=1 // pred_check_branch
      %19 = sbr.rel (0) target = $region5
    $region4: #{wae_forward.1} parent=1 // pred_region
      _
    $region5: #{wae_forward.1} parent=1 // pred_fallthru
      _
    // Predicated region
    $region6: #{wae_forward.1} parent=1 // pred_check
      _
    $region7: #{wae_forward.1} parent=1 // pred_check_branch
      %21 = sbr.rel (0) target = $region9
    $region8: #{wae_forward.1} parent=1 // pred_region
      _
    $region9: #{wae_forward.1} parent=1 // pred_fallthru
      _
    // Predicated region
    $region10: #{wae_forward.1} parent=1 // pred_check
      _
    $region11: #{wae_forward.1} parent=1 // pred_check_branch
      %23 = sbr.rel (0) target = $region13
    $region12: #{wae_forward.1} parent=1 // pred_region
      _
    $region13: #{wae_forward.1} parent=1 // pred_fallthru
      _
    // Predicated region
    $region14: #{wae_forward.1} parent=1 // pred_check
      _
    $region15: #{wae_forward.1} parent=1 // pred_check_branch
      %25 = sbr.rel (0) target = $region17
    $region16: #{wae_forward.1} parent=1 // pred_region
      _
    $region17: #{wae_forward.1} parent=1 // pred_fallthru
      _
    // Predicated region
    $region18: #{wae_forward.1} parent=1 // pred_check
      _
    $region19: #{wae_forward.1} parent=1 // pred_check_branch
      %27 = sbr.rel (0) target = $region21
    $region20: #{wae_forward.1} parent=1 // pred_region
      _
    $region21: #{wae_forward.1} parent=1 // pred_fallthru
      _
    // Predicated region
    $region22: #{wae_forward.1} parent=1 // pred_check
      _
    $region23: #{wae_forward.1} parent=1 // pred_check_branch
      %29 = sbr.rel (0) target = $region25
    $region24: #{wae_forward.1} parent=1 // pred_region
      _
    $region25: #{wae_forward.1} parent=1 // pred_fallthru
      _
    // Predicated region
    $region26: #{wae_forward.1} parent=1 // pred_check
      _
    $region27: #{wae_forward.1} parent=1 // pred_check_branch
      %31 = sbr.rel (0) target = $region29
    $region28: #{wae_forward.1} parent=1 // pred_region
      _
    $region29: #{wae_forward.1} parent=1 // pred_fallthru
      _
    // Predicated region
    $region30: #{wae_forward.1} parent=1 // pred_check
      _
    $region31: #{wae_forward.1} parent=1 // pred_check_branch
      %33 = sbr.rel (0) target = $region33
    $region32: #{wae_forward.1} parent=1 // pred_region
      _
    $region33: #{wae_forward.1} parent=1 // pred_fallthru
      _
    // Predicated region
    $region34: #{wae_forward.1} parent=1 // pred_check
      _
    $region35: #{wae_forward.1} parent=1 // pred_check_branch
      %35 = sbr.rel (0) target = $region37
    $region36: #{wae_forward.1} parent=1 // pred_region
      _
    $region37: #{wae_forward.1} parent=1 // pred_fallthru
      _
    %v37 = vld [vmem:[%s0] sm:$0x7f]
    %v38 = vld [vmem:[%s1] sm:$0xff]
    %v39 = vld [vmem:[%s1 + $0x8] sm:$0xff]
    %v40 = vld [vmem:[%s1 + $0x10] sm:$0xff]
    %v41 = vld [vmem:[%s1 + $0x18] sm:$0xff]
    %v42 = vld [vmem:[%s1 + $0x20] sm:$0xff]
    %v43 = vld [vmem:[%s1 + $0x28] sm:$0xff]
    %v44 = vld [vmem:[%s1 + $0x30] sm:$0xff]
    %v45 = vld [vmem:[%s1 + $0x38] sm:$0xff]
    %v46 = vld [vmem:[%s1 + $0x40] sm:$0xff]
    %v47 = vld [vmem:[%s1 + $0x48] sm:$0xff]
    %v48 = vld [vmem:[%s1 + $0x50] sm:$0xff]
    %v49 = vld [vmem:[%s1 + $0x58] sm:$0xff]
    %v50 = vld [vmem:[%s1 + $0x60] sm:$0xff]
    %v51 = vld [vmem:[%s1 + $0x68] sm:$0xff]
    %v52 = vld [vmem:[%s1 + $0x70] sm:$0xff]
    %v53 = vld [vmem:[%s1 + $0x78] sm:$0xff]
    %v54 = vld [vmem:[%s1 + $0x80] sm:$0xff]
    %v55 = vld [vmem:[%s1 + $0x88] sm:$0xff]
    %v56 = vld [vmem:[%s1 + $0x90] sm:$0xff]
    %v57 = vld [vmem:[%s1 + $0x98] sm:$0xff]
    %v58 = vld [vmem:[%s1 + $0xa0] sm:$0xff]
    %v59 = vld [vmem:[%s1 + $0xa8] sm:$0xff]
    %v60 = vld [vmem:[%s1 + $0xb0] sm:$0xff]
    %v61 = vld [vmem:[%s1 + $0xb8] sm:$0xff]
    %v62 = vld [vmem:[%s1 + $0xc0] sm:$0xff]
    %v63 = vld [vmem:[%s1 + $0xc8] sm:$0xff]
    %v64 = vld [vmem:[%s1 + $0xd0] sm:$0xff]
    %v65 = vld [vmem:[%s1 + $0xd8] sm:$0xff]
    %v66 = vld [vmem:[%s1 + $0xe0] sm:$0xff]
    %v67 = vld [vmem:[%s1 + $0xe8] sm:$0xff]
    %v68 = vld [vmem:[%s1 + $0xf0] sm:$0xff]
    %v69 = vld [vmem:[%s1 + $0xf8] sm:$0xff]
    %v70 = vld [vmem:[%s1 + $0x100] sm:$0xff]
    %v71 = vld [vmem:[%s1 + $0x108] sm:$0xff]
    %v72 = vld [vmem:[%s1 + $0x110] sm:$0xff]
    %v73 = vld [vmem:[%s1 + $0x118] sm:$0xff]
    %v74 = vld [vmem:[%s1 + $0x120] sm:$0xff]
    %v75 = vld [vmem:[%s1 + $0x128] sm:$0xff]
    %v76 = vld [vmem:[%s1 + $0x130] sm:$0xff]
    %v77 = vld [vmem:[%s1 + $0x138] sm:$0xff]
    %v78 = vld [vmem:[%s1 + $0x140] sm:$0xff]
    %v79 = vld [vmem:[%s1 + $0x148] sm:$0xff]
    %v80 = vld [vmem:[%s1 + $0x150] sm:$0xff]
    %v81 = vld [vmem:[%s1 + $0x158] sm:$0xff]
    %v82 = vld [vmem:[%s1 + $0x160] sm:$0xff]
    %v83 = vld [vmem:[%s1 + $0x168] sm:$0xff]
    %v84 = vld [vmem:[%s1 + $0x170] sm:$0xff]
    %v85 = vld [vmem:[%s1 + $0x178] sm:$0xff]
    %v86 = vld [vmem:[%s1 + $0x180] sm:$0xff]
    %v87 = vld [vmem:[%s1 + $0x188] sm:$0xff]
    %v88 = vld [vmem:[%s1 + $0x190] sm:$0xff]
    %v89 = vld [vmem:[%s1 + $0x198] sm:$0xff]
    %v90 = vld [vmem:[%s1 + $0x1a0] sm:$0xff]
    %v91 = vld [vmem:[%s1 + $0x1a8] sm:$0xff]
    %v92 = vld [vmem:[%s1 + $0x1b0] sm:$0xff]
    %v93 = vld [vmem:[%s1 + $0x1b8] sm:$0xff]
    %v94 = vld [vmem:[%s1 + $0x1c0] sm:$0xff]
    %v95 = vld [vmem:[%s1 + $0x1c8] sm:$0xff]
    %v96 = vld [vmem:[%s1 + $0x1d0] sm:$0xff]
    %v97 = vld [vmem:[%s1 + $0x1d8] sm:$0xff]
    %v98 = vld [vmem:[%s1 + $0x1e0] sm:$0xff]
    %v99 = vld [vmem:[%s1 + $0x1e8] sm:$0xff]
    %v100 = vld [vmem:[%s1 + $0x1f0] sm:$0xff]
    %v101 = vld [vmem:[%s1 + $0x1f8] sm:$0xff]
    %v102 = vld [vmem:[%s1 + $0x200] sm:$0xff]
    %v103 = vld [vmem:[%s1 + $0x208] sm:$0xff]
    %v104 = vld [vmem:[%s1 + $0x210] sm:$0xff]
    %v105 = vld [vmem:[%s1 + $0x218] sm:$0xff]
    %v106 = vld [vmem:[%s1 + $0x220] sm:$0xff]
    %v107 = vld [vmem:[%s1 + $0x228] sm:$0xff]
    %v108 = vld [vmem:[%s1 + $0x230] sm:$0xff]
    %v109 = vld [vmem:[%s1 + $0x238] sm:$0xff]
    %v110 = vld [vmem:[%s1 + $0x240] sm:$0xff]
    %v111 = vld [vmem:[%s1 + $0x248] sm:$0xff]
    %v112 = vld [vmem:[%s1 + $0x250] sm:$0xff]
    %v113 = vld [vmem:[%s1 + $0x258] sm:$0xff]
    %v114 = vld [vmem:[%s1 + $0x260] sm:$0xff]
    %v115 = vld [vmem:[%s1 + $0x268] sm:$0xff]
    %v116 = vld [vmem:[%s1 + $0x270] sm:$0xff]
    %v117 = vld [vmem:[%s1 + $0x278] sm:$0xff]
    %v118 = vld [vmem:[%s1 + $0x280] sm:$0xff]
    %v119 = vld [vmem:[%s1 + $0x288] sm:$0xff]
    %v120 = vld [vmem:[%s1 + $0x290] sm:$0xff]
    %v121 = vld [vmem:[%s1 + $0x298] sm:$0xff]
    %v122 = vld [vmem:[%s1 + $0x2a0] sm:$0xff]
    %v123 = vld [vmem:[%s1 + $0x2a8] sm:$0xff]
    %v124 = vld [vmem:[%s1 + $0x2b0] sm:$0xff]
    %v125 = vld [vmem:[%s1 + $0x2b8] sm:$0xff]
    %v126 = vld [vmem:[%s1 + $0x2c0] sm:$0xff]
    %v127 = vld [vmem:[%s1 + $0x2c8] sm:$0xff]
    %v128 = vld [vmem:[%s1 + $0x2d0] sm:$0xff]
    %v129 = vld [vmem:[%s1 + $0x2d8] sm:$0xff]
    %v130 = vld [vmem:[%s1 + $0x2e0] sm:$0xff]
    %v131 = vld [vmem:[%s1 + $0x2e8] sm:$0xff]
    %v132 = vld [vmem:[%s1 + $0x2f0] sm:$0xff]
    %v133 = vld [vmem:[%s1 + $0x2f8] sm:$0xff]
    %v134 = vld [vmem:[%s1 + $0x300] sm:$0xff]
    %v135 = vld [vmem:[%s1 + $0x308] sm:$0xff]
    %v136 = vld [vmem:[%s1 + $0x310] sm:$0xff]
    %v137 = vld [vmem:[%s1 + $0x318] sm:$0xff]
    %v138 = vld [vmem:[%s1 + $0x320] sm:$0xff]
    %v139 = vld [vmem:[%s1 + $0x328] sm:$0xff]
    %v140 = vld [vmem:[%s1 + $0x330] sm:$0xff]
    %v141 = vld [vmem:[%s1 + $0x338] sm:$0xff]
    %v142 = vld [vmem:[%s1 + $0x340] sm:$0xff]
    %v143 = vld [vmem:[%s1 + $0x348] sm:$0xff]
    %v144 = vld [vmem:[%s1 + $0x350] sm:$0xff]
    %v145 = vld [vmem:[%s1 + $0x358] sm:$0xff]
    %v146 = vld [vmem:[%s1 + $0x360] sm:$0xff]
    %v147 = vld [vmem:[%s1 + $0x368] sm:$0xff]
    %v148 = vld [vmem:[%s1 + $0x370] sm:$0xff]
    %v149 = vld [vmem:[%s1 + $0x378] sm:$0xff]
    %v150 = vld [vmem:[%s1 + $0x380] sm:$0xff]
    %v151 = vld [vmem:[%s1 + $0x388] sm:$0xff]
    %v152 = vld [vmem:[%s1 + $0x390] sm:$0xff]
    %v153 = vld [vmem:[%s1 + $0x398] sm:$0xff]
    %v154 = vld [vmem:[%s1 + $0x3a0] sm:$0xff]
    %v155 = vld [vmem:[%s1 + $0x3a8] sm:$0xff]
    %v156 = vld [vmem:[%s1 + $0x3b0] sm:$0xff]
    %v157 = vld [vmem:[%s1 + $0x3b8] sm:$0xff]
    %v158 = vld [vmem:[%s1 + $0x3c0] sm:$0xff]
    %v159 = vld [vmem:[%s1 + $0x3c8] sm:$0xff]
    %v160 = vld [vmem:[%s1 + $0x3d0] sm:$0xff]
    %v161 = vld [vmem:[%s1 + $0x3d8] sm:$0xff]
    %v162 = vld [vmem:[%s1 + $0x3e0] sm:$0xff]
    %v163 = vld [vmem:[%s1 + $0x3e8] sm:$0xff]
    %v164 = vld [vmem:[%s1 + $0x3f0] sm:$0xff]
    %v165 = vld [vmem:[%s1 + $0x3f8] sm:$0xff]
    %v166 = vld [vmem:[%s1 + $0x400] sm:$0xff]
    %v167 = vld [vmem:[%s1 + $0x408] sm:$0xff]
    %v168 = vld [vmem:[%s1 + $0x410] sm:$0xff]
    %v169 = vld [vmem:[%s1 + $0x418] sm:$0xff]
    %v170 = vld [vmem:[%s1 + $0x420] sm:$0xff]
    %v171 = vld [vmem:[%s1 + $0x428] sm:$0xff]
    %v172 = vld [vmem:[%s1 + $0x430] sm:$0xff]
    %v173 = vld [vmem:[%s1 + $0x438] sm:$0xff]
    %v174 = vld [vmem:[%s1 + $0x440] sm:$0xff]
    %v175 = vld [vmem:[%s1 + $0x448] sm:$0xff]
    %v176 = vld [vmem:[%s1 + $0x450] sm:$0xff]
    %v177 = vld [vmem:[%s1 + $0x458] sm:$0xff]
    %v178 = vld [vmem:[%s1 + $0x460] sm:$0xff]
    %v179 = vld [vmem:[%s1 + $0x468] sm:$0xff]
    %v180 = vld [vmem:[%s1 + $0x470] sm:$0xff]
    %v181 = vld [vmem:[%s1 + $0x478] sm:$0xff]
    %v182 = vld [vmem:[%s1 + $0x480] sm:$0xff]
    %v183 = vld [vmem:[%s1 + $0x488] sm:$0xff]
    %v184 = vld [vmem:[%s1 + $0x490] sm:$0xff]
    %v185 = vld [vmem:[%s1 + $0x498] sm:$0xff]
    %v186 = vld [vmem:[%s1 + $0x4a0] sm:$0xff]
    %v187 = vld [vmem:[%s1 + $0x4a8] sm:$0xff]
    %v188 = vld [vmem:[%s1 + $0x4b0] sm:$0xff]
    %v189 = vld [vmem:[%s1 + $0x4b8] sm:$0xff]
    %v190 = vld [vmem:[%s1 + $0x4c0] sm:$0xff]
    %v191 = vld [vmem:[%s1 + $0x4c8] sm:$0xff]
    %v192 = vld [vmem:[%s1 + $0x4d0] sm:$0xff]
    %v193 = vld [vmem:[%s1 + $0x4d8] sm:$0xff]
    %v194 = vld [vmem:[%s1 + $0x4e0] sm:$0xff]
    %v195 = vld [vmem:[%s1 + $0x4e8] sm:$0xff]
    %v196 = vld [vmem:[%s1 + $0x4f0] sm:$0xff]
    %v197 = vld [vmem:[%s1 + $0x4f8] sm:$0xff]
    %v198 = vld [vmem:[%s1 + $0x500] sm:$0xff]
    %v199 = vld [vmem:[%s1 + $0x508] sm:$0xff]
    %v200 = vld [vmem:[%s1 + $0x510] sm:$0xff]
    %v201 = vld [vmem:[%s1 + $0x518] sm:$0xff]
    %v202 = vld [vmem:[%s1 + $0x520] sm:$0xff]
    %v203 = vld [vmem:[%s1 + $0x528] sm:$0xff]
    %v204 = vld [vmem:[%s1 + $0x530] sm:$0xff]
    %v205 = vld [vmem:[%s1 + $0x538] sm:$0xff]
    %v206 = vld [vmem:[%s1 + $0x540] sm:$0xff]
    %v207 = vld [vmem:[%s1 + $0x548] sm:$0xff]
    %v208 = vld [vmem:[%s1 + $0x550] sm:$0xff]
    %v209 = vld [vmem:[%s1 + $0x558] sm:$0xff]
    %v210 = vld [vmem:[%s1 + $0x560] sm:$0xff]
    %v211 = vld [vmem:[%s1 + $0x568] sm:$0xff]
    %v212 = vld [vmem:[%s1 + $0x570] sm:$0xff]
    %v213 = vld [vmem:[%s1 + $0x578] sm:$0xff]
    %v214 = vld [vmem:[%s1 + $0x580] sm:$0xff]
    %v215 = vld [vmem:[%s1 + $0x588] sm:$0xff]
    %v216 = vld [vmem:[%s1 + $0x590] sm:$0xff]
    %v217 = vld [vmem:[%s1 + $0x598] sm:$0xff]
    %v218 = vld [vmem:[%s1 + $0x5a0] sm:$0xff]
    %v219 = vld [vmem:[%s1 + $0x5a8] sm:$0xff]
    %v220 = vld [vmem:[%s1 + $0x5b0] sm:$0xff]
    %v221 = vld [vmem:[%s1 + $0x5b8] sm:$0xff]
    %v222 = vld [vmem:[%s1 + $0x5c0] sm:$0xff]
    %v223 = vld [vmem:[%s1 + $0x5c8] sm:$0xff]
    %v224 = vld [vmem:[%s1 + $0x5d0] sm:$0xff]
    %v225 = vld [vmem:[%s1 + $0x5d8] sm:$0xff]
    %v226 = vld [vmem:[%s1 + $0x5e0] sm:$0xff]
    %v227 = vld [vmem:[%s1 + $0x5e8] sm:$0xff]
    %v228 = vld [vmem:[%s1 + $0x5f0] sm:$0xff]
    %v229 = vld [vmem:[%s1 + $0x5f8] sm:$0xff]
    %v230 = vld [vmem:[%s1 + $0x600] sm:$0xff]
    %v231 = vld [vmem:[%s1 + $0x608] sm:$0xff]
    %v232 = vld [vmem:[%s1 + $0x610] sm:$0xff]
    %v233 = vld [vmem:[%s1 + $0x618] sm:$0xff]
    %v234 = vld [vmem:[%s2] sm:$0xf]
    %v236 = vperm.slane %v234, 0
    %v237 = vperm.slane %v234, 1
    %v238 = vperm.slane %v234, 2
    %v239 = vperm.slane %v234, 3
    %245 = vst [vmem:[#allocation1] ss:$9 sm:$0xff] %v37
    %v246 = vld [vmem:[#allocation1] sm:$0xff]
    %v247 = vld [vmem:[#allocation1 + $0x9] sm:$0xff]
    %v248 = vld [vmem:[#allocation1 + $0x12] sm:$0xff]
    %v249 = vld [vmem:[#allocation1 + $0x1b] sm:$0xff]
    %v250 = vld [vmem:[#allocation1 + $0x24] sm:$0xff]
    %v251 = vld [vmem:[#allocation1 + $0x2d] sm:$0xff]
    %v252 = vld [vmem:[#allocation1 + $0x36] sm:$0xff]
    %v455 = vunpack.c.l.b16 %v38
    %v456 = vunpack.c.h.b16 %v38
    %v457 = vunpack.c.l.b16 %v39
    %v458 = vunpack.c.h.b16 %v39
    %v459 = vunpack.c.l.b16 %v40
    %v460 = vunpack.c.h.b16 %v40
    %v461 = vunpack.c.l.b16 %v41
    %v462 = vunpack.c.h.b16 %v41
    %v463 = vunpack.c.l.b16 %v42
    %v464 = vunpack.c.h.b16 %v42
    %v465 = vunpack.c.l.b16 %v43
    %v466 = vunpack.c.h.b16 %v43
    %v467 = vunpack.c.l.b16 %v44
    %v468 = vunpack.c.h.b16 %v44
    %v469 = vunpack.c.l.b16 %v45
    %v470 = vunpack.c.h.b16 %v45
    %v471 = vunpack.c.l.b16 %v46
    %v472 = vunpack.c.h.b16 %v46
    %v473 = vunpack.c.l.b16 %v47
    %v474 = vunpack.c.h.b16 %v47
    %v475 = vunpack.c.l.b16 %v48
    %v476 = vunpack.c.h.b16 %v48
    %v477 = vunpack.c.l.b16 %v49
    %v478 = vunpack.c.h.b16 %v49
    %v479 = vunpack.c.l.b16 %v50
    %v480 = vunpack.c.h.b16 %v50
    %v481 = vunpack.c.l.b16 %v51
    %v482 = vunpack.c.h.b16 %v51
    %v483 = vunpack.c.l.b16 %v52
    %v484 = vunpack.c.h.b16 %v52
    %v485 = vunpack.c.l.b16 %v53
    %v486 = vunpack.c.h.b16 %v53
    %v487 = vunpack.c.l.b16 %v54
    %v488 = vunpack.c.h.b16 %v54
    %v489 = vunpack.c.l.b16 %v55
    %v490 = vunpack.c.h.b16 %v55
    %v491 = vunpack.c.l.b16 %v56
    %v492 = vunpack.c.h.b16 %v56
    %v493 = vunpack.c.l.b16 %v57
    %v494 = vunpack.c.h.b16 %v57
    %v495 = vunpack.c.l.b16 %v58
    %v496 = vunpack.c.h.b16 %v58
    %v497 = vunpack.c.l.b16 %v59
    %v498 = vunpack.c.h.b16 %v59
    %v499 = vunpack.c.l.b16 %v60
    %v500 = vunpack.c.h.b16 %v60
    %v501 = vunpack.c.l.b16 %v61
    %v502 = vunpack.c.h.b16 %v61
    %v503 = vunpack.c.l.b16 %v62
    %v504 = vunpack.c.h.b16 %v62
    %v505 = vunpack.c.l.b16 %v63
    %v506 = vunpack.c.h.b16 %v63
    %v507 = vunpack.c.l.b16 %v64
    %v508 = vunpack.c.h.b16 %v64
    %v509 = vunpack.c.l.b16 %v65
    %v510 = vunpack.c.h.b16 %v65
    %v511 = vunpack.c.l.b16 %v66
    %v512 = vunpack.c.h.b16 %v66
    %v513 = vunpack.c.l.b16 %v67
    %v514 = vunpack.c.h.b16 %v67
    %v515 = vunpack.c.l.b16 %v68
    %v516 = vunpack.c.h.b16 %v68
    %v517 = vunpack.c.l.b16 %v69
    %v518 = vunpack.c.h.b16 %v69
    %v519 = vunpack.c.l.b16 %v70
    %v520 = vunpack.c.h.b16 %v70
    %v521 = vunpack.c.l.b16 %v71
    %v522 = vunpack.c.h.b16 %v71
    %v523 = vunpack.c.l.b16 %v72
    %v524 = vunpack.c.h.b16 %v72
    %v525 = vunpack.c.l.b16 %v73
    %v526 = vunpack.c.h.b16 %v73
    %v527 = vunpack.c.l.b16 %v74
    %v528 = vunpack.c.h.b16 %v74
    %v529 = vunpack.c.l.b16 %v75
    %v530 = vunpack.c.h.b16 %v75
    %v531 = vunpack.c.l.b16 %v76
    %v532 = vunpack.c.h.b16 %v76
    %v533 = vunpack.c.l.b16 %v77
    %v534 = vunpack.c.h.b16 %v77
    %v535 = vunpack.c.l.b16 %v78
    %v536 = vunpack.c.h.b16 %v78
    %v537 = vunpack.c.l.b16 %v79
    %v538 = vunpack.c.h.b16 %v79
    %v539 = vunpack.c.l.b16 %v80
    %v540 = vunpack.c.h.b16 %v80
    %v541 = vunpack.c.l.b16 %v81
    %v542 = vunpack.c.h.b16 %v81
    %v543 = vunpack.c.l.b16 %v82
    %v544 = vunpack.c.h.b16 %v82
    %v545 = vunpack.c.l.b16 %v83
    %v546 = vunpack.c.h.b16 %v83
    %v547 = vunpack.c.l.b16 %v84
    %v548 = vunpack.c.h.b16 %v84
    %v549 = vunpack.c.l.b16 %v85
    %v550 = vunpack.c.h.b16 %v85
    %v551 = vunpack.c.l.b16 %v86
    %v552 = vunpack.c.h.b16 %v86
    %v553 = vunpack.c.l.b16 %v87
    %v554 = vunpack.c.h.b16 %v87
    %v555 = vunpack.c.l.b16 %v88
    %v556 = vunpack.c.h.b16 %v88
    %v557 = vunpack.c.l.b16 %v89
    %v558 = vunpack.c.h.b16 %v89
    %v559 = vunpack.c.l.b16 %v90
    %v560 = vunpack.c.h.b16 %v90
    %v561 = vunpack.c.l.b16 %v91
    %v562 = vunpack.c.h.b16 %v91
    %v563 = vunpack.c.l.b16 %v92
    %v564 = vunpack.c.h.b16 %v92
    %v565 = vunpack.c.l.b16 %v93
    %v566 = vunpack.c.h.b16 %v93
    %v567 = vunpack.c.l.b16 %v94
    %v568 = vunpack.c.h.b16 %v94
    %v569 = vunpack.c.l.b16 %v95
    %v570 = vunpack.c.h.b16 %v95
    %v571 = vunpack.c.l.b16 %v96
    %v572 = vunpack.c.h.b16 %v96
    %v573 = vunpack.c.l.b16 %v97
    %v574 = vunpack.c.h.b16 %v97
    %v575 = vunpack.c.l.b16 %v98
    %v576 = vunpack.c.h.b16 %v98
    %v577 = vunpack.c.l.b16 %v99
    %v578 = vunpack.c.h.b16 %v99
    %v579 = vunpack.c.l.b16 %v100
    %v580 = vunpack.c.h.b16 %v100
    %v581 = vunpack.c.l.b16 %v101
    %v582 = vunpack.c.h.b16 %v101
    %v583 = vunpack.c.l.b16 %v102
    %v584 = vunpack.c.h.b16 %v102
    %v585 = vunpack.c.l.b16 %v103
    %v586 = vunpack.c.h.b16 %v103
    %v587 = vunpack.c.l.b16 %v104
    %v588 = vunpack.c.h.b16 %v104
    %v589 = vunpack.c.l.b16 %v105
    %v590 = vunpack.c.h.b16 %v105
    %v591 = vunpack.c.l.b16 %v106
    %v592 = vunpack.c.h.b16 %v106
    %v593 = vunpack.c.l.b16 %v107
    %v594 = vunpack.c.h.b16 %v107
    %v595 = vunpack.c.l.b16 %v108
    %v596 = vunpack.c.h.b16 %v108
    %v597 = vunpack.c.l.b16 %v109
    %v598 = vunpack.c.h.b16 %v109
    %v599 = vunpack.c.l.b16 %v110
    %v600 = vunpack.c.h.b16 %v110
    %v601 = vunpack.c.l.b16 %v111
    %v602 = vunpack.c.h.b16 %v111
    %v603 = vunpack.c.l.b16 %v112
    %v604 = vunpack.c.h.b16 %v112
    %v605 = vunpack.c.l.b16 %v113
    %v606 = vunpack.c.h.b16 %v113
    %v607 = vunpack.c.l.b16 %v114
    %v608 = vunpack.c.h.b16 %v114
    %v609 = vunpack.c.l.b16 %v115
    %v610 = vunpack.c.h.b16 %v115
    %v611 = vunpack.c.l.b16 %v116
    %v612 = vunpack.c.h.b16 %v116
    %v613 = vunpack.c.l.b16 %v117
    %v614 = vunpack.c.h.b16 %v117
    %v615 = vunpack.c.l.b16 %v118
    %v616 = vunpack.c.h.b16 %v118
    %v617 = vunpack.c.l.b16 %v119
    %v618 = vunpack.c.h.b16 %v119
    %v619 = vunpack.c.l.b16 %v120
    %v620 = vunpack.c.h.b16 %v120
    %v621 = vunpack.c.l.b16 %v121
    %v622 = vunpack.c.h.b16 %v121
    %v623 = vunpack.c.l.b16 %v122
    %v624 = vunpack.c.h.b16 %v122
    %v625 = vunpack.c.l.b16 %v123
    %v626 = vunpack.c.h.b16 %v123
    %v627 = vunpack.c.l.b16 %v124
    %v628 = vunpack.c.h.b16 %v124
    %v629 = vunpack.c.l.b16 %v125
    %v630 = vunpack.c.h.b16 %v125
    %v631 = vunpack.c.l.b16 %v126
    %v632 = vunpack.c.h.b16 %v126
    %v633 = vunpack.c.l.b16 %v127
    %v634 = vunpack.c.h.b16 %v127
    %v635 = vunpack.c.l.b16 %v128
    %v636 = vunpack.c.h.b16 %v128
    %v637 = vunpack.c.l.b16 %v129
    %v638 = vunpack.c.h.b16 %v129
    %v639 = vunpack.c.l.b16 %v130
    %v640 = vunpack.c.h.b16 %v130
    %v641 = vunpack.c.l.b16 %v131
    %v642 = vunpack.c.h.b16 %v131
    %v643 = vunpack.c.l.b16 %v132
    %v644 = vunpack.c.h.b16 %v132
    %v645 = vunpack.c.l.b16 %v133
    %v646 = vunpack.c.h.b16 %v133
    %v647 = vunpack.c.l.b16 %v134
    %v648 = vunpack.c.h.b16 %v134
    %v649 = vunpack.c.l.b16 %v135
    %v650 = vunpack.c.h.b16 %v135
    %v651 = vunpack.c.l.b16 %v136
    %v652 = vunpack.c.h.b16 %v136
    %v653 = vunpack.c.l.b16 %v137
    %v654 = vunpack.c.h.b16 %v137
    %v655 = vunpack.c.l.b16 %v138
    %v656 = vunpack.c.h.b16 %v138
    %v657 = vunpack.c.l.b16 %v139
    %v658 = vunpack.c.h.b16 %v139
    %v659 = vunpack.c.l.b16 %v140
    %v660 = vunpack.c.h.b16 %v140
    %v661 = vunpack.c.l.b16 %v141
    %v662 = vunpack.c.h.b16 %v141
    %v663 = vunpack.c.l.b16 %v142
    %v664 = vunpack.c.h.b16 %v142
    %v665 = vunpack.c.l.b16 %v143
    %v666 = vunpack.c.h.b16 %v143
    %v667 = vunpack.c.l.b16 %v144
    %v668 = vunpack.c.h.b16 %v144
    %v669 = vunpack.c.l.b16 %v145
    %v670 = vunpack.c.h.b16 %v145
    %v671 = vunpack.c.l.b16 %v146
    %v672 = vunpack.c.h.b16 %v146
    %v673 = vunpack.c.l.b16 %v147
    %v674 = vunpack.c.h.b16 %v147
    %v675 = vunpack.c.l.b16 %v148
    %v676 = vunpack.c.h.b16 %v148
    %v677 = vunpack.c.l.b16 %v149
    %v678 = vunpack.c.h.b16 %v149
    %v679 = vunpack.c.l.b16 %v150
    %v680 = vunpack.c.h.b16 %v150
    %v681 = vunpack.c.l.b16 %v151
    %v682 = vunpack.c.h.b16 %v151
    %v683 = vunpack.c.l.b16 %v152
    %v684 = vunpack.c.h.b16 %v152
    %v685 = vunpack.c.l.b16 %v153
    %v686 = vunpack.c.h.b16 %v153
    %v687 = vunpack.c.l.b16 %v154
    %v688 = vunpack.c.h.b16 %v154
    %v689 = vunpack.c.l.b16 %v155
    %v690 = vunpack.c.h.b16 %v155
    %v691 = vunpack.c.l.b16 %v156
    %v692 = vunpack.c.h.b16 %v156
    %v693 = vunpack.c.l.b16 %v157
    %v694 = vunpack.c.h.b16 %v157
    %v695 = vunpack.c.l.b16 %v158
    %v696 = vunpack.c.h.b16 %v158
    %v697 = vunpack.c.l.b16 %v159
    %v698 = vunpack.c.h.b16 %v159
    %v699 = vunpack.c.l.b16 %v160
    %v700 = vunpack.c.h.b16 %v160
    %v701 = vunpack.c.l.b16 %v161
    %v702 = vunpack.c.h.b16 %v161
    %v703 = vunpack.c.l.b16 %v162
    %v704 = vunpack.c.h.b16 %v162
    %v705 = vunpack.c.l.b16 %v163
    %v706 = vunpack.c.h.b16 %v163
    %v707 = vunpack.c.l.b16 %v164
    %v708 = vunpack.c.h.b16 %v164
    %v709 = vunpack.c.l.b16 %v165
    %v710 = vunpack.c.h.b16 %v165
    %v711 = vunpack.c.l.b16 %v166
    %v712 = vunpack.c.h.b16 %v166
    %v713 = vunpack.c.l.b16 %v167
    %v714 = vunpack.c.h.b16 %v167
    %v715 = vunpack.c.l.b16 %v168
    %v716 = vunpack.c.h.b16 %v168
    %v717 = vunpack.c.l.b16 %v169
    %v718 = vunpack.c.h.b16 %v169
    %v719 = vunpack.c.l.b16 %v170
    %v720 = vunpack.c.h.b16 %v170
    %v721 = vunpack.c.l.b16 %v171
    %v722 = vunpack.c.h.b16 %v171
    %v723 = vunpack.c.l.b16 %v172
    %v724 = vunpack.c.h.b16 %v172
    %v725 = vunpack.c.l.b16 %v173
    %v726 = vunpack.c.h.b16 %v173
    %v727 = vunpack.c.l.b16 %v174
    %v728 = vunpack.c.h.b16 %v174
    %v729 = vunpack.c.l.b16 %v175
    %v730 = vunpack.c.h.b16 %v175
    %v731 = vunpack.c.l.b16 %v176
    %v732 = vunpack.c.h.b16 %v176
    %v733 = vunpack.c.l.b16 %v177
    %v734 = vunpack.c.h.b16 %v177
    %v735 = vunpack.c.l.b16 %v178
    %v736 = vunpack.c.h.b16 %v178
    %v737 = vunpack.c.l.b16 %v179
    %v738 = vunpack.c.h.b16 %v179
    %v739 = vunpack.c.l.b16 %v180
    %v740 = vunpack.c.h.b16 %v180
    %v741 = vunpack.c.l.b16 %v181
    %v742 = vunpack.c.h.b16 %v181
    %v743 = vunpack.c.l.b16 %v182
    %v744 = vunpack.c.h.b16 %v182
    %v745 = vunpack.c.l.b16 %v183
    %v746 = vunpack.c.h.b16 %v183
    %v747 = vunpack.c.l.b16 %v184
    %v748 = vunpack.c.h.b16 %v184
    %v749 = vunpack.c.l.b16 %v185
    %v750 = vunpack.c.h.b16 %v185
    %v751 = vunpack.c.l.b16 %v186
    %v752 = vunpack.c.h.b16 %v186
    %v753 = vunpack.c.l.b16 %v187
    %v754 = vunpack.c.h.b16 %v187
    %v755 = vunpack.c.l.b16 %v188
    %v756 = vunpack.c.h.b16 %v188
    %v757 = vunpack.c.l.b16 %v189
    %v758 = vunpack.c.h.b16 %v189
    %v759 = vunpack.c.l.b16 %v190
    %v760 = vunpack.c.h.b16 %v190
    %v761 = vunpack.c.l.b16 %v191
    %v762 = vunpack.c.h.b16 %v191
    %v763 = vunpack.c.l.b16 %v192
    %v764 = vunpack.c.h.b16 %v192
    %v765 = vunpack.c.l.b16 %v193
    %v766 = vunpack.c.h.b16 %v193
    %v767 = vunpack.c.l.b16 %v194
    %v768 = vunpack.c.h.b16 %v194
    %v769 = vunpack.c.l.b16 %v195
    %v770 = vunpack.c.h.b16 %v195
    %v771 = vunpack.c.l.b16 %v196
    %v772 = vunpack.c.h.b16 %v196
    %v773 = vunpack.c.l.b16 %v197
    %v774 = vunpack.c.h.b16 %v197
    %v775 = vunpack.c.l.b16 %v198
    %v776 = vunpack.c.h.b16 %v198
    %v777 = vunpack.c.l.b16 %v199
    %v778 = vunpack.c.h.b16 %v199
    %v779 = vunpack.c.l.b16 %v200
    %v780 = vunpack.c.h.b16 %v200
    %v781 = vunpack.c.l.b16 %v201
    %v782 = vunpack.c.h.b16 %v201
    %v783 = vunpack.c.l.b16 %v202
    %v784 = vunpack.c.h.b16 %v202
    %v785 = vunpack.c.l.b16 %v203
    %v786 = vunpack.c.h.b16 %v203
    %v787 = vunpack.c.l.b16 %v204
    %v788 = vunpack.c.h.b16 %v204
    %v789 = vunpack.c.l.b16 %v205
    %v790 = vunpack.c.h.b16 %v205
    %v791 = vunpack.c.l.b16 %v206
    %v792 = vunpack.c.h.b16 %v206
    %v793 = vunpack.c.l.b16 %v207
    %v794 = vunpack.c.h.b16 %v207
    %v795 = vunpack.c.l.b16 %v208
    %v796 = vunpack.c.h.b16 %v208
    %v797 = vunpack.c.l.b16 %v209
    %v798 = vunpack.c.h.b16 %v209
    %v799 = vunpack.c.l.b16 %v210
    %v800 = vunpack.c.h.b16 %v210
    %v801 = vunpack.c.l.b16 %v211
    %v802 = vunpack.c.h.b16 %v211
    %v803 = vunpack.c.l.b16 %v212
    %v804 = vunpack.c.h.b16 %v212
    %v805 = vunpack.c.l.b16 %v213
    %v806 = vunpack.c.h.b16 %v213
    %v807 = vunpack.c.l.b16 %v214
    %v808 = vunpack.c.h.b16 %v214
    %v809 = vunpack.c.l.b16 %v215
    %v810 = vunpack.c.h.b16 %v215
    %v811 = vunpack.c.l.b16 %v216
    %v812 = vunpack.c.h.b16 %v216
    %v813 = vunpack.c.l.b16 %v217
    %v814 = vunpack.c.h.b16 %v217
    %v815 = vunpack.c.l.b16 %v218
    %v816 = vunpack.c.h.b16 %v218
    %v817 = vunpack.c.l.b16 %v219
    %v818 = vunpack.c.h.b16 %v219
    %v819 = vunpack.c.l.b16 %v220
    %v820 = vunpack.c.h.b16 %v220
    %v821 = vunpack.c.l.b16 %v221
    %v822 = vunpack.c.h.b16 %v221
    %v823 = vunpack.c.l.b16 %v222
    %v824 = vunpack.c.h.b16 %v222
    %v825 = vunpack.c.l.b16 %v223
    %v826 = vunpack.c.h.b16 %v223
    %v827 = vunpack.c.l.b16 %v224
    %v828 = vunpack.c.h.b16 %v224
    %v829 = vunpack.c.l.b16 %v225
    %v830 = vunpack.c.h.b16 %v225
    %v831 = vunpack.c.l.b16 %v226
    %v832 = vunpack.c.h.b16 %v226
    %v833 = vunpack.c.l.b16 %v227
    %v834 = vunpack.c.h.b16 %v227
    %v835 = vunpack.c.l.b16 %v228
    %v836 = vunpack.c.h.b16 %v228
    %v837 = vunpack.c.l.b16 %v229
    %v838 = vunpack.c.h.b16 %v229
    %v839 = vunpack.c.l.b16 %v230
    %v840 = vunpack.c.h.b16 %v230
    %v841 = vunpack.c.l.b16 %v231
    %v842 = vunpack.c.h.b16 %v231
    %v843 = vunpack.c.l.b16 %v232
    %v844 = vunpack.c.h.b16 %v232
    %v845 = vunpack.c.l.b16 %v233
    %v846 = vunpack.c.h.b16 %v233
    %v847 = vpack.c.b16 %v459, %v455
    %v848 = vpack.c.b16 %v460, %v456
    %v849 = vpack.c.b16 %v461, %v457
    %v850 = vpack.c.b16 %v462, %v458
    %v851 = vpack.c.b16 %v467, %v463
    %v852 = vpack.c.b16 %v468, %v464
    %v853 = vpack.c.b16 %v469, %v465
    %v854 = vpack.c.b16 %v470, %v466
    %v855 = vpack.c.b16 %v475, %v471
    %v856 = vpack.c.b16 %v476, %v472
    %v857 = vpack.c.b16 %v477, %v473
    %v858 = vpack.c.b16 %v478, %v474
    %v859 = vpack.c.b16 %v483, %v479
    %v860 = vpack.c.b16 %v484, %v480
    %v861 = vpack.c.b16 %v485, %v481
    %v862 = vpack.c.b16 %v486, %v482
    %v863 = vpack.c.b16 %v491, %v487
    %v864 = vpack.c.b16 %v492, %v488
    %v865 = vpack.c.b16 %v493, %v489
    %v866 = vpack.c.b16 %v494, %v490
    %v867 = vpack.c.b16 %v499, %v495
    %v868 = vpack.c.b16 %v500, %v496
    %v869 = vpack.c.b16 %v501, %v497
    %v870 = vpack.c.b16 %v502, %v498
    %v871 = vpack.c.b16 %v507, %v503
    %v872 = vpack.c.b16 %v508, %v504
    %v873 = vpack.c.b16 %v509, %v505
    %v874 = vpack.c.b16 %v510, %v506
    %v875 = vpack.c.b16 %v515, %v511
    %v876 = vpack.c.b16 %v516, %v512
    %v877 = vpack.c.b16 %v517, %v513
    %v878 = vpack.c.b16 %v518, %v514
    %v879 = vpack.c.b16 %v523, %v519
    %v880 = vpack.c.b16 %v524, %v520
    %v881 = vpack.c.b16 %v525, %v521
    %v882 = vpack.c.b16 %v526, %v522
    %v883 = vpack.c.b16 %v531, %v527
    %v884 = vpack.c.b16 %v532, %v528
    %v885 = vpack.c.b16 %v533, %v529
    %v886 = vpack.c.b16 %v534, %v530
    %v887 = vpack.c.b16 %v539, %v535
    %v888 = vpack.c.b16 %v540, %v536
    %v889 = vpack.c.b16 %v541, %v537
    %v890 = vpack.c.b16 %v542, %v538
    %v891 = vpack.c.b16 %v547, %v543
    %v892 = vpack.c.b16 %v548, %v544
    %v893 = vpack.c.b16 %v549, %v545
    %v894 = vpack.c.b16 %v550, %v546
    %v895 = vpack.c.b16 %v555, %v551
    %v896 = vpack.c.b16 %v556, %v552
    %v897 = vpack.c.b16 %v557, %v553
    %v898 = vpack.c.b16 %v558, %v554
    %v899 = vpack.c.b16 %v563, %v559
    %v900 = vpack.c.b16 %v564, %v560
    %v901 = vpack.c.b16 %v565, %v561
    %v902 = vpack.c.b16 %v566, %v562
    %v903 = vpack.c.b16 %v571, %v567
    %v904 = vpack.c.b16 %v572, %v568
    %v905 = vpack.c.b16 %v573, %v569
    %v906 = vpack.c.b16 %v574, %v570
    %v907 = vpack.c.b16 %v579, %v575
    %v908 = vpack.c.b16 %v580, %v576
    %v909 = vpack.c.b16 %v581, %v577
    %v910 = vpack.c.b16 %v582, %v578
    %v911 = vpack.c.b16 %v587, %v583
    %v912 = vpack.c.b16 %v588, %v584
    %v913 = vpack.c.b16 %v589, %v585
    %v914 = vpack.c.b16 %v590, %v586
    %v915 = vpack.c.b16 %v595, %v591
    %v916 = vpack.c.b16 %v596, %v592
    %v917 = vpack.c.b16 %v597, %v593
    %v918 = vpack.c.b16 %v598, %v594
    %v919 = vpack.c.b16 %v603, %v599
    %v920 = vpack.c.b16 %v604, %v600
    %v921 = vpack.c.b16 %v605, %v601
    %v922 = vpack.c.b16 %v606, %v602
    %v923 = vpack.c.b16 %v611, %v607
    %v924 = vpack.c.b16 %v612, %v608
    %v925 = vpack.c.b16 %v613, %v609
    %v926 = vpack.c.b16 %v614, %v610
    %v927 = vpack.c.b16 %v619, %v615
    %v928 = vpack.c.b16 %v620, %v616
    %v929 = vpack.c.b16 %v621, %v617
    %v930 = vpack.c.b16 %v622, %v618
    %v931 = vpack.c.b16 %v627, %v623
    %v932 = vpack.c.b16 %v628, %v624
    %v933 = vpack.c.b16 %v629, %v625
    %v934 = vpack.c.b16 %v630, %v626
    %v935 = vpack.c.b16 %v635, %v631
    %v936 = vpack.c.b16 %v636, %v632
    %v937 = vpack.c.b16 %v637, %v633
    %v938 = vpack.c.b16 %v638, %v634
    %v939 = vpack.c.b16 %v643, %v639
    %v940 = vpack.c.b16 %v644, %v640
    %v941 = vpack.c.b16 %v645, %v641
    %v942 = vpack.c.b16 %v646, %v642
    %v943 = vpack.c.b16 %v651, %v647
    %v944 = vpack.c.b16 %v652, %v648
    %v945 = vpack.c.b16 %v653, %v649
    %v946 = vpack.c.b16 %v654, %v650
    %v947 = vpack.c.b16 %v659, %v655
    %v948 = vpack.c.b16 %v660, %v656
    %v949 = vpack.c.b16 %v661, %v657
    %v950 = vpack.c.b16 %v662, %v658
    %v951 = vpack.c.b16 %v667, %v663
    %v952 = vpack.c.b16 %v668, %v664
    %v953 = vpack.c.b16 %v669, %v665
    %v954 = vpack.c.b16 %v670, %v666
    %v955 = vpack.c.b16 %v675, %v671
    %v956 = vpack.c.b16 %v676, %v672
    %v957 = vpack.c.b16 %v677, %v673
    %v958 = vpack.c.b16 %v678, %v674
    %v959 = vpack.c.b16 %v683, %v679
    %v960 = vpack.c.b16 %v684, %v680
    %v961 = vpack.c.b16 %v685, %v681
    %v962 = vpack.c.b16 %v686, %v682
    %v963 = vpack.c.b16 %v691, %v687
    %v964 = vpack.c.b16 %v692, %v688
    %v965 = vpack.c.b16 %v693, %v689
    %v966 = vpack.c.b16 %v694, %v690
    %v967 = vpack.c.b16 %v699, %v695
    %v968 = vpack.c.b16 %v700, %v696
    %v969 = vpack.c.b16 %v701, %v697
    %v970 = vpack.c.b16 %v702, %v698
    %v971 = vpack.c.b16 %v707, %v703
    %v972 = vpack.c.b16 %v708, %v704
    %v973 = vpack.c.b16 %v709, %v705
    %v974 = vpack.c.b16 %v710, %v706
    %v975 = vpack.c.b16 %v715, %v711
    %v976 = vpack.c.b16 %v716, %v712
    %v977 = vpack.c.b16 %v717, %v713
    %v978 = vpack.c.b16 %v718, %v714
    %v979 = vpack.c.b16 %v723, %v719
    %v980 = vpack.c.b16 %v724, %v720
    %v981 = vpack.c.b16 %v725, %v721
    %v982 = vpack.c.b16 %v726, %v722
    %v983 = vpack.c.b16 %v731, %v727
    %v984 = vpack.c.b16 %v732, %v728
    %v985 = vpack.c.b16 %v733, %v729
    %v986 = vpack.c.b16 %v734, %v730
    %v987 = vpack.c.b16 %v739, %v735
    %v988 = vpack.c.b16 %v740, %v736
    %v989 = vpack.c.b16 %v741, %v737
    %v990 = vpack.c.b16 %v742, %v738
    %v991 = vpack.c.b16 %v747, %v743
    %v992 = vpack.c.b16 %v748, %v744
    %v993 = vpack.c.b16 %v749, %v745
    %v994 = vpack.c.b16 %v750, %v746
    %v995 = vpack.c.b16 %v755, %v751
    %v996 = vpack.c.b16 %v756, %v752
    %v997 = vpack.c.b16 %v757, %v753
    %v998 = vpack.c.b16 %v758, %v754
    %v999 = vpack.c.b16 %v763, %v759
    %v1000 = vpack.c.b16 %v764, %v760
    %v1001 = vpack.c.b16 %v765, %v761
    %v1002 = vpack.c.b16 %v766, %v762
    %v1003 = vpack.c.b16 %v771, %v767
    %v1004 = vpack.c.b16 %v772, %v768
    %v1005 = vpack.c.b16 %v773, %v769
    %v1006 = vpack.c.b16 %v774, %v770
    %v1007 = vpack.c.b16 %v779, %v775
    %v1008 = vpack.c.b16 %v780, %v776
    %v1009 = vpack.c.b16 %v781, %v777
    %v1010 = vpack.c.b16 %v782, %v778
    %v1011 = vpack.c.b16 %v787, %v783
    %v1012 = vpack.c.b16 %v788, %v784
    %v1013 = vpack.c.b16 %v789, %v785
    %v1014 = vpack.c.b16 %v790, %v786
    %v1015 = vpack.c.b16 %v795, %v791
    %v1016 = vpack.c.b16 %v796, %v792
    %v1017 = vpack.c.b16 %v797, %v793
    %v1018 = vpack.c.b16 %v798, %v794
    %v1019 = vpack.c.b16 %v803, %v799
    %v1020 = vpack.c.b16 %v804, %v800
    %v1021 = vpack.c.b16 %v805, %v801
    %v1022 = vpack.c.b16 %v806, %v802
    %v1023 = vpack.c.b16 %v811, %v807
    %v1024 = vpack.c.b16 %v812, %v808
    %v1025 = vpack.c.b16 %v813, %v809
    %v1026 = vpack.c.b16 %v814, %v810
    %v1027 = vpack.c.b16 %v819, %v815
    %v1028 = vpack.c.b16 %v820, %v816
    %v1029 = vpack.c.b16 %v821, %v817
    %v1030 = vpack.c.b16 %v822, %v818
    %v1031 = vpack.c.b16 %v827, %v823
    %v1032 = vpack.c.b16 %v828, %v824
    %v1033 = vpack.c.b16 %v829, %v825
    %v1034 = vpack.c.b16 %v830, %v826
    %v1035 = vpack.c.b16 %v835, %v831
    %v1036 = vpack.c.b16 %v836, %v832
    %v1037 = vpack.c.b16 %v837, %v833
    %v1038 = vpack.c.b16 %v838, %v834
    %v1039 = vpack.c.b16 %v843, %v839
    %v1040 = vpack.c.b16 %v844, %v840
    %v1041 = vpack.c.b16 %v845, %v841
    %v1042 = vpack.c.b16 %v846, %v842
    %vm1239 = vcmask 130048
    %v1240 = vsel %vm1239, %v252, 0
    %1242 = vmatpush.bf16.msra.mxu0 %v875
    %1243 = vmatpush.bf16.msra.mxu0 %v871
    %1244 = vmatpush.bf16.msra.mxu0 %v867
    %1245 = vmatpush.bf16.msra.mxu0 %v863
    %1246 = vmatpush.bf16.msra.mxu0 %v859
    %1247 = vmatpush.bf16.msra.mxu0 %v855
    %1248 = vmatpush.bf16.msra.mxu0 %v851
    %1249 = vmatpush.bf16.msra.mxu0 %v847
    %1250 = vmatmul.bf16.gmra.mxu0 %v246
    %v1251 = vpop.f32.mrf.mxu0
    %v1252 = vadd.f32 %v236, %v1251
    %v1253 = vpop.f32.mrf.mxu0
    %1254 = vdwg.mxu0
    %1255 = vmatpush.bf16.msra.mxu0 %v907
    %1256 = vmatpush.bf16.msra.mxu0 %v903
    %1257 = vmatpush.bf16.msra.mxu0 %v899
    %1258 = vmatpush.bf16.msra.mxu0 %v895
    %1259 = vmatpush.bf16.msra.mxu0 %v891
    %1260 = vmatpush.bf16.msra.mxu0 %v887
    %1261 = vmatpush.bf16.msra.mxu0 %v883
    %1262 = vmatpush.bf16.msra.mxu0 %v879
    %1263 = vmatmul.bf16.gmra.mxu0 %v247
    %v1264 = vpop.f32.mrf.mxu0
    %v1265 = vadd.f32 %v1252, %v1264
    %v1266 = vpop.f32.mrf.mxu0
    %1267 = vdwg.mxu0
    %1268 = vmatpush.bf16.msra.mxu0 %v939
    %1269 = vmatpush.bf16.msra.mxu0 %v935
    %1270 = vmatpush.bf16.msra.mxu0 %v931
    %1271 = vmatpush.bf16.msra.mxu0 %v927
    %1272 = vmatpush.bf16.msra.mxu0 %v923
    %1273 = vmatpush.bf16.msra.mxu0 %v919
    %1274 = vmatpush.bf16.msra.mxu0 %v915
    %1275 = vmatpush.bf16.msra.mxu0 %v911
    %1276 = vmatmul.bf16.gmra.mxu0 %v248
    %v1277 = vpop.f32.mrf.mxu0
    %v1278 = vadd.f32 %v1265, %v1277
    %v1279 = vpop.f32.mrf.mxu0
    %1280 = vdwg.mxu0
    %1281 = vmatpush.bf16.msra.mxu0 %v971
    %1282 = vmatpush.bf16.msra.mxu0 %v967
    %1283 = vmatpush.bf16.msra.mxu0 %v963
    %1284 = vmatpush.bf16.msra.mxu0 %v959
    %1285 = vmatpush.bf16.msra.mxu0 %v955
    %1286 = vmatpush.bf16.msra.mxu0 %v951
    %1287 = vmatpush.bf16.msra.mxu0 %v947
    %1288 = vmatpush.bf16.msra.mxu0 %v943
    %1289 = vmatmul.bf16.gmra.mxu0 %v249
    %v1290 = vpop.f32.mrf.mxu0
    %v1291 = vadd.f32 %v1278, %v1290
    %v1292 = vpop.f32.mrf.mxu0
    %1293 = vdwg.mxu0
    %1294 = vmatpush.bf16.msra.mxu0 %v1003
    %1295 = vmatpush.bf16.msra.mxu0 %v999
    %1296 = vmatpush.bf16.msra.mxu0 %v995
    %1297 = vmatpush.bf16.msra.mxu0 %v991
    %1298 = vmatpush.bf16.msra.mxu0 %v987
    %1299 = vmatpush.bf16.msra.mxu0 %v983
    %1300 = vmatpush.bf16.msra.mxu0 %v979
    %1301 = vmatpush.bf16.msra.mxu0 %v975
    %1302 = vmatmul.bf16.gmra.mxu0 %v250
    %v1303 = vpop.f32.mrf.mxu0
    %v1304 = vadd.f32 %v1291, %v1303
    %v1305 = vpop.f32.mrf.mxu0
    %1306 = vdwg.mxu0
    %1307 = vmatpush.bf16.msra.mxu0 %v1035
    %1308 = vmatpush.bf16.msra.mxu0 %v1031
    %1309 = vmatpush.bf16.msra.mxu0 %v1027
    %1310 = vmatpush.bf16.msra.mxu0 %v1023
    %1311 = vmatpush.bf16.msra.mxu0 %v1019
    %1312 = vmatpush.bf16.msra.mxu0 %v1015
    %1313 = vmatpush.bf16.msra.mxu0 %v1011
    %1314 = vmatpush.bf16.msra.mxu0 %v1007
    %1315 = vmatmul.bf16.gmra.mxu0 %v251
    %v1316 = vpop.f32.mrf.mxu0
    %v1317 = vadd.f32 %v1304, %v1316
    %v1318 = vpop.f32.mrf.mxu0
    %1319 = vdwg.mxu0
    %1320 = vmatpush.bf16.msra.mxu0 0
    %1321 = vmatpush.bf16.msra.mxu0 0
    %1322 = vmatpush.bf16.msra.mxu0 0
    %1323 = vmatpush.bf16.msra.mxu0 0
    %1324 = vmatpush.bf16.msra.mxu0 0
    %1325 = vmatpush.bf16.msra.mxu0 0
    %1326 = vmatpush.bf16.msra.mxu0 0
    %1327 = vmatpush.bf16.msra.mxu0 %v1039
    %1328 = vmatmul.bf16.gmra.mxu0 %v1240
    %v1329 = vpop.f32.mrf.mxu0
    %v1330 = vadd.f32 %v1317, %v1329
    %v1331 = vpop.f32.mrf.mxu0
    %1332 = vdwg.mxu0
    %1333 = vmatpush.bf16.msra.mxu0 %v876
    %1334 = vmatpush.bf16.msra.mxu0 %v872
    %1335 = vmatpush.bf16.msra.mxu0 %v868
    %1336 = vmatpush.bf16.msra.mxu0 %v864
    %1337 = vmatpush.bf16.msra.mxu0 %v860
    %1338 = vmatpush.bf16.msra.mxu0 %v856
    %1339 = vmatpush.bf16.msra.mxu0 %v852
    %1340 = vmatpush.bf16.msra.mxu0 %v848
    %1341 = vmatmul.bf16.gmra.mxu0 %v246
    %v1342 = vpop.f32.mrf.mxu0
    %v1343 = vadd.f32 %v237, %v1342
    %v1344 = vpop.f32.mrf.mxu0
    %1345 = vdwg.mxu0
    %1346 = vmatpush.bf16.msra.mxu0 %v908
    %1347 = vmatpush.bf16.msra.mxu0 %v904
    %1348 = vmatpush.bf16.msra.mxu0 %v900
    %1349 = vmatpush.bf16.msra.mxu0 %v896
    %1350 = vmatpush.bf16.msra.mxu0 %v892
    %1351 = vmatpush.bf16.msra.mxu0 %v888
    %1352 = vmatpush.bf16.msra.mxu0 %v884
    %1353 = vmatpush.bf16.msra.mxu0 %v880
    %1354 = vmatmul.bf16.gmra.mxu0 %v247
    %v1355 = vpop.f32.mrf.mxu0
    %v1356 = vadd.f32 %v1343, %v1355
    %v1357 = vpop.f32.mrf.mxu0
    %1358 = vdwg.mxu0
    %1359 = vmatpush.bf16.msra.mxu0 %v940
    %1360 = vmatpush.bf16.msra.mxu0 %v936
    %1361 = vmatpush.bf16.msra.mxu0 %v932
    %1362 = vmatpush.bf16.msra.mxu0 %v928
    %1363 = vmatpush.bf16.msra.mxu0 %v924
    %1364 = vmatpush.bf16.msra.mxu0 %v920
    %1365 = vmatpush.bf16.msra.mxu0 %v916
    %1366 = vmatpush.bf16.msra.mxu0 %v912
    %1367 = vmatmul.bf16.gmra.mxu0 %v248
    %v1368 = vpop.f32.mrf.mxu0
    %v1369 = vadd.f32 %v1356, %v1368
    %v1370 = vpop.f32.mrf.mxu0
    %1371 = vdwg.mxu0
    %1372 = vmatpush.bf16.msra.mxu0 %v972
    %1373 = vmatpush.bf16.msra.mxu0 %v968
    %1374 = vmatpush.bf16.msra.mxu0 %v964
    %1375 = vmatpush.bf16.msra.mxu0 %v960
    %1376 = vmatpush.bf16.msra.mxu0 %v956
    %1377 = vmatpush.bf16.msra.mxu0 %v952
    %1378 = vmatpush.bf16.msra.mxu0 %v948
    %1379 = vmatpush.bf16.msra.mxu0 %v944
    %1380 = vmatmul.bf16.gmra.mxu0 %v249
    %v1381 = vpop.f32.mrf.mxu0
    %v1382 = vadd.f32 %v1369, %v1381
    %v1383 = vpop.f32.mrf.mxu0
    %1384 = vdwg.mxu0
    %1385 = vmatpush.bf16.msra.mxu0 %v1004
    %1386 = vmatpush.bf16.msra.mxu0 %v1000
    %1387 = vmatpush.bf16.msra.mxu0 %v996
    %1388 = vmatpush.bf16.msra.mxu0 %v992
    %1389 = vmatpush.bf16.msra.mxu0 %v988
    %1390 = vmatpush.bf16.msra.mxu0 %v984
    %1391 = vmatpush.bf16.msra.mxu0 %v980
    %1392 = vmatpush.bf16.msra.mxu0 %v976
    %1393 = vmatmul.bf16.gmra.mxu0 %v250
    %v1394 = vpop.f32.mrf.mxu0
    %v1395 = vadd.f32 %v1382, %v1394
    %v1396 = vpop.f32.mrf.mxu0
    %1397 = vdwg.mxu0
    %1398 = vmatpush.bf16.msra.mxu0 %v1036
    %1399 = vmatpush.bf16.msra.mxu0 %v1032
    %1400 = vmatpush.bf16.msra.mxu0 %v1028
    %1401 = vmatpush.bf16.msra.mxu0 %v1024
    %1402 = vmatpush.bf16.msra.mxu0 %v1020
    %1403 = vmatpush.bf16.msra.mxu0 %v1016
    %1404 = vmatpush.bf16.msra.mxu0 %v1012
    %1405 = vmatpush.bf16.msra.mxu0 %v1008
    %1406 = vmatmul.bf16.gmra.mxu0 %v251
    %v1407 = vpop.f32.mrf.mxu0
    %v1408 = vadd.f32 %v1395, %v1407
    %v1409 = vpop.f32.mrf.mxu0
    %1410 = vdwg.mxu0
    %1411 = vmatpush.bf16.msra.mxu0 0
    %1412 = vmatpush.bf16.msra.mxu0 0
    %1413 = vmatpush.bf16.msra.mxu0 0
    %1414 = vmatpush.bf16.msra.mxu0 0
    %1415 = vmatpush.bf16.msra.mxu0 0
    %1416 = vmatpush.bf16.msra.mxu0 0
    %1417 = vmatpush.bf16.msra.mxu0 0
    %1418 = vmatpush.bf16.msra.mxu0 %v1040
    %1419 = vmatmul.bf16.gmra.mxu0 %v1240
    %v1420 = vpop.f32.mrf.mxu0
    %v1421 = vadd.f32 %v1408, %v1420
    %v1422 = vpop.f32.mrf.mxu0
    %1423 = vdwg.mxu0
    %1424 = vmatpush.bf16.msra.mxu0 %v877
    %1425 = vmatpush.bf16.msra.mxu0 %v873
    %1426 = vmatpush.bf16.msra.mxu0 %v869
    %1427 = vmatpush.bf16.msra.mxu0 %v865
    %1428 = vmatpush.bf16.msra.mxu0 %v861
    %1429 = vmatpush.bf16.msra.mxu0 %v857
    %1430 = vmatpush.bf16.msra.mxu0 %v853
    %1431 = vmatpush.bf16.msra.mxu0 %v849
    %1432 = vmatmul.bf16.gmra.mxu0 %v246
    %v1433 = vpop.f32.mrf.mxu0
    %v1434 = vadd.f32 %v238, %v1433
    %v1435 = vpop.f32.mrf.mxu0
    %1436 = vdwg.mxu0
    %1437 = vmatpush.bf16.msra.mxu0 %v909
    %1438 = vmatpush.bf16.msra.mxu0 %v905
    %1439 = vmatpush.bf16.msra.mxu0 %v901
    %1440 = vmatpush.bf16.msra.mxu0 %v897
    %1441 = vmatpush.bf16.msra.mxu0 %v893
    %1442 = vmatpush.bf16.msra.mxu0 %v889
    %1443 = vmatpush.bf16.msra.mxu0 %v885
    %1444 = vmatpush.bf16.msra.mxu0 %v881
    %1445 = vmatmul.bf16.gmra.mxu0 %v247
    %v1446 = vpop.f32.mrf.mxu0
    %v1447 = vadd.f32 %v1434, %v1446
    %v1448 = vpop.f32.mrf.mxu0
    %1449 = vdwg.mxu0
    %1450 = vmatpush.bf16.msra.mxu0 %v941
    %1451 = vmatpush.bf16.msra.mxu0 %v937
    %1452 = vmatpush.bf16.msra.mxu0 %v933
    %1453 = vmatpush.bf16.msra.mxu0 %v929
    %1454 = vmatpush.bf16.msra.mxu0 %v925
    %1455 = vmatpush.bf16.msra.mxu0 %v921
    %1456 = vmatpush.bf16.msra.mxu0 %v917
    %1457 = vmatpush.bf16.msra.mxu0 %v913
    %1458 = vmatmul.bf16.gmra.mxu0 %v248
    %v1459 = vpop.f32.mrf.mxu0
    %v1460 = vadd.f32 %v1447, %v1459
    %v1461 = vpop.f32.mrf.mxu0
    %1462 = vdwg.mxu0
    %1463 = vmatpush.bf16.msra.mxu0 %v973
    %1464 = vmatpush.bf16.msra.mxu0 %v969
    %1465 = vmatpush.bf16.msra.mxu0 %v965
    %1466 = vmatpush.bf16.msra.mxu0 %v961
    %1467 = vmatpush.bf16.msra.mxu0 %v957
    %1468 = vmatpush.bf16.msra.mxu0 %v953
    %1469 = vmatpush.bf16.msra.mxu0 %v949
    %1470 = vmatpush.bf16.msra.mxu0 %v945
    %1471 = vmatmul.bf16.gmra.mxu0 %v249
    %v1472 = vpop.f32.mrf.mxu0
    %v1473 = vadd.f32 %v1460, %v1472
    %v1474 = vpop.f32.mrf.mxu0
    %1475 = vdwg.mxu0
    %1476 = vmatpush.bf16.msra.mxu0 %v1005
    %1477 = vmatpush.bf16.msra.mxu0 %v1001
    %1478 = vmatpush.bf16.msra.mxu0 %v997
    %1479 = vmatpush.bf16.msra.mxu0 %v993
    %1480 = vmatpush.bf16.msra.mxu0 %v989
    %1481 = vmatpush.bf16.msra.mxu0 %v985
    %1482 = vmatpush.bf16.msra.mxu0 %v981
    %1483 = vmatpush.bf16.msra.mxu0 %v977
    %1484 = vmatmul.bf16.gmra.mxu0 %v250
    %v1485 = vpop.f32.mrf.mxu0
    %v1486 = vadd.f32 %v1473, %v1485
    %v1487 = vpop.f32.mrf.mxu0
    %1488 = vdwg.mxu0
    %1489 = vmatpush.bf16.msra.mxu0 %v1037
    %1490 = vmatpush.bf16.msra.mxu0 %v1033
    %1491 = vmatpush.bf16.msra.mxu0 %v1029
    %1492 = vmatpush.bf16.msra.mxu0 %v1025
    %1493 = vmatpush.bf16.msra.mxu0 %v1021
    %1494 = vmatpush.bf16.msra.mxu0 %v1017
    %1495 = vmatpush.bf16.msra.mxu0 %v1013
    %1496 = vmatpush.bf16.msra.mxu0 %v1009
    %1497 = vmatmul.bf16.gmra.mxu0 %v251
    %v1498 = vpop.f32.mrf.mxu0
    %v1499 = vadd.f32 %v1486, %v1498
    %v1500 = vpop.f32.mrf.mxu0
    %1501 = vdwg.mxu0
    %1502 = vmatpush.bf16.msra.mxu0 0
    %1503 = vmatpush.bf16.msra.mxu0 0
    %1504 = vmatpush.bf16.msra.mxu0 0
    %1505 = vmatpush.bf16.msra.mxu0 0
    %1506 = vmatpush.bf16.msra.mxu0 0
    %1507 = vmatpush.bf16.msra.mxu0 0
    %1508 = vmatpush.bf16.msra.mxu0 0
    %1509 = vmatpush.bf16.msra.mxu0 %v1041
    %1510 = vmatmul.bf16.gmra.mxu0 %v1240
    %v1511 = vpop.f32.mrf.mxu0
    %v1512 = vadd.f32 %v1499, %v1511
    %v1513 = vpop.f32.mrf.mxu0
    %1514 = vdwg.mxu0
    %1515 = vmatpush.bf16.msra.mxu0 %v878
    %1516 = vmatpush.bf16.msra.mxu0 %v874
    %1517 = vmatpush.bf16.msra.mxu0 %v870
    %1518 = vmatpush.bf16.msra.mxu0 %v866
    %1519 = vmatpush.bf16.msra.mxu0 %v862
    %1520 = vmatpush.bf16.msra.mxu0 %v858
    %1521 = vmatpush.bf16.msra.mxu0 %v854
    %1522 = vmatpush.bf16.msra.mxu0 %v850
    %1523 = vmatmul.bf16.gmra.mxu0 %v246
    %v1524 = vpop.f32.mrf.mxu0
    %v1525 = vadd.f32 %v239, %v1524
    %v1526 = vpop.f32.mrf.mxu0
    %1527 = vdwg.mxu0
    %1528 = vmatpush.bf16.msra.mxu0 %v910
    %1529 = vmatpush.bf16.msra.mxu0 %v906
    %1530 = vmatpush.bf16.msra.mxu0 %v902
    %1531 = vmatpush.bf16.msra.mxu0 %v898
    %1532 = vmatpush.bf16.msra.mxu0 %v894
    %1533 = vmatpush.bf16.msra.mxu0 %v890
    %1534 = vmatpush.bf16.msra.mxu0 %v886
    %1535 = vmatpush.bf16.msra.mxu0 %v882
    %1536 = vmatmul.bf16.gmra.mxu0 %v247
    %v1537 = vpop.f32.mrf.mxu0
    %v1538 = vadd.f32 %v1525, %v1537
    %v1539 = vpop.f32.mrf.mxu0
    %1540 = vdwg.mxu0
    %1541 = vmatpush.bf16.msra.mxu0 %v942
    %1542 = vmatpush.bf16.msra.mxu0 %v938
    %1543 = vmatpush.bf16.msra.mxu0 %v934
    %1544 = vmatpush.bf16.msra.mxu0 %v930
    %1545 = vmatpush.bf16.msra.mxu0 %v926
    %1546 = vmatpush.bf16.msra.mxu0 %v922
    %1547 = vmatpush.bf16.msra.mxu0 %v918
    %1548 = vmatpush.bf16.msra.mxu0 %v914
    %1549 = vmatmul.bf16.gmra.mxu0 %v248
    %v1550 = vpop.f32.mrf.mxu0
    %v1551 = vadd.f32 %v1538, %v1550
    %v1552 = vpop.f32.mrf.mxu0
    %1553 = vdwg.mxu0
    %1554 = vmatpush.bf16.msra.mxu0 %v974
    %1555 = vmatpush.bf16.msra.mxu0 %v970
    %1556 = vmatpush.bf16.msra.mxu0 %v966
    %1557 = vmatpush.bf16.msra.mxu0 %v962
    %1558 = vmatpush.bf16.msra.mxu0 %v958
    %1559 = vmatpush.bf16.msra.mxu0 %v954
    %1560 = vmatpush.bf16.msra.mxu0 %v950
    %1561 = vmatpush.bf16.msra.mxu0 %v946
    %1562 = vmatmul.bf16.gmra.mxu0 %v249
    %v1563 = vpop.f32.mrf.mxu0
    %v1564 = vadd.f32 %v1551, %v1563
    %v1565 = vpop.f32.mrf.mxu0
    %1566 = vdwg.mxu0
    %1567 = vmatpush.bf16.msra.mxu0 %v1006
    %1568 = vmatpush.bf16.msra.mxu0 %v1002
    %1569 = vmatpush.bf16.msra.mxu0 %v998
    %1570 = vmatpush.bf16.msra.mxu0 %v994
    %1571 = vmatpush.bf16.msra.mxu0 %v990
    %1572 = vmatpush.bf16.msra.mxu0 %v986
    %1573 = vmatpush.bf16.msra.mxu0 %v982
    %1574 = vmatpush.bf16.msra.mxu0 %v978
    %1575 = vmatmul.bf16.gmra.mxu0 %v250
    %v1576 = vpop.f32.mrf.mxu0
    %v1577 = vadd.f32 %v1564, %v1576
    %v1578 = vpop.f32.mrf.mxu0
    %1579 = vdwg.mxu0
    %1580 = vmatpush.bf16.msra.mxu0 %v1038
    %1581 = vmatpush.bf16.msra.mxu0 %v1034
    %1582 = vmatpush.bf16.msra.mxu0 %v1030
    %1583 = vmatpush.bf16.msra.mxu0 %v1026
    %1584 = vmatpush.bf16.msra.mxu0 %v1022
    %1585 = vmatpush.bf16.msra.mxu0 %v1018
    %1586 = vmatpush.bf16.msra.mxu0 %v1014
    %1587 = vmatpush.bf16.msra.mxu0 %v1010
    %1588 = vmatmul.bf16.gmra.mxu0 %v251
    %v1589 = vpop.f32.mrf.mxu0
    %v1590 = vadd.f32 %v1577, %v1589
    %v1591 = vpop.f32.mrf.mxu0
    %1592 = vdwg.mxu0
    %1593 = vmatpush.bf16.msra.mxu0 0
    %1594 = vmatpush.bf16.msra.mxu0 0
    %1595 = vmatpush.bf16.msra.mxu0 0
    %1596 = vmatpush.bf16.msra.mxu0 0
    %1597 = vmatpush.bf16.msra.mxu0 0
    %1598 = vmatpush.bf16.msra.mxu0 0
    %1599 = vmatpush.bf16.msra.mxu0 0
    %1600 = vmatpush.bf16.msra.mxu0 %v1042
    %1601 = vmatmul.bf16.gmra.mxu0 %v1240
    %v1602 = vpop.f32.mrf.mxu0
    %v1603 = vadd.f32 %v1590, %v1602
    %v1604 = vpop.f32.mrf.mxu0
    %1605 = vdwg.mxu0
    %v1606 = vmax.f32 %v1330, 0.0
    %v1607 = vmax.f32 %v1421, 0.0
    %v1608 = vmax.f32 %v1512, 0.0
    %v1609 = vmax.f32 %v1603, 0.0
    %v1610 = vpack.c.bf16 %v1606, %v1606
    %v1611 = vpack.c.bf16 %v1607, %v1607
    %v1612 = vpack.c.bf16 %v1608, %v1608
    %v1613 = vpack.c.bf16 %v1609, %v1609
    %v1614 = vld [vmem:[%s3] sm:$0xf]
    %v1615 = vld [vmem:[%s3 + $0x4] sm:$0xf]
    %v1616 = vld [vmem:[%s3 + $0x8] sm:$0xf]
    %v1617 = vld [vmem:[%s3 + $0xc] sm:$0xf]
    %v1618 = vld [vmem:[%s3 + $0x10] sm:$0xf]
    %v1619 = vld [vmem:[%s3 + $0x14] sm:$0xf]
    %v1620 = vld [vmem:[%s3 + $0x18] sm:$0xf]
    %v1621 = vld [vmem:[%s3 + $0x1c] sm:$0xf]
    %v1622 = vld [vmem:[%s3 + $0x20] sm:$0xf]
    %v1623 = vld [vmem:[%s3 + $0x24] sm:$0xf]
    %v1624 = vld [vmem:[%s3 + $0x28] sm:$0xf]
    %v1625 = vld [vmem:[%s3 + $0x2c] sm:$0xf]
    %v1626 = vld [vmem:[%s3 + $0x30] sm:$0xf]
    %v1627 = vld [vmem:[%s3 + $0x34] sm:$0xf]
    %v1628 = vld [vmem:[%s3 + $0x38] sm:$0xf]
    %v1629 = vld [vmem:[%s3 + $0x3c] sm:$0xf]
    %v1630 = vld [vmem:[%s3 + $0x40] sm:$0xf]
    %v1631 = vld [vmem:[%s3 + $0x44] sm:$0xf]
    %v1632 = vld [vmem:[%s3 + $0x48] sm:$0xf]
    %v1633 = vld [vmem:[%s3 + $0x4c] sm:$0xf]
    %v1634 = vld [vmem:[%s3 + $0x50] sm:$0xf]
    %v1635 = vld [vmem:[%s3 + $0x54] sm:$0xf]
    %v1636 = vld [vmem:[%s3 + $0x58] sm:$0xf]
    %v1637 = vld [vmem:[%s3 + $0x5c] sm:$0xf]
    %v1638 = vld [vmem:[%s3 + $0x60] sm:$0xf]
    %v1639 = vld [vmem:[%s3 + $0x64] sm:$0xf]
    %v1640 = vld [vmem:[%s3 + $0x68] sm:$0xf]
    %v1641 = vld [vmem:[%s3 + $0x6c] sm:$0xf]
    %v1642 = vld [vmem:[%s3 + $0x70] sm:$0xf]
    %v1643 = vld [vmem:[%s3 + $0x74] sm:$0xf]
    %v1644 = vld [vmem:[%s3 + $0x78] sm:$0xf]
    %v1645 = vld [vmem:[%s3 + $0x7c] sm:$0xf]
    %v1646 = vld [vmem:[%s3 + $0x80] sm:$0xf]
    %v1647 = vld [vmem:[%s3 + $0x84] sm:$0xf]
    %v1648 = vld [vmem:[%s3 + $0x88] sm:$0xf]
    %v1649 = vld [vmem:[%s3 + $0x8c] sm:$0xf]
    %v1650 = vld [vmem:[%s3 + $0x90] sm:$0xf]
    %v1651 = vld [vmem:[%s3 + $0x94] sm:$0xf]
    %v1652 = vld [vmem:[%s3 + $0x98] sm:$0xf]
    %v1653 = vld [vmem:[%s3 + $0x9c] sm:$0xf]
    %v1654 = vld [vmem:[%s3 + $0xa0] sm:$0xf]
    %v1655 = vld [vmem:[%s3 + $0xa4] sm:$0xf]
    %v1656 = vld [vmem:[%s3 + $0xa8] sm:$0xf]
    %v1657 = vld [vmem:[%s3 + $0xac] sm:$0xf]
    %v1658 = vld [vmem:[%s3 + $0xb0] sm:$0xf]
    %v1659 = vld [vmem:[%s3 + $0xb4] sm:$0xf]
    %v1660 = vld [vmem:[%s3 + $0xb8] sm:$0xf]
    %v1661 = vld [vmem:[%s3 + $0xbc] sm:$0xf]
    %v1662 = vld [vmem:[%s3 + $0xc0] sm:$0xf]
    %v1663 = vld [vmem:[%s3 + $0xc4] sm:$0xf]
    %v1664 = vld [vmem:[%s3 + $0xc8] sm:$0xf]
    %v1665 = vld [vmem:[%s3 + $0xcc] sm:$0xf]
    %v1666 = vld [vmem:[%s3 + $0xd0] sm:$0xf]
    %v1667 = vld [vmem:[%s3 + $0xd4] sm:$0xf]
    %v1668 = vld [vmem:[%s3 + $0xd8] sm:$0xf]
    %v1669 = vld [vmem:[%s3 + $0xdc] sm:$0xf]
    %v1670 = vld [vmem:[%s3 + $0xe0] sm:$0xf]
    %v1671 = vld [vmem:[%s3 + $0xe4] sm:$0xf]
    %v1672 = vld [vmem:[%s3 + $0xe8] sm:$0xf]
    %v1673 = vld [vmem:[%s3 + $0xec] sm:$0xf]
    %v1674 = vld [vmem:[%s3 + $0xf0] sm:$0xf]
    %v1675 = vld [vmem:[%s3 + $0xf4] sm:$0xf]
    %v1676 = vld [vmem:[%s3 + $0xf8] sm:$0xf]
    %v1677 = vld [vmem:[%s3 + $0xfc] sm:$0xf]
    %v1678 = vld [vmem:[%s4] sm:$0x1]
    %v1680 = vperm.slane %v1678, 0
    %v1746 = vunpack.c.l.b16 %v1614
    %v1747 = vunpack.c.l.b16 %v1615
    %v1748 = vunpack.c.l.b16 %v1616
    %v1749 = vunpack.c.l.b16 %v1617
    %v1750 = vunpack.c.l.b16 %v1618
    %v1751 = vunpack.c.l.b16 %v1619
    %v1752 = vunpack.c.l.b16 %v1620
    %v1753 = vunpack.c.l.b16 %v1621
    %v1754 = vunpack.c.l.b16 %v1622
    %v1755 = vunpack.c.l.b16 %v1623
    %v1756 = vunpack.c.l.b16 %v1624
    %v1757 = vunpack.c.l.b16 %v1625
    %v1758 = vunpack.c.l.b16 %v1626
    %v1759 = vunpack.c.l.b16 %v1627
    %v1760 = vunpack.c.l.b16 %v1628
    %v1761 = vunpack.c.l.b16 %v1629
    %v1762 = vunpack.c.l.b16 %v1630
    %v1763 = vunpack.c.l.b16 %v1631
    %v1764 = vunpack.c.l.b16 %v1632
    %v1765 = vunpack.c.l.b16 %v1633
    %v1766 = vunpack.c.l.b16 %v1634
    %v1767 = vunpack.c.l.b16 %v1635
    %v1768 = vunpack.c.l.b16 %v1636
    %v1769 = vunpack.c.l.b16 %v1637
    %v1770 = vunpack.c.l.b16 %v1638
    %v1771 = vunpack.c.l.b16 %v1639
    %v1772 = vunpack.c.l.b16 %v1640
    %v1773 = vunpack.c.l.b16 %v1641
    %v1774 = vunpack.c.l.b16 %v1642
    %v1775 = vunpack.c.l.b16 %v1643
    %v1776 = vunpack.c.l.b16 %v1644
    %v1777 = vunpack.c.l.b16 %v1645
    %v1778 = vunpack.c.l.b16 %v1646
    %v1779 = vunpack.c.l.b16 %v1647
    %v1780 = vunpack.c.l.b16 %v1648
    %v1781 = vunpack.c.l.b16 %v1649
    %v1782 = vunpack.c.l.b16 %v1650
    %v1783 = vunpack.c.l.b16 %v1651
    %v1784 = vunpack.c.l.b16 %v1652
    %v1785 = vunpack.c.l.b16 %v1653
    %v1786 = vunpack.c.l.b16 %v1654
    %v1787 = vunpack.c.l.b16 %v1655
    %v1788 = vunpack.c.l.b16 %v1656
    %v1789 = vunpack.c.l.b16 %v1657
    %v1790 = vunpack.c.l.b16 %v1658
    %v1791 = vunpack.c.l.b16 %v1659
    %v1792 = vunpack.c.l.b16 %v1660
    %v1793 = vunpack.c.l.b16 %v1661
    %v1794 = vunpack.c.l.b16 %v1662
    %v1795 = vunpack.c.l.b16 %v1663
    %v1796 = vunpack.c.l.b16 %v1664
    %v1797 = vunpack.c.l.b16 %v1665
    %v1798 = vunpack.c.l.b16 %v1666
    %v1799 = vunpack.c.l.b16 %v1667
    %v1800 = vunpack.c.l.b16 %v1668
    %v1801 = vunpack.c.l.b16 %v1669
    %v1802 = vunpack.c.l.b16 %v1670
    %v1803 = vunpack.c.l.b16 %v1671
    %v1804 = vunpack.c.l.b16 %v1672
    %v1805 = vunpack.c.l.b16 %v1673
    %v1806 = vunpack.c.l.b16 %v1674
    %v1807 = vunpack.c.l.b16 %v1675
    %v1808 = vunpack.c.l.b16 %v1676
    %v1809 = vunpack.c.l.b16 %v1677
    %v1810 = vpack.c.b16 %v1747, %v1746
    %v1811 = vpack.c.b16 %v1749, %v1748
    %v1812 = vpack.c.b16 %v1751, %v1750
    %v1813 = vpack.c.b16 %v1753, %v1752
    %v1814 = vpack.c.b16 %v1755, %v1754
    %v1815 = vpack.c.b16 %v1757, %v1756
    %v1816 = vpack.c.b16 %v1759, %v1758
    %v1817 = vpack.c.b16 %v1761, %v1760
    %v1818 = vpack.c.b16 %v1763, %v1762
    %v1819 = vpack.c.b16 %v1765, %v1764
    %v1820 = vpack.c.b16 %v1767, %v1766
    %v1821 = vpack.c.b16 %v1769, %v1768
    %v1822 = vpack.c.b16 %v1771, %v1770
    %v1823 = vpack.c.b16 %v1773, %v1772
    %v1824 = vpack.c.b16 %v1775, %v1774
    %v1825 = vpack.c.b16 %v1777, %v1776
    %v1826 = vpack.c.b16 %v1779, %v1778
    %v1827 = vpack.c.b16 %v1781, %v1780
    %v1828 = vpack.c.b16 %v1783, %v1782
    %v1829 = vpack.c.b16 %v1785, %v1784
    %v1830 = vpack.c.b16 %v1787, %v1786
    %v1831 = vpack.c.b16 %v1789, %v1788
    %v1832 = vpack.c.b16 %v1791, %v1790
    %v1833 = vpack.c.b16 %v1793, %v1792
    %v1834 = vpack.c.b16 %v1795, %v1794
    %v1835 = vpack.c.b16 %v1797, %v1796
    %v1836 = vpack.c.b16 %v1799, %v1798
    %v1837 = vpack.c.b16 %v1801, %v1800
    %v1838 = vpack.c.b16 %v1803, %v1802
    %v1839 = vpack.c.b16 %v1805, %v1804
    %v1840 = vpack.c.b16 %v1807, %v1806
    %v1841 = vpack.c.b16 %v1809, %v1808
    %1874 = vmatpush.bf16.msra.mxu0 %v1817
    %1875 = vmatpush.bf16.msra.mxu0 %v1816
    %1876 = vmatpush.bf16.msra.mxu0 %v1815
    %1877 = vmatpush.bf16.msra.mxu0 %v1814
    %1878 = vmatpush.bf16.msra.mxu0 %v1813
    %1879 = vmatpush.bf16.msra.mxu0 %v1812
    %1880 = vmatpush.bf16.msra.mxu0 %v1811
    %1881 = vmatpush.bf16.msra.mxu0 %v1810
    %1882 = vmatmul.bf16.gmra.mxu0 %v1610
    %v1883 = vpop.f32.mrf.mxu0
    %v1884 = vadd.f32 %v1680, %v1883
    %v1885 = vpop.f32.mrf.mxu0
    %1886 = vdwg.mxu0
    %1887 = vmatpush.bf16.msra.mxu0 %v1825
    %1888 = vmatpush.bf16.msra.mxu0 %v1824
    %1889 = vmatpush.bf16.msra.mxu0 %v1823
    %1890 = vmatpush.bf16.msra.mxu0 %v1822
    %1891 = vmatpush.bf16.msra.mxu0 %v1821
    %1892 = vmatpush.bf16.msra.mxu0 %v1820
    %1893 = vmatpush.bf16.msra.mxu0 %v1819
    %1894 = vmatpush.bf16.msra.mxu0 %v1818
    %1895 = vmatmul.bf16.gmra.mxu0 %v1611
    %v1896 = vpop.f32.mrf.mxu0
    %v1897 = vadd.f32 %v1884, %v1896
    %v1898 = vpop.f32.mrf.mxu0
    %1899 = vdwg.mxu0
    %1900 = vmatpush.bf16.msra.mxu0 %v1833
    %1901 = vmatpush.bf16.msra.mxu0 %v1832
    %1902 = vmatpush.bf16.msra.mxu0 %v1831
    %1903 = vmatpush.bf16.msra.mxu0 %v1830
    %1904 = vmatpush.bf16.msra.mxu0 %v1829
    %1905 = vmatpush.bf16.msra.mxu0 %v1828
    %1906 = vmatpush.bf16.msra.mxu0 %v1827
    %1907 = vmatpush.bf16.msra.mxu0 %v1826
    %1908 = vmatmul.bf16.gmra.mxu0 %v1612
    %v1909 = vpop.f32.mrf.mxu0
    %v1910 = vadd.f32 %v1897, %v1909
    %v1911 = vpop.f32.mrf.mxu0
    %1912 = vdwg.mxu0
    %1913 = vmatpush.bf16.msra.mxu0 %v1841
    %1914 = vmatpush.bf16.msra.mxu0 %v1840
    %1915 = vmatpush.bf16.msra.mxu0 %v1839
    %1916 = vmatpush.bf16.msra.mxu0 %v1838
    %1917 = vmatpush.bf16.msra.mxu0 %v1837
    %1918 = vmatpush.bf16.msra.mxu0 %v1836
    %1919 = vmatpush.bf16.msra.mxu0 %v1835
    %1920 = vmatpush.bf16.msra.mxu0 %v1834
    %1921 = vmatmul.bf16.gmra.mxu0 %v1613
    %v1922 = vpop.f32.mrf.mxu0
    %v1923 = vadd.f32 %v1910, %v1922
    %v1924 = vpop.f32.mrf.mxu0
    %1925 = vdwg.mxu0
    %v1926 = vpack.c.bf16 %v1923, %v1923
    %v1927 = vld [vmem:[%s5] sm:$0xff]
    %v1928 = vld [vmem:[%s5 + $0x8] sm:$0xff]
    %v1929 = vld [vmem:[%s5 + $0x10] sm:$0xff]
    %v1930 = vld [vmem:[%s5 + $0x18] sm:$0xff]
    %v1931 = vld [vmem:[%s5 + $0x20] sm:$0xff]
    %v1932 = vld [vmem:[%s5 + $0x28] sm:$0xff]
    %v1933 = vld [vmem:[%s5 + $0x30] sm:$0xff]
    %v1934 = vld [vmem:[%s5 + $0x38] sm:$0xff]
    %v1935 = vld [vmem:[%s5 + $0x40] sm:$0xff]
    %v1936 = vld [vmem:[%s5 + $0x48] sm:$0xff]
    %v1937 = vld [vmem:[%s5 + $0x50] sm:$0xff]
    %v1938 = vld [vmem:[%s5 + $0x58] sm:$0xff]
    %v1939 = vld [vmem:[%s5 + $0x60] sm:$0xff]
    %v1940 = vld [vmem:[%s5 + $0x68] sm:$0xff]
    %v1941 = vld [vmem:[%s5 + $0x70] sm:$0xff]
    %v1942 = vld [vmem:[%s5 + $0x78] sm:$0xff]
    %v1943 = vld [vmem:[%s5 + $0x80] sm:$0xff]
    %v1944 = vld [vmem:[%s5 + $0x88] sm:$0xff]
    %v1945 = vld [vmem:[%s5 + $0x90] sm:$0xff]
    %v1946 = vld [vmem:[%s5 + $0x98] sm:$0xff]
    %v1947 = vld [vmem:[%s5 + $0xa0] sm:$0xff]
    %v1948 = vld [vmem:[%s5 + $0xa8] sm:$0xff]
    %v1949 = vld [vmem:[%s5 + $0xb0] sm:$0xff]
    %v1950 = vld [vmem:[%s5 + $0xb8] sm:$0xff]
    %v1951 = vld [vmem:[%s5 + $0xc0] sm:$0xff]
    %v1952 = vld [vmem:[%s5 + $0xc8] sm:$0xff]
    %v1953 = vld [vmem:[%s5 + $0xd0] sm:$0xff]
    %v1954 = vld [vmem:[%s5 + $0xd8] sm:$0xff]
    %v1955 = vld [vmem:[%s5 + $0xe0] sm:$0xff]
    %v1956 = vld [vmem:[%s5 + $0xe8] sm:$0xff]
    %v1957 = vld [vmem:[%s5 + $0xf0] sm:$0xff]
    %v1958 = vld [vmem:[%s5 + $0xf8] sm:$0xff]
    %v1959 = vld [vmem:[%s6] sm:$0xf]
    %v1961 = vperm.slane %v1959, 0
    %v1962 = vperm.slane %v1959, 1
    %v1963 = vperm.slane %v1959, 2
    %v1964 = vperm.slane %v1959, 3
    %v2001 = vunpack.c.l.b16 %v1927
    %v2002 = vunpack.c.h.b16 %v1927
    %v2003 = vunpack.c.l.b16 %v1928
    %v2004 = vunpack.c.h.b16 %v1928
    %v2005 = vunpack.c.l.b16 %v1929
    %v2006 = vunpack.c.h.b16 %v1929
    %v2007 = vunpack.c.l.b16 %v1930
    %v2008 = vunpack.c.h.b16 %v1930
    %v2009 = vunpack.c.l.b16 %v1931
    %v2010 = vunpack.c.h.b16 %v1931
    %v2011 = vunpack.c.l.b16 %v1932
    %v2012 = vunpack.c.h.b16 %v1932
    %v2013 = vunpack.c.l.b16 %v1933
    %v2014 = vunpack.c.h.b16 %v1933
    %v2015 = vunpack.c.l.b16 %v1934
    %v2016 = vunpack.c.h.b16 %v1934
    %v2017 = vunpack.c.l.b16 %v1935
    %v2018 = vunpack.c.h.b16 %v1935
    %v2019 = vunpack.c.l.b16 %v1936
    %v2020 = vunpack.c.h.b16 %v1936
    %v2021 = vunpack.c.l.b16 %v1937
    %v2022 = vunpack.c.h.b16 %v1937
    %v2023 = vunpack.c.l.b16 %v1938
    %v2024 = vunpack.c.h.b16 %v1938
    %v2025 = vunpack.c.l.b16 %v1939
    %v2026 = vunpack.c.h.b16 %v1939
    %v2027 = vunpack.c.l.b16 %v1940
    %v2028 = vunpack.c.h.b16 %v1940
    %v2029 = vunpack.c.l.b16 %v1941
    %v2030 = vunpack.c.h.b16 %v1941
    %v2031 = vunpack.c.l.b16 %v1942
    %v2032 = vunpack.c.h.b16 %v1942
    %v2033 = vunpack.c.l.b16 %v1943
    %v2034 = vunpack.c.h.b16 %v1943
    %v2035 = vunpack.c.l.b16 %v1944
    %v2036 = vunpack.c.h.b16 %v1944
    %v2037 = vunpack.c.l.b16 %v1945
    %v2038 = vunpack.c.h.b16 %v1945
    %v2039 = vunpack.c.l.b16 %v1946
    %v2040 = vunpack.c.h.b16 %v1946
    %v2041 = vunpack.c.l.b16 %v1947
    %v2042 = vunpack.c.h.b16 %v1947
    %v2043 = vunpack.c.l.b16 %v1948
    %v2044 = vunpack.c.h.b16 %v1948
    %v2045 = vunpack.c.l.b16 %v1949
    %v2046 = vunpack.c.h.b16 %v1949
    %v2047 = vunpack.c.l.b16 %v1950
    %v2048 = vunpack.c.h.b16 %v1950
    %v2049 = vunpack.c.l.b16 %v1951
    %v2050 = vunpack.c.h.b16 %v1951
    %v2051 = vunpack.c.l.b16 %v1952
    %v2052 = vunpack.c.h.b16 %v1952
    %v2053 = vunpack.c.l.b16 %v1953
    %v2054 = vunpack.c.h.b16 %v1953
    %v2055 = vunpack.c.l.b16 %v1954
    %v2056 = vunpack.c.h.b16 %v1954
    %v2057 = vunpack.c.l.b16 %v1955
    %v2058 = vunpack.c.h.b16 %v1955
    %v2059 = vunpack.c.l.b16 %v1956
    %v2060 = vunpack.c.h.b16 %v1956
    %v2061 = vunpack.c.l.b16 %v1957
    %v2062 = vunpack.c.h.b16 %v1957
    %v2063 = vunpack.c.l.b16 %v1958
    %v2064 = vunpack.c.h.b16 %v1958
    %v2065 = vpack.c.b16 %v2005, %v2001
    %v2066 = vpack.c.b16 %v2006, %v2002
    %v2067 = vpack.c.b16 %v2007, %v2003
    %v2068 = vpack.c.b16 %v2008, %v2004
    %v2069 = vpack.c.b16 %v2013, %v2009
    %v2070 = vpack.c.b16 %v2014, %v2010
    %v2071 = vpack.c.b16 %v2015, %v2011
    %v2072 = vpack.c.b16 %v2016, %v2012
    %v2073 = vpack.c.b16 %v2021, %v2017
    %v2074 = vpack.c.b16 %v2022, %v2018
    %v2075 = vpack.c.b16 %v2023, %v2019
    %v2076 = vpack.c.b16 %v2024, %v2020
    %v2077 = vpack.c.b16 %v2029, %v2025
    %v2078 = vpack.c.b16 %v2030, %v2026
    %v2079 = vpack.c.b16 %v2031, %v2027
    %v2080 = vpack.c.b16 %v2032, %v2028
    %v2081 = vpack.c.b16 %v2037, %v2033
    %v2082 = vpack.c.b16 %v2038, %v2034
    %v2083 = vpack.c.b16 %v2039, %v2035
    %v2084 = vpack.c.b16 %v2040, %v2036
    %v2085 = vpack.c.b16 %v2045, %v2041
    %v2086 = vpack.c.b16 %v2046, %v2042
    %v2087 = vpack.c.b16 %v2047, %v2043
    %v2088 = vpack.c.b16 %v2048, %v2044
    %v2089 = vpack.c.b16 %v2053, %v2049
    %v2090 = vpack.c.b16 %v2054, %v2050
    %v2091 = vpack.c.b16 %v2055, %v2051
    %v2092 = vpack.c.b16 %v2056, %v2052
    %v2093 = vpack.c.b16 %v2061, %v2057
    %v2094 = vpack.c.b16 %v2062, %v2058
    %v2095 = vpack.c.b16 %v2063, %v2059
    %v2096 = vpack.c.b16 %v2064, %v2060
    %2129 = vmatpush.bf16.msra.mxu0 %v2093
    %2130 = vmatpush.bf16.msra.mxu0 %v2089
    %2131 = vmatpush.bf16.msra.mxu0 %v2085
    %2132 = vmatpush.bf16.msra.mxu0 %v2081
    %2133 = vmatpush.bf16.msra.mxu0 %v2077
    %2134 = vmatpush.bf16.msra.mxu0 %v2073
    %2135 = vmatpush.bf16.msra.mxu0 %v2069
    %2136 = vmatpush.bf16.msra.mxu0 %v2065
    %2137 = vmatmul.bf16.gmra.mxu0 %v1926
    %v2138 = vpop.f32.mrf.mxu0
    %v2139 = vadd.f32 %v1961, %v2138
    %v2140 = vpop.f32.mrf.mxu0
    %2141 = vdwg.mxu0
    %2142 = vmatpush.bf16.msra.mxu0 %v2094
    %2143 = vmatpush.bf16.msra.mxu0 %v2090
    %2144 = vmatpush.bf16.msra.mxu0 %v2086
    %2145 = vmatpush.bf16.msra.mxu0 %v2082
    %2146 = vmatpush.bf16.msra.mxu0 %v2078
    %2147 = vmatpush.bf16.msra.mxu0 %v2074
    %2148 = vmatpush.bf16.msra.mxu0 %v2070
    %2149 = vmatpush.bf16.msra.mxu0 %v2066
    %2150 = vmatmul.bf16.gmra.mxu0 %v1926
    %v2151 = vpop.f32.mrf.mxu0
    %v2152 = vadd.f32 %v1962, %v2151
    %v2153 = vpop.f32.mrf.mxu0
    %2154 = vdwg.mxu0
    %2155 = vmatpush.bf16.msra.mxu0 %v2095
    %2156 = vmatpush.bf16.msra.mxu0 %v2091
    %2157 = vmatpush.bf16.msra.mxu0 %v2087
    %2158 = vmatpush.bf16.msra.mxu0 %v2083
    %2159 = vmatpush.bf16.msra.mxu0 %v2079
    %2160 = vmatpush.bf16.msra.mxu0 %v2075
    %2161 = vmatpush.bf16.msra.mxu0 %v2071
    %2162 = vmatpush.bf16.msra.mxu0 %v2067
    %2163 = vmatmul.bf16.gmra.mxu0 %v1926
    %v2164 = vpop.f32.mrf.mxu0
    %v2165 = vadd.f32 %v1963, %v2164
    %v2166 = vpop.f32.mrf.mxu0
    %2167 = vdwg.mxu0
    %2168 = vmatpush.bf16.msra.mxu0 %v2096
    %2169 = vmatpush.bf16.msra.mxu0 %v2092
    %2170 = vmatpush.bf16.msra.mxu0 %v2088
    %2171 = vmatpush.bf16.msra.mxu0 %v2084
    %2172 = vmatpush.bf16.msra.mxu0 %v2080
    %2173 = vmatpush.bf16.msra.mxu0 %v2076
    %2174 = vmatpush.bf16.msra.mxu0 %v2072
    %2175 = vmatpush.bf16.msra.mxu0 %v2068
    %2176 = vmatmul.bf16.gmra.mxu0 %v1926
    %v2177 = vpop.f32.mrf.mxu0
    %v2178 = vadd.f32 %v1964, %v2177
    %v2179 = vpop.f32.mrf.mxu0
    %2180 = vdwg.mxu0
    %v2181 = vmax.f32 %v2139, 0.0
    %v2182 = vmax.f32 %v2152, 0.0
    %v2183 = vmax.f32 %v2165, 0.0
    %v2184 = vmax.f32 %v2178, 0.0
    %v2185 = vpack.c.bf16 %v2181, %v2181
    %v2186 = vpack.c.bf16 %v2182, %v2182
    %v2187 = vpack.c.bf16 %v2183, %v2183
    %v2188 = vpack.c.bf16 %v2184, %v2184
    %v2189 = vld [vmem:[%s7] sm:$0xff]
    %v2190 = vld [vmem:[%s7 + $0x8] sm:$0xff]
    %v2191 = vld [vmem:[%s7 + $0x10] sm:$0xff]
    %v2192 = vld [vmem:[%s7 + $0x18] sm:$0xf]
    %v2193 = vld [vmem:[%s7 + $0x1c] sm:$0xff]
    %v2194 = vld [vmem:[%s7 + $0x24] sm:$0xff]
    %v2195 = vld [vmem:[%s7 + $0x2c] sm:$0xff]
    %v2196 = vld [vmem:[%s7 + $0x34] sm:$0xf]
    %v2197 = vld [vmem:[%s7 + $0x38] sm:$0xff]
    %v2198 = vld [vmem:[%s7 + $0x40] sm:$0xff]
    %v2199 = vld [vmem:[%s7 + $0x48] sm:$0xff]
    %v2200 = vld [vmem:[%s7 + $0x50] sm:$0xf]
    %v2201 = vld [vmem:[%s7 + $0x54] sm:$0xff]
    %v2202 = vld [vmem:[%s7 + $0x5c] sm:$0xff]
    %v2203 = vld [vmem:[%s7 + $0x64] sm:$0xff]
    %v2204 = vld [vmem:[%s7 + $0x6c] sm:$0xf]
    %v2205 = vld [vmem:[%s7 + $0x70] sm:$0xff]
    %v2206 = vld [vmem:[%s7 + $0x78] sm:$0xff]
    %v2207 = vld [vmem:[%s7 + $0x80] sm:$0xff]
    %v2208 = vld [vmem:[%s7 + $0x88] sm:$0xf]
    %v2209 = vld [vmem:[%s7 + $0x8c] sm:$0xff]
    %v2210 = vld [vmem:[%s7 + $0x94] sm:$0xff]
    %v2211 = vld [vmem:[%s7 + $0x9c] sm:$0xff]
    %v2212 = vld [vmem:[%s7 + $0xa4] sm:$0xf]
    %v2213 = vld [vmem:[%s7 + $0xa8] sm:$0xff]
    %v2214 = vld [vmem:[%s7 + $0xb0] sm:$0xff]
    %v2215 = vld [vmem:[%s7 + $0xb8] sm:$0xff]
    %v2216 = vld [vmem:[%s7 + $0xc0] sm:$0xf]
    %v2217 = vld [vmem:[%s7 + $0xc4] sm:$0xff]
    %v2218 = vld [vmem:[%s7 + $0xcc] sm:$0xff]
    %v2219 = vld [vmem:[%s7 + $0xd4] sm:$0xff]
    %v2220 = vld [vmem:[%s7 + $0xdc] sm:$0xf]
    %v2221 = vld [vmem:[%s7 + $0xe0] sm:$0xff]
    %v2222 = vld [vmem:[%s7 + $0xe8] sm:$0xff]
    %v2223 = vld [vmem:[%s7 + $0xf0] sm:$0xff]
    %v2224 = vld [vmem:[%s7 + $0xf8] sm:$0xf]
    %v2225 = vld [vmem:[%s7 + $0xfc] sm:$0xff]
    %v2226 = vld [vmem:[%s7 + $0x104] sm:$0xff]
    %v2227 = vld [vmem:[%s7 + $0x10c] sm:$0xff]
    %v2228 = vld [vmem:[%s7 + $0x114] sm:$0xf]
    %v2229 = vld [vmem:[%s7 + $0x118] sm:$0xff]
    %v2230 = vld [vmem:[%s7 + $0x120] sm:$0xff]
    %v2231 = vld [vmem:[%s7 + $0x128] sm:$0xff]
    %v2232 = vld [vmem:[%s7 + $0x130] sm:$0xf]
    %v2233 = vld [vmem:[%s7 + $0x134] sm:$0xff]
    %v2234 = vld [vmem:[%s7 + $0x13c] sm:$0xff]
    %v2235 = vld [vmem:[%s7 + $0x144] sm:$0xff]
    %v2236 = vld [vmem:[%s7 + $0x14c] sm:$0xf]
    %v2237 = vld [vmem:[%s7 + $0x150] sm:$0xff]
    %v2238 = vld [vmem:[%s7 + $0x158] sm:$0xff]
    %v2239 = vld [vmem:[%s7 + $0x160] sm:$0xff]
    %v2240 = vld [vmem:[%s7 + $0x168] sm:$0xf]
    %v2241 = vld [vmem:[%s7 + $0x16c] sm:$0xff]
    %v2242 = vld [vmem:[%s7 + $0x174] sm:$0xff]
    %v2243 = vld [vmem:[%s7 + $0x17c] sm:$0xff]
    %v2244 = vld [vmem:[%s7 + $0x184] sm:$0xf]
    %v2245 = vld [vmem:[%s7 + $0x188] sm:$0xff]
    %v2246 = vld [vmem:[%s7 + $0x190] sm:$0xff]
    %v2247 = vld [vmem:[%s7 + $0x198] sm:$0xff]
    %v2248 = vld [vmem:[%s7 + $0x1a0] sm:$0xf]
    %v2249 = vld [vmem:[%s7 + $0x1a4] sm:$0xff]
    %v2250 = vld [vmem:[%s7 + $0x1ac] sm:$0xff]
    %v2251 = vld [vmem:[%s7 + $0x1b4] sm:$0xff]
    %v2252 = vld [vmem:[%s7 + $0x1bc] sm:$0xf]
    %v2253 = vld [vmem:[%s7 + $0x1c0] sm:$0xff]
    %v2254 = vld [vmem:[%s7 + $0x1c8] sm:$0xff]
    %v2255 = vld [vmem:[%s7 + $0x1d0] sm:$0xff]
    %v2256 = vld [vmem:[%s7 + $0x1d8] sm:$0xf]
    %v2257 = vld [vmem:[%s7 + $0x1dc] sm:$0xff]
    %v2258 = vld [vmem:[%s7 + $0x1e4] sm:$0xff]
    %v2259 = vld [vmem:[%s7 + $0x1ec] sm:$0xff]
    %v2260 = vld [vmem:[%s7 + $0x1f4] sm:$0xf]
    %v2261 = vld [vmem:[%s7 + $0x1f8] sm:$0xff]
    %v2262 = vld [vmem:[%s7 + $0x200] sm:$0xff]
    %v2263 = vld [vmem:[%s7 + $0x208] sm:$0xff]
    %v2264 = vld [vmem:[%s7 + $0x210] sm:$0xf]
    %v2265 = vld [vmem:[%s7 + $0x214] sm:$0xff]
    %v2266 = vld [vmem:[%s7 + $0x21c] sm:$0xff]
    %v2267 = vld [vmem:[%s7 + $0x224] sm:$0xff]
    %v2268 = vld [vmem:[%s7 + $0x22c] sm:$0xf]
    %v2269 = vld [vmem:[%s7 + $0x230] sm:$0xff]
    %v2270 = vld [vmem:[%s7 + $0x238] sm:$0xff]
    %v2271 = vld [vmem:[%s7 + $0x240] sm:$0xff]
    %v2272 = vld [vmem:[%s7 + $0x248] sm:$0xf]
    %v2273 = vld [vmem:[%s7 + $0x24c] sm:$0xff]
    %v2274 = vld [vmem:[%s7 + $0x254] sm:$0xff]
    %v2275 = vld [vmem:[%s7 + $0x25c] sm:$0xff]
    %v2276 = vld [vmem:[%s7 + $0x264] sm:$0xf]
    %v2277 = vld [vmem:[%s7 + $0x268] sm:$0xff]
    %v2278 = vld [vmem:[%s7 + $0x270] sm:$0xff]
    %v2279 = vld [vmem:[%s7 + $0x278] sm:$0xff]
    %v2280 = vld [vmem:[%s7 + $0x280] sm:$0xf]
    %v2281 = vld [vmem:[%s7 + $0x284] sm:$0xff]
    %v2282 = vld [vmem:[%s7 + $0x28c] sm:$0xff]
    %v2283 = vld [vmem:[%s7 + $0x294] sm:$0xff]
    %v2284 = vld [vmem:[%s7 + $0x29c] sm:$0xf]
    %v2285 = vld [vmem:[%s7 + $0x2a0] sm:$0xff]
    %v2286 = vld [vmem:[%s7 + $0x2a8] sm:$0xff]
    %v2287 = vld [vmem:[%s7 + $0x2b0] sm:$0xff]
    %v2288 = vld [vmem:[%s7 + $0x2b8] sm:$0xf]
    %v2289 = vld [vmem:[%s7 + $0x2bc] sm:$0xff]
    %v2290 = vld [vmem:[%s7 + $0x2c4] sm:$0xff]
    %v2291 = vld [vmem:[%s7 + $0x2cc] sm:$0xff]
    %v2292 = vld [vmem:[%s7 + $0x2d4] sm:$0xf]
    %v2293 = vld [vmem:[%s7 + $0x2d8] sm:$0xff]
    %v2294 = vld [vmem:[%s7 + $0x2e0] sm:$0xff]
    %v2295 = vld [vmem:[%s7 + $0x2e8] sm:$0xff]
    %v2296 = vld [vmem:[%s7 + $0x2f0] sm:$0xf]
    %v2297 = vld [vmem:[%s7 + $0x2f4] sm:$0xff]
    %v2298 = vld [vmem:[%s7 + $0x2fc] sm:$0xff]
    %v2299 = vld [vmem:[%s7 + $0x304] sm:$0xff]
    %v2300 = vld [vmem:[%s7 + $0x30c] sm:$0xf]
    %v2301 = vld [vmem:[%s7 + $0x310] sm:$0xff]
    %v2302 = vld [vmem:[%s7 + $0x318] sm:$0xff]
    %v2303 = vld [vmem:[%s7 + $0x320] sm:$0xff]
    %v2304 = vld [vmem:[%s7 + $0x328] sm:$0xf]
    %v2305 = vld [vmem:[%s7 + $0x32c] sm:$0xff]
    %v2306 = vld [vmem:[%s7 + $0x334] sm:$0xff]
    %v2307 = vld [vmem:[%s7 + $0x33c] sm:$0xff]
    %v2308 = vld [vmem:[%s7 + $0x344] sm:$0xf]
    %v2309 = vld [vmem:[%s7 + $0x348] sm:$0xff]
    %v2310 = vld [vmem:[%s7 + $0x350] sm:$0xff]
    %v2311 = vld [vmem:[%s7 + $0x358] sm:$0xff]
    %v2312 = vld [vmem:[%s7 + $0x360] sm:$0xf]
    %v2313 = vld [vmem:[%s7 + $0x364] sm:$0xff]
    %v2314 = vld [vmem:[%s7 + $0x36c] sm:$0xff]
    %v2315 = vld [vmem:[%s7 + $0x374] sm:$0xff]
    %v2316 = vld [vmem:[%s7 + $0x37c] sm:$0xf]
    %v2317 = vld [vmem:[%s7 + $0x380] sm:$0xff]
    %v2318 = vld [vmem:[%s7 + $0x388] sm:$0xff]
    %v2319 = vld [vmem:[%s7 + $0x390] sm:$0xff]
    %v2320 = vld [vmem:[%s7 + $0x398] sm:$0xf]
    %v2321 = vld [vmem:[%s7 + $0x39c] sm:$0xff]
    %v2322 = vld [vmem:[%s7 + $0x3a4] sm:$0xff]
    %v2323 = vld [vmem:[%s7 + $0x3ac] sm:$0xff]
    %v2324 = vld [vmem:[%s7 + $0x3b4] sm:$0xf]
    %v2325 = vld [vmem:[%s7 + $0x3b8] sm:$0xff]
    %v2326 = vld [vmem:[%s7 + $0x3c0] sm:$0xff]
    %v2327 = vld [vmem:[%s7 + $0x3c8] sm:$0xff]
    %v2328 = vld [vmem:[%s7 + $0x3d0] sm:$0xf]
    %v2329 = vld [vmem:[%s7 + $0x3d4] sm:$0xff]
    %v2330 = vld [vmem:[%s7 + $0x3dc] sm:$0xff]
    %v2331 = vld [vmem:[%s7 + $0x3e4] sm:$0xff]
    %v2332 = vld [vmem:[%s7 + $0x3ec] sm:$0xf]
    %v2333 = vld [vmem:[%s7 + $0x3f0] sm:$0xff]
    %v2334 = vld [vmem:[%s7 + $0x3f8] sm:$0xff]
    %v2335 = vld [vmem:[%s7 + $0x400] sm:$0xff]
    %v2336 = vld [vmem:[%s7 + $0x408] sm:$0xf]
    %v2337 = vld [vmem:[%s7 + $0x40c] sm:$0xff]
    %v2338 = vld [vmem:[%s7 + $0x414] sm:$0xff]
    %v2339 = vld [vmem:[%s7 + $0x41c] sm:$0xff]
    %v2340 = vld [vmem:[%s7 + $0x424] sm:$0xf]
    %v2341 = vld [vmem:[%s7 + $0x428] sm:$0xff]
    %v2342 = vld [vmem:[%s7 + $0x430] sm:$0xff]
    %v2343 = vld [vmem:[%s7 + $0x438] sm:$0xff]
    %v2344 = vld [vmem:[%s7 + $0x440] sm:$0xf]
    %v2345 = vld [vmem:[%s7 + $0x444] sm:$0xff]
    %v2346 = vld [vmem:[%s7 + $0x44c] sm:$0xff]
    %v2347 = vld [vmem:[%s7 + $0x454] sm:$0xff]
    %v2348 = vld [vmem:[%s7 + $0x45c] sm:$0xf]
    %v2349 = vld [vmem:[%s7 + $0x460] sm:$0xff]
    %v2350 = vld [vmem:[%s7 + $0x468] sm:$0xff]
    %v2351 = vld [vmem:[%s7 + $0x470] sm:$0xff]
    %v2352 = vld [vmem:[%s7 + $0x478] sm:$0xf]
    %v2353 = vld [vmem:[%s7 + $0x47c] sm:$0xff]
    %v2354 = vld [vmem:[%s7 + $0x484] sm:$0xff]
    %v2355 = vld [vmem:[%s7 + $0x48c] sm:$0xff]
    %v2356 = vld [vmem:[%s7 + $0x494] sm:$0xf]
    %v2357 = vld [vmem:[%s7 + $0x498] sm:$0xff]
    %v2358 = vld [vmem:[%s7 + $0x4a0] sm:$0xff]
    %v2359 = vld [vmem:[%s7 + $0x4a8] sm:$0xff]
    %v2360 = vld [vmem:[%s7 + $0x4b0] sm:$0xf]
    %v2361 = vld [vmem:[%s7 + $0x4b4] sm:$0xff]
    %v2362 = vld [vmem:[%s7 + $0x4bc] sm:$0xff]
    %v2363 = vld [vmem:[%s7 + $0x4c4] sm:$0xff]
    %v2364 = vld [vmem:[%s7 + $0x4cc] sm:$0xf]
    %v2365 = vld [vmem:[%s7 + $0x4d0] sm:$0xff]
    %v2366 = vld [vmem:[%s7 + $0x4d8] sm:$0xff]
    %v2367 = vld [vmem:[%s7 + $0x4e0] sm:$0xff]
    %v2368 = vld [vmem:[%s7 + $0x4e8] sm:$0xf]
    %v2369 = vld [vmem:[%s7 + $0x4ec] sm:$0xff]
    %v2370 = vld [vmem:[%s7 + $0x4f4] sm:$0xff]
    %v2371 = vld [vmem:[%s7 + $0x4fc] sm:$0xff]
    %v2372 = vld [vmem:[%s7 + $0x504] sm:$0xf]
    %v2373 = vld [vmem:[%s7 + $0x508] sm:$0xff]
    %v2374 = vld [vmem:[%s7 + $0x510] sm:$0xff]
    %v2375 = vld [vmem:[%s7 + $0x518] sm:$0xff]
    %v2376 = vld [vmem:[%s7 + $0x520] sm:$0xf]
    %v2377 = vld [vmem:[%s7 + $0x524] sm:$0xff]
    %v2378 = vld [vmem:[%s7 + $0x52c] sm:$0xff]
    %v2379 = vld [vmem:[%s7 + $0x534] sm:$0xff]
    %v2380 = vld [vmem:[%s7 + $0x53c] sm:$0xf]
    %v2381 = vld [vmem:[%s7 + $0x540] sm:$0xff]
    %v2382 = vld [vmem:[%s7 + $0x548] sm:$0xff]
    %v2383 = vld [vmem:[%s7 + $0x550] sm:$0xff]
    %v2384 = vld [vmem:[%s7 + $0x558] sm:$0xf]
    %v2385 = vld [vmem:[%s7 + $0x55c] sm:$0xff]
    %v2386 = vld [vmem:[%s7 + $0x564] sm:$0xff]
    %v2387 = vld [vmem:[%s7 + $0x56c] sm:$0xff]
    %v2388 = vld [vmem:[%s7 + $0x574] sm:$0xf]
    %v2389 = vld [vmem:[%s7 + $0x578] sm:$0xff]
    %v2390 = vld [vmem:[%s7 + $0x580] sm:$0xff]
    %v2391 = vld [vmem:[%s7 + $0x588] sm:$0xff]
    %v2392 = vld [vmem:[%s7 + $0x590] sm:$0xf]
    %v2393 = vld [vmem:[%s7 + $0x594] sm:$0xff]
    %v2394 = vld [vmem:[%s7 + $0x59c] sm:$0xff]
    %v2395 = vld [vmem:[%s7 + $0x5a4] sm:$0xff]
    %v2396 = vld [vmem:[%s7 + $0x5ac] sm:$0xf]
    %v2397 = vld [vmem:[%s7 + $0x5b0] sm:$0xff]
    %v2398 = vld [vmem:[%s7 + $0x5b8] sm:$0xff]
    %v2399 = vld [vmem:[%s7 + $0x5c0] sm:$0xff]
    %v2400 = vld [vmem:[%s7 + $0x5c8] sm:$0xf]
    %v2401 = vld [vmem:[%s7 + $0x5cc] sm:$0xff]
    %v2402 = vld [vmem:[%s7 + $0x5d4] sm:$0xff]
    %v2403 = vld [vmem:[%s7 + $0x5dc] sm:$0xff]
    %v2404 = vld [vmem:[%s7 + $0x5e4] sm:$0xf]
    %v2405 = vld [vmem:[%s7 + $0x5e8] sm:$0xff]
    %v2406 = vld [vmem:[%s7 + $0x5f0] sm:$0xff]
    %v2407 = vld [vmem:[%s7 + $0x5f8] sm:$0xff]
    %v2408 = vld [vmem:[%s7 + $0x600] sm:$0xf]
    %v2409 = vld [vmem:[%s7 + $0x604] sm:$0xff]
    %v2410 = vld [vmem:[%s7 + $0x60c] sm:$0xff]
    %v2411 = vld [vmem:[%s7 + $0x614] sm:$0xff]
    %v2412 = vld [vmem:[%s7 + $0x61c] sm:$0xf]
    %v2413 = vld [vmem:[%s7 + $0x620] sm:$0xff]
    %v2414 = vld [vmem:[%s7 + $0x628] sm:$0xff]
    %v2415 = vld [vmem:[%s7 + $0x630] sm:$0xff]
    %v2416 = vld [vmem:[%s7 + $0x638] sm:$0xf]
    %v2417 = vld [vmem:[%s7 + $0x63c] sm:$0xff]
    %v2418 = vld [vmem:[%s7 + $0x644] sm:$0xff]
    %v2419 = vld [vmem:[%s7 + $0x64c] sm:$0xff]
    %v2420 = vld [vmem:[%s7 + $0x654] sm:$0xf]
    %v2421 = vld [vmem:[%s7 + $0x658] sm:$0xff]
    %v2422 = vld [vmem:[%s7 + $0x660] sm:$0xff]
    %v2423 = vld [vmem:[%s7 + $0x668] sm:$0xff]
    %v2424 = vld [vmem:[%s7 + $0x670] sm:$0xf]
    %v2425 = vld [vmem:[%s7 + $0x674] sm:$0xff]
    %v2426 = vld [vmem:[%s7 + $0x67c] sm:$0xff]
    %v2427 = vld [vmem:[%s7 + $0x684] sm:$0xff]
    %v2428 = vld [vmem:[%s7 + $0x68c] sm:$0xf]
    %v2429 = vld [vmem:[%s7 + $0x690] sm:$0xff]
    %v2430 = vld [vmem:[%s7 + $0x698] sm:$0xff]
    %v2431 = vld [vmem:[%s7 + $0x6a0] sm:$0xff]
    %v2432 = vld [vmem:[%s7 + $0x6a8] sm:$0xf]
    %v2433 = vld [vmem:[%s7 + $0x6ac] sm:$0xff]
    %v2434 = vld [vmem:[%s7 + $0x6b4] sm:$0xff]
    %v2435 = vld [vmem:[%s7 + $0x6bc] sm:$0xff]
    %v2436 = vld [vmem:[%s7 + $0x6c4] sm:$0xf]
    %v2437 = vld [vmem:[%s7 + $0x6c8] sm:$0xff]
    %v2438 = vld [vmem:[%s7 + $0x6d0] sm:$0xff]
    %v2439 = vld [vmem:[%s7 + $0x6d8] sm:$0xff]
    %v2440 = vld [vmem:[%s7 + $0x6e0] sm:$0xf]
    %v2441 = vld [vmem:[%s7 + $0x6e4] sm:$0xff]
    %v2442 = vld [vmem:[%s7 + $0x6ec] sm:$0xff]
    %v2443 = vld [vmem:[%s7 + $0x6f4] sm:$0xff]
    %v2444 = vld [vmem:[%s7 + $0x6fc] sm:$0xf]
    %v2445 = vld [vmem:[%s8] sm:$0x7f]
    %v2447 = vperm.slane %v2445, 0
    %v2448 = vperm.slane %v2445, 1
    %v2449 = vperm.slane %v2445, 2
    %v2450 = vperm.slane %v2445, 3
    %v2451 = vperm.slane %v2445, 4
    %v2452 = vperm.slane %v2445, 5
    %v2453 = vperm.slane %v2445, 6
    %v2717 = vunpack.c.l.b16 %v2189
    %v2718 = vunpack.c.h.b16 %v2189
    %v2719 = vunpack.c.l.b16 %v2190
    %v2720 = vunpack.c.h.b16 %v2190
    %v2721 = vunpack.c.l.b16 %v2191
    %v2722 = vunpack.c.h.b16 %v2191
    %v2723 = vunpack.c.l.b16 %v2192
    %v2724 = vunpack.c.l.b16 %v2193
    %v2725 = vunpack.c.h.b16 %v2193
    %v2726 = vunpack.c.l.b16 %v2194
    %v2727 = vunpack.c.h.b16 %v2194
    %v2728 = vunpack.c.l.b16 %v2195
    %v2729 = vunpack.c.h.b16 %v2195
    %v2730 = vunpack.c.l.b16 %v2196
    %v2731 = vunpack.c.l.b16 %v2197
    %v2732 = vunpack.c.h.b16 %v2197
    %v2733 = vunpack.c.l.b16 %v2198
    %v2734 = vunpack.c.h.b16 %v2198
    %v2735 = vunpack.c.l.b16 %v2199
    %v2736 = vunpack.c.h.b16 %v2199
    %v2737 = vunpack.c.l.b16 %v2200
    %v2738 = vunpack.c.l.b16 %v2201
    %v2739 = vunpack.c.h.b16 %v2201
    %v2740 = vunpack.c.l.b16 %v2202
    %v2741 = vunpack.c.h.b16 %v2202
    %v2742 = vunpack.c.l.b16 %v2203
    %v2743 = vunpack.c.h.b16 %v2203
    %v2744 = vunpack.c.l.b16 %v2204
    %v2745 = vunpack.c.l.b16 %v2205
    %v2746 = vunpack.c.h.b16 %v2205
    %v2747 = vunpack.c.l.b16 %v2206
    %v2748 = vunpack.c.h.b16 %v2206
    %v2749 = vunpack.c.l.b16 %v2207
    %v2750 = vunpack.c.h.b16 %v2207
    %v2751 = vunpack.c.l.b16 %v2208
    %v2752 = vunpack.c.l.b16 %v2209
    %v2753 = vunpack.c.h.b16 %v2209
    %v2754 = vunpack.c.l.b16 %v2210
    %v2755 = vunpack.c.h.b16 %v2210
    %v2756 = vunpack.c.l.b16 %v2211
    %v2757 = vunpack.c.h.b16 %v2211
    %v2758 = vunpack.c.l.b16 %v2212
    %v2759 = vunpack.c.l.b16 %v2213
    %v2760 = vunpack.c.h.b16 %v2213
    %v2761 = vunpack.c.l.b16 %v2214
    %v2762 = vunpack.c.h.b16 %v2214
    %v2763 = vunpack.c.l.b16 %v2215
    %v2764 = vunpack.c.h.b16 %v2215
    %v2765 = vunpack.c.l.b16 %v2216
    %v2766 = vunpack.c.l.b16 %v2217
    %v2767 = vunpack.c.h.b16 %v2217
    %v2768 = vunpack.c.l.b16 %v2218
    %v2769 = vunpack.c.h.b16 %v2218
    %v2770 = vunpack.c.l.b16 %v2219
    %v2771 = vunpack.c.h.b16 %v2219
    %v2772 = vunpack.c.l.b16 %v2220
    %v2773 = vunpack.c.l.b16 %v2221
    %v2774 = vunpack.c.h.b16 %v2221
    %v2775 = vunpack.c.l.b16 %v2222
    %v2776 = vunpack.c.h.b16 %v2222
    %v2777 = vunpack.c.l.b16 %v2223
    %v2778 = vunpack.c.h.b16 %v2223
    %v2779 = vunpack.c.l.b16 %v2224
    %v2780 = vunpack.c.l.b16 %v2225
    %v2781 = vunpack.c.h.b16 %v2225
    %v2782 = vunpack.c.l.b16 %v2226
    %v2783 = vunpack.c.h.b16 %v2226
    %v2784 = vunpack.c.l.b16 %v2227
    %v2785 = vunpack.c.h.b16 %v2227
    %v2786 = vunpack.c.l.b16 %v2228
    %v2787 = vunpack.c.l.b16 %v2229
    %v2788 = vunpack.c.h.b16 %v2229
    %v2789 = vunpack.c.l.b16 %v2230
    %v2790 = vunpack.c.h.b16 %v2230
    %v2791 = vunpack.c.l.b16 %v2231
    %v2792 = vunpack.c.h.b16 %v2231
    %v2793 = vunpack.c.l.b16 %v2232
    %v2794 = vunpack.c.l.b16 %v2233
    %v2795 = vunpack.c.h.b16 %v2233
    %v2796 = vunpack.c.l.b16 %v2234
    %v2797 = vunpack.c.h.b16 %v2234
    %v2798 = vunpack.c.l.b16 %v2235
    %v2799 = vunpack.c.h.b16 %v2235
    %v2800 = vunpack.c.l.b16 %v2236
    %v2801 = vunpack.c.l.b16 %v2237
    %v2802 = vunpack.c.h.b16 %v2237
    %v2803 = vunpack.c.l.b16 %v2238
    %v2804 = vunpack.c.h.b16 %v2238
    %v2805 = vunpack.c.l.b16 %v2239
    %v2806 = vunpack.c.h.b16 %v2239
    %v2807 = vunpack.c.l.b16 %v2240
    %v2808 = vunpack.c.l.b16 %v2241
    %v2809 = vunpack.c.h.b16 %v2241
    %v2810 = vunpack.c.l.b16 %v2242
    %v2811 = vunpack.c.h.b16 %v2242
    %v2812 = vunpack.c.l.b16 %v2243
    %v2813 = vunpack.c.h.b16 %v2243
    %v2814 = vunpack.c.l.b16 %v2244
    %v2815 = vunpack.c.l.b16 %v2245
    %v2816 = vunpack.c.h.b16 %v2245
    %v2817 = vunpack.c.l.b16 %v2246
    %v2818 = vunpack.c.h.b16 %v2246
    %v2819 = vunpack.c.l.b16 %v2247
    %v2820 = vunpack.c.h.b16 %v2247
    %v2821 = vunpack.c.l.b16 %v2248
    %v2822 = vunpack.c.l.b16 %v2249
    %v2823 = vunpack.c.h.b16 %v2249
    %v2824 = vunpack.c.l.b16 %v2250
    %v2825 = vunpack.c.h.b16 %v2250
    %v2826 = vunpack.c.l.b16 %v2251
    %v2827 = vunpack.c.h.b16 %v2251
    %v2828 = vunpack.c.l.b16 %v2252
    %v2829 = vunpack.c.l.b16 %v2253
    %v2830 = vunpack.c.h.b16 %v2253
    %v2831 = vunpack.c.l.b16 %v2254
    %v2832 = vunpack.c.h.b16 %v2254
    %v2833 = vunpack.c.l.b16 %v2255
    %v2834 = vunpack.c.h.b16 %v2255
    %v2835 = vunpack.c.l.b16 %v2256
    %v2836 = vunpack.c.l.b16 %v2257
    %v2837 = vunpack.c.h.b16 %v2257
    %v2838 = vunpack.c.l.b16 %v2258
    %v2839 = vunpack.c.h.b16 %v2258
    %v2840 = vunpack.c.l.b16 %v2259
    %v2841 = vunpack.c.h.b16 %v2259
    %v2842 = vunpack.c.l.b16 %v2260
    %v2843 = vunpack.c.l.b16 %v2261
    %v2844 = vunpack.c.h.b16 %v2261
    %v2845 = vunpack.c.l.b16 %v2262
    %v2846 = vunpack.c.h.b16 %v2262
    %v2847 = vunpack.c.l.b16 %v2263
    %v2848 = vunpack.c.h.b16 %v2263
    %v2849 = vunpack.c.l.b16 %v2264
    %v2850 = vunpack.c.l.b16 %v2265
    %v2851 = vunpack.c.h.b16 %v2265
    %v2852 = vunpack.c.l.b16 %v2266
    %v2853 = vunpack.c.h.b16 %v2266
    %v2854 = vunpack.c.l.b16 %v2267
    %v2855 = vunpack.c.h.b16 %v2267
    %v2856 = vunpack.c.l.b16 %v2268
    %v2857 = vunpack.c.l.b16 %v2269
    %v2858 = vunpack.c.h.b16 %v2269
    %v2859 = vunpack.c.l.b16 %v2270
    %v2860 = vunpack.c.h.b16 %v2270
    %v2861 = vunpack.c.l.b16 %v2271
    %v2862 = vunpack.c.h.b16 %v2271
    %v2863 = vunpack.c.l.b16 %v2272
    %v2864 = vunpack.c.l.b16 %v2273
    %v2865 = vunpack.c.h.b16 %v2273
    %v2866 = vunpack.c.l.b16 %v2274
    %v2867 = vunpack.c.h.b16 %v2274
    %v2868 = vunpack.c.l.b16 %v2275
    %v2869 = vunpack.c.h.b16 %v2275
    %v2870 = vunpack.c.l.b16 %v2276
    %v2871 = vunpack.c.l.b16 %v2277
    %v2872 = vunpack.c.h.b16 %v2277
    %v2873 = vunpack.c.l.b16 %v2278
    %v2874 = vunpack.c.h.b16 %v2278
    %v2875 = vunpack.c.l.b16 %v2279
    %v2876 = vunpack.c.h.b16 %v2279
    %v2877 = vunpack.c.l.b16 %v2280
    %v2878 = vunpack.c.l.b16 %v2281
    %v2879 = vunpack.c.h.b16 %v2281
    %v2880 = vunpack.c.l.b16 %v2282
    %v2881 = vunpack.c.h.b16 %v2282
    %v2882 = vunpack.c.l.b16 %v2283
    %v2883 = vunpack.c.h.b16 %v2283
    %v2884 = vunpack.c.l.b16 %v2284
    %v2885 = vunpack.c.l.b16 %v2285
    %v2886 = vunpack.c.h.b16 %v2285
    %v2887 = vunpack.c.l.b16 %v2286
    %v2888 = vunpack.c.h.b16 %v2286
    %v2889 = vunpack.c.l.b16 %v2287
    %v2890 = vunpack.c.h.b16 %v2287
    %v2891 = vunpack.c.l.b16 %v2288
    %v2892 = vunpack.c.l.b16 %v2289
    %v2893 = vunpack.c.h.b16 %v2289
    %v2894 = vunpack.c.l.b16 %v2290
    %v2895 = vunpack.c.h.b16 %v2290
    %v2896 = vunpack.c.l.b16 %v2291
    %v2897 = vunpack.c.h.b16 %v2291
    %v2898 = vunpack.c.l.b16 %v2292
    %v2899 = vunpack.c.l.b16 %v2293
    %v2900 = vunpack.c.h.b16 %v2293
    %v2901 = vunpack.c.l.b16 %v2294
    %v2902 = vunpack.c.h.b16 %v2294
    %v2903 = vunpack.c.l.b16 %v2295
    %v2904 = vunpack.c.h.b16 %v2295
    %v2905 = vunpack.c.l.b16 %v2296
    %v2906 = vunpack.c.l.b16 %v2297
    %v2907 = vunpack.c.h.b16 %v2297
    %v2908 = vunpack.c.l.b16 %v2298
    %v2909 = vunpack.c.h.b16 %v2298
    %v2910 = vunpack.c.l.b16 %v2299
    %v2911 = vunpack.c.h.b16 %v2299
    %v2912 = vunpack.c.l.b16 %v2300
    %v2913 = vunpack.c.l.b16 %v2301
    %v2914 = vunpack.c.h.b16 %v2301
    %v2915 = vunpack.c.l.b16 %v2302
    %v2916 = vunpack.c.h.b16 %v2302
    %v2917 = vunpack.c.l.b16 %v2303
    %v2918 = vunpack.c.h.b16 %v2303
    %v2919 = vunpack.c.l.b16 %v2304
    %v2920 = vunpack.c.l.b16 %v2305
    %v2921 = vunpack.c.h.b16 %v2305
    %v2922 = vunpack.c.l.b16 %v2306
    %v2923 = vunpack.c.h.b16 %v2306
    %v2924 = vunpack.c.l.b16 %v2307
    %v2925 = vunpack.c.h.b16 %v2307
    %v2926 = vunpack.c.l.b16 %v2308
    %v2927 = vunpack.c.l.b16 %v2309
    %v2928 = vunpack.c.h.b16 %v2309
    %v2929 = vunpack.c.l.b16 %v2310
    %v2930 = vunpack.c.h.b16 %v2310
    %v2931 = vunpack.c.l.b16 %v2311
    %v2932 = vunpack.c.h.b16 %v2311
    %v2933 = vunpack.c.l.b16 %v2312
    %v2934 = vunpack.c.l.b16 %v2313
    %v2935 = vunpack.c.h.b16 %v2313
    %v2936 = vunpack.c.l.b16 %v2314
    %v2937 = vunpack.c.h.b16 %v2314
    %v2938 = vunpack.c.l.b16 %v2315
    %v2939 = vunpack.c.h.b16 %v2315
    %v2940 = vunpack.c.l.b16 %v2316
    %v2941 = vunpack.c.l.b16 %v2317
    %v2942 = vunpack.c.h.b16 %v2317
    %v2943 = vunpack.c.l.b16 %v2318
    %v2944 = vunpack.c.h.b16 %v2318
    %v2945 = vunpack.c.l.b16 %v2319
    %v2946 = vunpack.c.h.b16 %v2319
    %v2947 = vunpack.c.l.b16 %v2320
    %v2948 = vunpack.c.l.b16 %v2321
    %v2949 = vunpack.c.h.b16 %v2321
    %v2950 = vunpack.c.l.b16 %v2322
    %v2951 = vunpack.c.h.b16 %v2322
    %v2952 = vunpack.c.l.b16 %v2323
    %v2953 = vunpack.c.h.b16 %v2323
    %v2954 = vunpack.c.l.b16 %v2324
    %v2955 = vunpack.c.l.b16 %v2325
    %v2956 = vunpack.c.h.b16 %v2325
    %v2957 = vunpack.c.l.b16 %v2326
    %v2958 = vunpack.c.h.b16 %v2326
    %v2959 = vunpack.c.l.b16 %v2327
    %v2960 = vunpack.c.h.b16 %v2327
    %v2961 = vunpack.c.l.b16 %v2328
    %v2962 = vunpack.c.l.b16 %v2329
    %v2963 = vunpack.c.h.b16 %v2329
    %v2964 = vunpack.c.l.b16 %v2330
    %v2965 = vunpack.c.h.b16 %v2330
    %v2966 = vunpack.c.l.b16 %v2331
    %v2967 = vunpack.c.h.b16 %v2331
    %v2968 = vunpack.c.l.b16 %v2332
    %v2969 = vunpack.c.l.b16 %v2333
    %v2970 = vunpack.c.h.b16 %v2333
    %v2971 = vunpack.c.l.b16 %v2334
    %v2972 = vunpack.c.h.b16 %v2334
    %v2973 = vunpack.c.l.b16 %v2335
    %v2974 = vunpack.c.h.b16 %v2335
    %v2975 = vunpack.c.l.b16 %v2336
    %v2976 = vunpack.c.l.b16 %v2337
    %v2977 = vunpack.c.h.b16 %v2337
    %v2978 = vunpack.c.l.b16 %v2338
    %v2979 = vunpack.c.h.b16 %v2338
    %v2980 = vunpack.c.l.b16 %v2339
    %v2981 = vunpack.c.h.b16 %v2339
    %v2982 = vunpack.c.l.b16 %v2340
    %v2983 = vunpack.c.l.b16 %v2341
    %v2984 = vunpack.c.h.b16 %v2341
    %v2985 = vunpack.c.l.b16 %v2342
    %v2986 = vunpack.c.h.b16 %v2342
    %v2987 = vunpack.c.l.b16 %v2343
    %v2988 = vunpack.c.h.b16 %v2343
    %v2989 = vunpack.c.l.b16 %v2344
    %v2990 = vunpack.c.l.b16 %v2345
    %v2991 = vunpack.c.h.b16 %v2345
    %v2992 = vunpack.c.l.b16 %v2346
    %v2993 = vunpack.c.h.b16 %v2346
    %v2994 = vunpack.c.l.b16 %v2347
    %v2995 = vunpack.c.h.b16 %v2347
    %v2996 = vunpack.c.l.b16 %v2348
    %v2997 = vunpack.c.l.b16 %v2349
    %v2998 = vunpack.c.h.b16 %v2349
    %v2999 = vunpack.c.l.b16 %v2350
    %v3000 = vunpack.c.h.b16 %v2350
    %v3001 = vunpack.c.l.b16 %v2351
    %v3002 = vunpack.c.h.b16 %v2351
    %v3003 = vunpack.c.l.b16 %v2352
    %v3004 = vunpack.c.l.b16 %v2353
    %v3005 = vunpack.c.h.b16 %v2353
    %v3006 = vunpack.c.l.b16 %v2354
    %v3007 = vunpack.c.h.b16 %v2354
    %v3008 = vunpack.c.l.b16 %v2355
    %v3009 = vunpack.c.h.b16 %v2355
    %v3010 = vunpack.c.l.b16 %v2356
    %v3011 = vunpack.c.l.b16 %v2357
    %v3012 = vunpack.c.h.b16 %v2357
    %v3013 = vunpack.c.l.b16 %v2358
    %v3014 = vunpack.c.h.b16 %v2358
    %v3015 = vunpack.c.l.b16 %v2359
    %v3016 = vunpack.c.h.b16 %v2359
    %v3017 = vunpack.c.l.b16 %v2360
    %v3018 = vunpack.c.l.b16 %v2361
    %v3019 = vunpack.c.h.b16 %v2361
    %v3020 = vunpack.c.l.b16 %v2362
    %v3021 = vunpack.c.h.b16 %v2362
    %v3022 = vunpack.c.l.b16 %v2363
    %v3023 = vunpack.c.h.b16 %v2363
    %v3024 = vunpack.c.l.b16 %v2364
    %v3025 = vunpack.c.l.b16 %v2365
    %v3026 = vunpack.c.h.b16 %v2365
    %v3027 = vunpack.c.l.b16 %v2366
    %v3028 = vunpack.c.h.b16 %v2366
    %v3029 = vunpack.c.l.b16 %v2367
    %v3030 = vunpack.c.h.b16 %v2367
    %v3031 = vunpack.c.l.b16 %v2368
    %v3032 = vunpack.c.l.b16 %v2369
    %v3033 = vunpack.c.h.b16 %v2369
    %v3034 = vunpack.c.l.b16 %v2370
    %v3035 = vunpack.c.h.b16 %v2370
    %v3036 = vunpack.c.l.b16 %v2371
    %v3037 = vunpack.c.h.b16 %v2371
    %v3038 = vunpack.c.l.b16 %v2372
    %v3039 = vunpack.c.l.b16 %v2373
    %v3040 = vunpack.c.h.b16 %v2373
    %v3041 = vunpack.c.l.b16 %v2374
    %v3042 = vunpack.c.h.b16 %v2374
    %v3043 = vunpack.c.l.b16 %v2375
    %v3044 = vunpack.c.h.b16 %v2375
    %v3045 = vunpack.c.l.b16 %v2376
    %v3046 = vunpack.c.l.b16 %v2377
    %v3047 = vunpack.c.h.b16 %v2377
    %v3048 = vunpack.c.l.b16 %v2378
    %v3049 = vunpack.c.h.b16 %v2378
    %v3050 = vunpack.c.l.b16 %v2379
    %v3051 = vunpack.c.h.b16 %v2379
    %v3052 = vunpack.c.l.b16 %v2380
    %v3053 = vunpack.c.l.b16 %v2381
    %v3054 = vunpack.c.h.b16 %v2381
    %v3055 = vunpack.c.l.b16 %v2382
    %v3056 = vunpack.c.h.b16 %v2382
    %v3057 = vunpack.c.l.b16 %v2383
    %v3058 = vunpack.c.h.b16 %v2383
    %v3059 = vunpack.c.l.b16 %v2384
    %v3060 = vunpack.c.l.b16 %v2385
    %v3061 = vunpack.c.h.b16 %v2385
    %v3062 = vunpack.c.l.b16 %v2386
    %v3063 = vunpack.c.h.b16 %v2386
    %v3064 = vunpack.c.l.b16 %v2387
    %v3065 = vunpack.c.h.b16 %v2387
    %v3066 = vunpack.c.l.b16 %v2388
    %v3067 = vunpack.c.l.b16 %v2389
    %v3068 = vunpack.c.h.b16 %v2389
    %v3069 = vunpack.c.l.b16 %v2390
    %v3070 = vunpack.c.h.b16 %v2390
    %v3071 = vunpack.c.l.b16 %v2391
    %v3072 = vunpack.c.h.b16 %v2391
    %v3073 = vunpack.c.l.b16 %v2392
    %v3074 = vunpack.c.l.b16 %v2393
    %v3075 = vunpack.c.h.b16 %v2393
    %v3076 = vunpack.c.l.b16 %v2394
    %v3077 = vunpack.c.h.b16 %v2394
    %v3078 = vunpack.c.l.b16 %v2395
    %v3079 = vunpack.c.h.b16 %v2395
    %v3080 = vunpack.c.l.b16 %v2396
    %v3081 = vunpack.c.l.b16 %v2397
    %v3082 = vunpack.c.h.b16 %v2397
    %v3083 = vunpack.c.l.b16 %v2398
    %v3084 = vunpack.c.h.b16 %v2398
    %v3085 = vunpack.c.l.b16 %v2399
    %v3086 = vunpack.c.h.b16 %v2399
    %v3087 = vunpack.c.l.b16 %v2400
    %v3088 = vunpack.c.l.b16 %v2401
    %v3089 = vunpack.c.h.b16 %v2401
    %v3090 = vunpack.c.l.b16 %v2402
    %v3091 = vunpack.c.h.b16 %v2402
    %v3092 = vunpack.c.l.b16 %v2403
    %v3093 = vunpack.c.h.b16 %v2403
    %v3094 = vunpack.c.l.b16 %v2404
    %v3095 = vunpack.c.l.b16 %v2405
    %v3096 = vunpack.c.h.b16 %v2405
    %v3097 = vunpack.c.l.b16 %v2406
    %v3098 = vunpack.c.h.b16 %v2406
    %v3099 = vunpack.c.l.b16 %v2407
    %v3100 = vunpack.c.h.b16 %v2407
    %v3101 = vunpack.c.l.b16 %v2408
    %v3102 = vunpack.c.l.b16 %v2409
    %v3103 = vunpack.c.h.b16 %v2409
    %v3104 = vunpack.c.l.b16 %v2410
    %v3105 = vunpack.c.h.b16 %v2410
    %v3106 = vunpack.c.l.b16 %v2411
    %v3107 = vunpack.c.h.b16 %v2411
    %v3108 = vunpack.c.l.b16 %v2412
    %v3109 = vunpack.c.l.b16 %v2413
    %v3110 = vunpack.c.h.b16 %v2413
    %v3111 = vunpack.c.l.b16 %v2414
    %v3112 = vunpack.c.h.b16 %v2414
    %v3113 = vunpack.c.l.b16 %v2415
    %v3114 = vunpack.c.h.b16 %v2415
    %v3115 = vunpack.c.l.b16 %v2416
    %v3116 = vunpack.c.l.b16 %v2417
    %v3117 = vunpack.c.h.b16 %v2417
    %v3118 = vunpack.c.l.b16 %v2418
    %v3119 = vunpack.c.h.b16 %v2418
    %v3120 = vunpack.c.l.b16 %v2419
    %v3121 = vunpack.c.h.b16 %v2419
    %v3122 = vunpack.c.l.b16 %v2420
    %v3123 = vunpack.c.l.b16 %v2421
    %v3124 = vunpack.c.h.b16 %v2421
    %v3125 = vunpack.c.l.b16 %v2422
    %v3126 = vunpack.c.h.b16 %v2422
    %v3127 = vunpack.c.l.b16 %v2423
    %v3128 = vunpack.c.h.b16 %v2423
    %v3129 = vunpack.c.l.b16 %v2424
    %v3130 = vunpack.c.l.b16 %v2425
    %v3131 = vunpack.c.h.b16 %v2425
    %v3132 = vunpack.c.l.b16 %v2426
    %v3133 = vunpack.c.h.b16 %v2426
    %v3134 = vunpack.c.l.b16 %v2427
    %v3135 = vunpack.c.h.b16 %v2427
    %v3136 = vunpack.c.l.b16 %v2428
    %v3137 = vunpack.c.l.b16 %v2429
    %v3138 = vunpack.c.h.b16 %v2429
    %v3139 = vunpack.c.l.b16 %v2430
    %v3140 = vunpack.c.h.b16 %v2430
    %v3141 = vunpack.c.l.b16 %v2431
    %v3142 = vunpack.c.h.b16 %v2431
    %v3143 = vunpack.c.l.b16 %v2432
    %v3144 = vunpack.c.l.b16 %v2433
    %v3145 = vunpack.c.h.b16 %v2433
    %v3146 = vunpack.c.l.b16 %v2434
    %v3147 = vunpack.c.h.b16 %v2434
    %v3148 = vunpack.c.l.b16 %v2435
    %v3149 = vunpack.c.h.b16 %v2435
    %v3150 = vunpack.c.l.b16 %v2436
    %v3151 = vunpack.c.l.b16 %v2437
    %v3152 = vunpack.c.h.b16 %v2437
    %v3153 = vunpack.c.l.b16 %v2438
    %v3154 = vunpack.c.h.b16 %v2438
    %v3155 = vunpack.c.l.b16 %v2439
    %v3156 = vunpack.c.h.b16 %v2439
    %v3157 = vunpack.c.l.b16 %v2440
    %v3158 = vunpack.c.l.b16 %v2441
    %v3159 = vunpack.c.h.b16 %v2441
    %v3160 = vunpack.c.l.b16 %v2442
    %v3161 = vunpack.c.h.b16 %v2442
    %v3162 = vunpack.c.l.b16 %v2443
    %v3163 = vunpack.c.h.b16 %v2443
    %v3164 = vunpack.c.l.b16 %v2444
    %v3165 = vpack.c.b16 %v2724, %v2717
    %v3166 = vpack.c.b16 %v2725, %v2718
    %v3167 = vpack.c.b16 %v2726, %v2719
    %v3168 = vpack.c.b16 %v2727, %v2720
    %v3169 = vpack.c.b16 %v2728, %v2721
    %v3170 = vpack.c.b16 %v2729, %v2722
    %v3171 = vpack.c.b16 %v2730, %v2723
    %v3172 = vpack.c.b16 %v2738, %v2731
    %v3173 = vpack.c.b16 %v2739, %v2732
    %v3174 = vpack.c.b16 %v2740, %v2733
    %v3175 = vpack.c.b16 %v2741, %v2734
    %v3176 = vpack.c.b16 %v2742, %v2735
    %v3177 = vpack.c.b16 %v2743, %v2736
    %v3178 = vpack.c.b16 %v2744, %v2737
    %v3179 = vpack.c.b16 %v2752, %v2745
    %v3180 = vpack.c.b16 %v2753, %v2746
    %v3181 = vpack.c.b16 %v2754, %v2747
    %v3182 = vpack.c.b16 %v2755, %v2748
    %v3183 = vpack.c.b16 %v2756, %v2749
    %v3184 = vpack.c.b16 %v2757, %v2750
    %v3185 = vpack.c.b16 %v2758, %v2751
    %v3186 = vpack.c.b16 %v2766, %v2759
    %v3187 = vpack.c.b16 %v2767, %v2760
    %v3188 = vpack.c.b16 %v2768, %v2761
    %v3189 = vpack.c.b16 %v2769, %v2762
    %v3190 = vpack.c.b16 %v2770, %v2763
    %v3191 = vpack.c.b16 %v2771, %v2764
    %v3192 = vpack.c.b16 %v2772, %v2765
    %v3193 = vpack.c.b16 %v2780, %v2773
    %v3194 = vpack.c.b16 %v2781, %v2774
    %v3195 = vpack.c.b16 %v2782, %v2775
    %v3196 = vpack.c.b16 %v2783, %v2776
    %v3197 = vpack.c.b16 %v2784, %v2777
    %v3198 = vpack.c.b16 %v2785, %v2778
    %v3199 = vpack.c.b16 %v2786, %v2779
    %v3200 = vpack.c.b16 %v2794, %v2787
    %v3201 = vpack.c.b16 %v2795, %v2788
    %v3202 = vpack.c.b16 %v2796, %v2789
    %v3203 = vpack.c.b16 %v2797, %v2790
    %v3204 = vpack.c.b16 %v2798, %v2791
    %v3205 = vpack.c.b16 %v2799, %v2792
    %v3206 = vpack.c.b16 %v2800, %v2793
    %v3207 = vpack.c.b16 %v2808, %v2801
    %v3208 = vpack.c.b16 %v2809, %v2802
    %v3209 = vpack.c.b16 %v2810, %v2803
    %v3210 = vpack.c.b16 %v2811, %v2804
    %v3211 = vpack.c.b16 %v2812, %v2805
    %v3212 = vpack.c.b16 %v2813, %v2806
    %v3213 = vpack.c.b16 %v2814, %v2807
    %v3214 = vpack.c.b16 %v2822, %v2815
    %v3215 = vpack.c.b16 %v2823, %v2816
    %v3216 = vpack.c.b16 %v2824, %v2817
    %v3217 = vpack.c.b16 %v2825, %v2818
    %v3218 = vpack.c.b16 %v2826, %v2819
    %v3219 = vpack.c.b16 %v2827, %v2820
    %v3220 = vpack.c.b16 %v2828, %v2821
    %v3221 = vpack.c.b16 %v2836, %v2829
    %v3222 = vpack.c.b16 %v2837, %v2830
    %v3223 = vpack.c.b16 %v2838, %v2831
    %v3224 = vpack.c.b16 %v2839, %v2832
    %v3225 = vpack.c.b16 %v2840, %v2833
    %v3226 = vpack.c.b16 %v2841, %v2834
    %v3227 = vpack.c.b16 %v2842, %v2835
    %v3228 = vpack.c.b16 %v2850, %v2843
    %v3229 = vpack.c.b16 %v2851, %v2844
    %v3230 = vpack.c.b16 %v2852, %v2845
    %v3231 = vpack.c.b16 %v2853, %v2846
    %v3232 = vpack.c.b16 %v2854, %v2847
    %v3233 = vpack.c.b16 %v2855, %v2848
    %v3234 = vpack.c.b16 %v2856, %v2849
    %v3235 = vpack.c.b16 %v2864, %v2857
    %v3236 = vpack.c.b16 %v2865, %v2858
    %v3237 = vpack.c.b16 %v2866, %v2859
    %v3238 = vpack.c.b16 %v2867, %v2860
    %v3239 = vpack.c.b16 %v2868, %v2861
    %v3240 = vpack.c.b16 %v2869, %v2862
    %v3241 = vpack.c.b16 %v2870, %v2863
    %v3242 = vpack.c.b16 %v2878, %v2871
    %v3243 = vpack.c.b16 %v2879, %v2872
    %v3244 = vpack.c.b16 %v2880, %v2873
    %v3245 = vpack.c.b16 %v2881, %v2874
    %v3246 = vpack.c.b16 %v2882, %v2875
    %v3247 = vpack.c.b16 %v2883, %v2876
    %v3248 = vpack.c.b16 %v2884, %v2877
    %v3249 = vpack.c.b16 %v2892, %v2885
    %v3250 = vpack.c.b16 %v2893, %v2886
    %v3251 = vpack.c.b16 %v2894, %v2887
    %v3252 = vpack.c.b16 %v2895, %v2888
    %v3253 = vpack.c.b16 %v2896, %v2889
    %v3254 = vpack.c.b16 %v2897, %v2890
    %v3255 = vpack.c.b16 %v2898, %v2891
    %v3256 = vpack.c.b16 %v2906, %v2899
    %v3257 = vpack.c.b16 %v2907, %v2900
    %v3258 = vpack.c.b16 %v2908, %v2901
    %v3259 = vpack.c.b16 %v2909, %v2902
    %v3260 = vpack.c.b16 %v2910, %v2903
    %v3261 = vpack.c.b16 %v2911, %v2904
    %v3262 = vpack.c.b16 %v2912, %v2905
    %v3263 = vpack.c.b16 %v2920, %v2913
    %v3264 = vpack.c.b16 %v2921, %v2914
    %v3265 = vpack.c.b16 %v2922, %v2915
    %v3266 = vpack.c.b16 %v2923, %v2916
    %v3267 = vpack.c.b16 %v2924, %v2917
    %v3268 = vpack.c.b16 %v2925, %v2918
    %v3269 = vpack.c.b16 %v2926, %v2919
    %v3270 = vpack.c.b16 %v2934, %v2927
    %v3271 = vpack.c.b16 %v2935, %v2928
    %v3272 = vpack.c.b16 %v2936, %v2929
    %v3273 = vpack.c.b16 %v2937, %v2930
    %v3274 = vpack.c.b16 %v2938, %v2931
    %v3275 = vpack.c.b16 %v2939, %v2932
    %v3276 = vpack.c.b16 %v2940, %v2933
    %v3277 = vpack.c.b16 %v2948, %v2941
    %v3278 = vpack.c.b16 %v2949, %v2942
    %v3279 = vpack.c.b16 %v2950, %v2943
    %v3280 = vpack.c.b16 %v2951, %v2944
    %v3281 = vpack.c.b16 %v2952, %v2945
    %v3282 = vpack.c.b16 %v2953, %v2946
    %v3283 = vpack.c.b16 %v2954, %v2947
    %v3284 = vpack.c.b16 %v2962, %v2955
    %v3285 = vpack.c.b16 %v2963, %v2956
    %v3286 = vpack.c.b16 %v2964, %v2957
    %v3287 = vpack.c.b16 %v2965, %v2958
    %v3288 = vpack.c.b16 %v2966, %v2959
    %v3289 = vpack.c.b16 %v2967, %v2960
    %v3290 = vpack.c.b16 %v2968, %v2961
    %v3291 = vpack.c.b16 %v2976, %v2969
    %v3292 = vpack.c.b16 %v2977, %v2970
    %v3293 = vpack.c.b16 %v2978, %v2971
    %v3294 = vpack.c.b16 %v2979, %v2972
    %v3295 = vpack.c.b16 %v2980, %v2973
    %v3296 = vpack.c.b16 %v2981, %v2974
    %v3297 = vpack.c.b16 %v2982, %v2975
    %v3298 = vpack.c.b16 %v2990, %v2983
    %v3299 = vpack.c.b16 %v2991, %v2984
    %v3300 = vpack.c.b16 %v2992, %v2985
    %v3301 = vpack.c.b16 %v2993, %v2986
    %v3302 = vpack.c.b16 %v2994, %v2987
    %v3303 = vpack.c.b16 %v2995, %v2988
    %v3304 = vpack.c.b16 %v2996, %v2989
    %v3305 = vpack.c.b16 %v3004, %v2997
    %v3306 = vpack.c.b16 %v3005, %v2998
    %v3307 = vpack.c.b16 %v3006, %v2999
    %v3308 = vpack.c.b16 %v3007, %v3000
    %v3309 = vpack.c.b16 %v3008, %v3001
    %v3310 = vpack.c.b16 %v3009, %v3002
    %v3311 = vpack.c.b16 %v3010, %v3003
    %v3312 = vpack.c.b16 %v3018, %v3011
    %v3313 = vpack.c.b16 %v3019, %v3012
    %v3314 = vpack.c.b16 %v3020, %v3013
    %v3315 = vpack.c.b16 %v3021, %v3014
    %v3316 = vpack.c.b16 %v3022, %v3015
    %v3317 = vpack.c.b16 %v3023, %v3016
    %v3318 = vpack.c.b16 %v3024, %v3017
    %v3319 = vpack.c.b16 %v3032, %v3025
    %v3320 = vpack.c.b16 %v3033, %v3026
    %v3321 = vpack.c.b16 %v3034, %v3027
    %v3322 = vpack.c.b16 %v3035, %v3028
    %v3323 = vpack.c.b16 %v3036, %v3029
    %v3324 = vpack.c.b16 %v3037, %v3030
    %v3325 = vpack.c.b16 %v3038, %v3031
    %v3326 = vpack.c.b16 %v3046, %v3039
    %v3327 = vpack.c.b16 %v3047, %v3040
    %v3328 = vpack.c.b16 %v3048, %v3041
    %v3329 = vpack.c.b16 %v3049, %v3042
    %v3330 = vpack.c.b16 %v3050, %v3043
    %v3331 = vpack.c.b16 %v3051, %v3044
    %v3332 = vpack.c.b16 %v3052, %v3045
    %v3333 = vpack.c.b16 %v3060, %v3053
    %v3334 = vpack.c.b16 %v3061, %v3054
    %v3335 = vpack.c.b16 %v3062, %v3055
    %v3336 = vpack.c.b16 %v3063, %v3056
    %v3337 = vpack.c.b16 %v3064, %v3057
    %v3338 = vpack.c.b16 %v3065, %v3058
    %v3339 = vpack.c.b16 %v3066, %v3059
    %v3340 = vpack.c.b16 %v3074, %v3067
    %v3341 = vpack.c.b16 %v3075, %v3068
    %v3342 = vpack.c.b16 %v3076, %v3069
    %v3343 = vpack.c.b16 %v3077, %v3070
    %v3344 = vpack.c.b16 %v3078, %v3071
    %v3345 = vpack.c.b16 %v3079, %v3072
    %v3346 = vpack.c.b16 %v3080, %v3073
    %v3347 = vpack.c.b16 %v3088, %v3081
    %v3348 = vpack.c.b16 %v3089, %v3082
    %v3349 = vpack.c.b16 %v3090, %v3083
    %v3350 = vpack.c.b16 %v3091, %v3084
    %v3351 = vpack.c.b16 %v3092, %v3085
    %v3352 = vpack.c.b16 %v3093, %v3086
    %v3353 = vpack.c.b16 %v3094, %v3087
    %v3354 = vpack.c.b16 %v3102, %v3095
    %v3355 = vpack.c.b16 %v3103, %v3096
    %v3356 = vpack.c.b16 %v3104, %v3097
    %v3357 = vpack.c.b16 %v3105, %v3098
    %v3358 = vpack.c.b16 %v3106, %v3099
    %v3359 = vpack.c.b16 %v3107, %v3100
    %v3360 = vpack.c.b16 %v3108, %v3101
    %v3361 = vpack.c.b16 %v3116, %v3109
    %v3362 = vpack.c.b16 %v3117, %v3110
    %v3363 = vpack.c.b16 %v3118, %v3111
    %v3364 = vpack.c.b16 %v3119, %v3112
    %v3365 = vpack.c.b16 %v3120, %v3113
    %v3366 = vpack.c.b16 %v3121, %v3114
    %v3367 = vpack.c.b16 %v3122, %v3115
    %v3368 = vpack.c.b16 %v3130, %v3123
    %v3369 = vpack.c.b16 %v3131, %v3124
    %v3370 = vpack.c.b16 %v3132, %v3125
    %v3371 = vpack.c.b16 %v3133, %v3126
    %v3372 = vpack.c.b16 %v3134, %v3127
    %v3373 = vpack.c.b16 %v3135, %v3128
    %v3374 = vpack.c.b16 %v3136, %v3129
    %v3375 = vpack.c.b16 %v3144, %v3137
    %v3376 = vpack.c.b16 %v3145, %v3138
    %v3377 = vpack.c.b16 %v3146, %v3139
    %v3378 = vpack.c.b16 %v3147, %v3140
    %v3379 = vpack.c.b16 %v3148, %v3141
    %v3380 = vpack.c.b16 %v3149, %v3142
    %v3381 = vpack.c.b16 %v3150, %v3143
    %v3382 = vpack.c.b16 %v3158, %v3151
    %v3383 = vpack.c.b16 %v3159, %v3152
    %v3384 = vpack.c.b16 %v3160, %v3153
    %v3385 = vpack.c.b16 %v3161, %v3154
    %v3386 = vpack.c.b16 %v3162, %v3155
    %v3387 = vpack.c.b16 %v3163, %v3156
    %v3388 = vpack.c.b16 %v3164, %v3157
    %3613 = vmatpush.bf16.msra.mxu0 %v3214
    %3614 = vmatpush.bf16.msra.mxu0 %v3207
    %3615 = vmatpush.bf16.msra.mxu0 %v3200
    %3616 = vmatpush.bf16.msra.mxu0 %v3193
    %3617 = vmatpush.bf16.msra.mxu0 %v3186
    %3618 = vmatpush.bf16.msra.mxu0 %v3179
    %3619 = vmatpush.bf16.msra.mxu0 %v3172
    %3620 = vmatpush.bf16.msra.mxu0 %v3165
    %3621 = vmatmul.bf16.gmra.mxu0 %v2185
    %v3622 = vpop.f32.mrf.mxu0
    %v3623 = vadd.f32 %v2447, %v3622
    %v3624 = vpop.f32.mrf.mxu0
    %3625 = vdwg.mxu0
    %3626 = vmatpush.bf16.msra.mxu0 %v3270
    %3627 = vmatpush.bf16.msra.mxu0 %v3263
    %3628 = vmatpush.bf16.msra.mxu0 %v3256
    %3629 = vmatpush.bf16.msra.mxu0 %v3249
    %3630 = vmatpush.bf16.msra.mxu0 %v3242
    %3631 = vmatpush.bf16.msra.mxu0 %v3235
    %3632 = vmatpush.bf16.msra.mxu0 %v3228
    %3633 = vmatpush.bf16.msra.mxu0 %v3221
    %3634 = vmatmul.bf16.gmra.mxu0 %v2186
    %v3635 = vpop.f32.mrf.mxu0
    %v3636 = vadd.f32 %v3623, %v3635
    %v3637 = vpop.f32.mrf.mxu0
    %3638 = vdwg.mxu0
    %3639 = vmatpush.bf16.msra.mxu0 %v3326
    %3640 = vmatpush.bf16.msra.mxu0 %v3319
    %3641 = vmatpush.bf16.msra.mxu0 %v3312
    %3642 = vmatpush.bf16.msra.mxu0 %v3305
    %3643 = vmatpush.bf16.msra.mxu0 %v3298
    %3644 = vmatpush.bf16.msra.mxu0 %v3291
    %3645 = vmatpush.bf16.msra.mxu0 %v3284
    %3646 = vmatpush.bf16.msra.mxu0 %v3277
    %3647 = vmatmul.bf16.gmra.mxu0 %v2187
    %v3648 = vpop.f32.mrf.mxu0
    %v3649 = vadd.f32 %v3636, %v3648
    %v3650 = vpop.f32.mrf.mxu0
    %3651 = vdwg.mxu0
    %3652 = vmatpush.bf16.msra.mxu0 %v3382
    %3653 = vmatpush.bf16.msra.mxu0 %v3375
    %3654 = vmatpush.bf16.msra.mxu0 %v3368
    %3655 = vmatpush.bf16.msra.mxu0 %v3361
    %3656 = vmatpush.bf16.msra.mxu0 %v3354
    %3657 = vmatpush.bf16.msra.mxu0 %v3347
    %3658 = vmatpush.bf16.msra.mxu0 %v3340
    %3659 = vmatpush.bf16.msra.mxu0 %v3333
    %3660 = vmatmul.bf16.gmra.mxu0 %v2188
    %v3661 = vpop.f32.mrf.mxu0
    %v3662 = vadd.f32 %v3649, %v3661
    %v3663 = vpop.f32.mrf.mxu0
    %3664 = vdwg.mxu0
    %3665 = vmatpush.bf16.msra.mxu0 %v3215
    %3666 = vmatpush.bf16.msra.mxu0 %v3208
    %3667 = vmatpush.bf16.msra.mxu0 %v3201
    %3668 = vmatpush.bf16.msra.mxu0 %v3194
    %3669 = vmatpush.bf16.msra.mxu0 %v3187
    %3670 = vmatpush.bf16.msra.mxu0 %v3180
    %3671 = vmatpush.bf16.msra.mxu0 %v3173
    %3672 = vmatpush.bf16.msra.mxu0 %v3166
    %3673 = vmatmul.bf16.gmra.mxu0 %v2185
    %v3674 = vpop.f32.mrf.mxu0
    %v3675 = vadd.f32 %v2448, %v3674
    %v3676 = vpop.f32.mrf.mxu0
    %3677 = vdwg.mxu0
    %3678 = vmatpush.bf16.msra.mxu0 %v3271
    %3679 = vmatpush.bf16.msra.mxu0 %v3264
    %3680 = vmatpush.bf16.msra.mxu0 %v3257
    %3681 = vmatpush.bf16.msra.mxu0 %v3250
    %3682 = vmatpush.bf16.msra.mxu0 %v3243
    %3683 = vmatpush.bf16.msra.mxu0 %v3236
    %3684 = vmatpush.bf16.msra.mxu0 %v3229
    %3685 = vmatpush.bf16.msra.mxu0 %v3222
    %3686 = vmatmul.bf16.gmra.mxu0 %v2186
    %v3687 = vpop.f32.mrf.mxu0
    %v3688 = vadd.f32 %v3675, %v3687
    %v3689 = vpop.f32.mrf.mxu0
    %3690 = vdwg.mxu0
    %3691 = vmatpush.bf16.msra.mxu0 %v3327
    %3692 = vmatpush.bf16.msra.mxu0 %v3320
    %3693 = vmatpush.bf16.msra.mxu0 %v3313
    %3694 = vmatpush.bf16.msra.mxu0 %v3306
    %3695 = vmatpush.bf16.msra.mxu0 %v3299
    %3696 = vmatpush.bf16.msra.mxu0 %v3292
    %3697 = vmatpush.bf16.msra.mxu0 %v3285
    %3698 = vmatpush.bf16.msra.mxu0 %v3278
    %3699 = vmatmul.bf16.gmra.mxu0 %v2187
    %v3700 = vpop.f32.mrf.mxu0
    %v3701 = vadd.f32 %v3688, %v3700
    %v3702 = vpop.f32.mrf.mxu0
    %3703 = vdwg.mxu0
    %3704 = vmatpush.bf16.msra.mxu0 %v3383
    %3705 = vmatpush.bf16.msra.mxu0 %v3376
    %3706 = vmatpush.bf16.msra.mxu0 %v3369
    %3707 = vmatpush.bf16.msra.mxu0 %v3362
    %3708 = vmatpush.bf16.msra.mxu0 %v3355
    %3709 = vmatpush.bf16.msra.mxu0 %v3348
    %3710 = vmatpush.bf16.msra.mxu0 %v3341
    %3711 = vmatpush.bf16.msra.mxu0 %v3334
    %3712 = vmatmul.bf16.gmra.mxu0 %v2188
    %v3713 = vpop.f32.mrf.mxu0
    %v3714 = vadd.f32 %v3701, %v3713
    %v3715 = vpop.f32.mrf.mxu0
    %3716 = vdwg.mxu0
    %3717 = vmatpush.bf16.msra.mxu0 %v3216
    %3718 = vmatpush.bf16.msra.mxu0 %v3209
    %3719 = vmatpush.bf16.msra.mxu0 %v3202
    %3720 = vmatpush.bf16.msra.mxu0 %v3195
    %3721 = vmatpush.bf16.msra.mxu0 %v3188
    %3722 = vmatpush.bf16.msra.mxu0 %v3181
    %3723 = vmatpush.bf16.msra.mxu0 %v3174
    %3724 = vmatpush.bf16.msra.mxu0 %v3167
    %3725 = vmatmul.bf16.gmra.mxu0 %v2185
    %v3726 = vpop.f32.mrf.mxu0
    %v3727 = vadd.f32 %v2449, %v3726
    %v3728 = vpop.f32.mrf.mxu0
    %3729 = vdwg.mxu0
    %3730 = vmatpush.bf16.msra.mxu0 %v3272
    %3731 = vmatpush.bf16.msra.mxu0 %v3265
    %3732 = vmatpush.bf16.msra.mxu0 %v3258
    %3733 = vmatpush.bf16.msra.mxu0 %v3251
    %3734 = vmatpush.bf16.msra.mxu0 %v3244
    %3735 = vmatpush.bf16.msra.mxu0 %v3237
    %3736 = vmatpush.bf16.msra.mxu0 %v3230
    %3737 = vmatpush.bf16.msra.mxu0 %v3223
    %3738 = vmatmul.bf16.gmra.mxu0 %v2186
    %v3739 = vpop.f32.mrf.mxu0
    %v3740 = vadd.f32 %v3727, %v3739
    %v3741 = vpop.f32.mrf.mxu0
    %3742 = vdwg.mxu0
    %3743 = vmatpush.bf16.msra.mxu0 %v3328
    %3744 = vmatpush.bf16.msra.mxu0 %v3321
    %3745 = vmatpush.bf16.msra.mxu0 %v3314
    %3746 = vmatpush.bf16.msra.mxu0 %v3307
    %3747 = vmatpush.bf16.msra.mxu0 %v3300
    %3748 = vmatpush.bf16.msra.mxu0 %v3293
    %3749 = vmatpush.bf16.msra.mxu0 %v3286
    %3750 = vmatpush.bf16.msra.mxu0 %v3279
    %3751 = vmatmul.bf16.gmra.mxu0 %v2187
    %v3752 = vpop.f32.mrf.mxu0
    %v3753 = vadd.f32 %v3740, %v3752
    %v3754 = vpop.f32.mrf.mxu0
    %3755 = vdwg.mxu0
    %3756 = vmatpush.bf16.msra.mxu0 %v3384
    %3757 = vmatpush.bf16.msra.mxu0 %v3377
    %3758 = vmatpush.bf16.msra.mxu0 %v3370
    %3759 = vmatpush.bf16.msra.mxu0 %v3363
    %3760 = vmatpush.bf16.msra.mxu0 %v3356
    %3761 = vmatpush.bf16.msra.mxu0 %v3349
    %3762 = vmatpush.bf16.msra.mxu0 %v3342
    %3763 = vmatpush.bf16.msra.mxu0 %v3335
    %3764 = vmatmul.bf16.gmra.mxu0 %v2188
    %v3765 = vpop.f32.mrf.mxu0
    %v3766 = vadd.f32 %v3753, %v3765
    %v3767 = vpop.f32.mrf.mxu0
    %3768 = vdwg.mxu0
    %3769 = vmatpush.bf16.msra.mxu0 %v3217
    %3770 = vmatpush.bf16.msra.mxu0 %v3210
    %3771 = vmatpush.bf16.msra.mxu0 %v3203
    %3772 = vmatpush.bf16.msra.mxu0 %v3196
    %3773 = vmatpush.bf16.msra.mxu0 %v3189
    %3774 = vmatpush.bf16.msra.mxu0 %v3182
    %3775 = vmatpush.bf16.msra.mxu0 %v3175
    %3776 = vmatpush.bf16.msra.mxu0 %v3168
    %3777 = vmatmul.bf16.gmra.mxu0 %v2185
    %v3778 = vpop.f32.mrf.mxu0
    %v3779 = vadd.f32 %v2450, %v3778
    %v3780 = vpop.f32.mrf.mxu0
    %3781 = vdwg.mxu0
    %3782 = vmatpush.bf16.msra.mxu0 %v3273
    %3783 = vmatpush.bf16.msra.mxu0 %v3266
    %3784 = vmatpush.bf16.msra.mxu0 %v3259
    %3785 = vmatpush.bf16.msra.mxu0 %v3252
    %3786 = vmatpush.bf16.msra.mxu0 %v3245
    %3787 = vmatpush.bf16.msra.mxu0 %v3238
    %3788 = vmatpush.bf16.msra.mxu0 %v3231
    %3789 = vmatpush.bf16.msra.mxu0 %v3224
    %3790 = vmatmul.bf16.gmra.mxu0 %v2186
    %v3791 = vpop.f32.mrf.mxu0
    %v3792 = vadd.f32 %v3779, %v3791
    %v3793 = vpop.f32.mrf.mxu0
    %3794 = vdwg.mxu0
    %3795 = vmatpush.bf16.msra.mxu0 %v3329
    %3796 = vmatpush.bf16.msra.mxu0 %v3322
    %3797 = vmatpush.bf16.msra.mxu0 %v3315
    %3798 = vmatpush.bf16.msra.mxu0 %v3308
    %3799 = vmatpush.bf16.msra.mxu0 %v3301
    %3800 = vmatpush.bf16.msra.mxu0 %v3294
    %3801 = vmatpush.bf16.msra.mxu0 %v3287
    %3802 = vmatpush.bf16.msra.mxu0 %v3280
    %3803 = vmatmul.bf16.gmra.mxu0 %v2187
    %v3804 = vpop.f32.mrf.mxu0
    %v3805 = vadd.f32 %v3792, %v3804
    %v3806 = vpop.f32.mrf.mxu0
    %3807 = vdwg.mxu0
    %3808 = vmatpush.bf16.msra.mxu0 %v3385
    %3809 = vmatpush.bf16.msra.mxu0 %v3378
    %3810 = vmatpush.bf16.msra.mxu0 %v3371
    %3811 = vmatpush.bf16.msra.mxu0 %v3364
    %3812 = vmatpush.bf16.msra.mxu0 %v3357
    %3813 = vmatpush.bf16.msra.mxu0 %v3350
    %3814 = vmatpush.bf16.msra.mxu0 %v3343
    %3815 = vmatpush.bf16.msra.mxu0 %v3336
    %3816 = vmatmul.bf16.gmra.mxu0 %v2188
    %v3817 = vpop.f32.mrf.mxu0
    %v3818 = vadd.f32 %v3805, %v3817
    %v3819 = vpop.f32.mrf.mxu0
    %3820 = vdwg.mxu0
    %3821 = vmatpush.bf16.msra.mxu0 %v3218
    %3822 = vmatpush.bf16.msra.mxu0 %v3211
    %3823 = vmatpush.bf16.msra.mxu0 %v3204
    %3824 = vmatpush.bf16.msra.mxu0 %v3197
    %3825 = vmatpush.bf16.msra.mxu0 %v3190
    %3826 = vmatpush.bf16.msra.mxu0 %v3183
    %3827 = vmatpush.bf16.msra.mxu0 %v3176
    %3828 = vmatpush.bf16.msra.mxu0 %v3169
    %3829 = vmatmul.bf16.gmra.mxu0 %v2185
    %v3830 = vpop.f32.mrf.mxu0
    %v3831 = vadd.f32 %v2451, %v3830
    %v3832 = vpop.f32.mrf.mxu0
    %3833 = vdwg.mxu0
    %3834 = vmatpush.bf16.msra.mxu0 %v3274
    %3835 = vmatpush.bf16.msra.mxu0 %v3267
    %3836 = vmatpush.bf16.msra.mxu0 %v3260
    %3837 = vmatpush.bf16.msra.mxu0 %v3253
    %3838 = vmatpush.bf16.msra.mxu0 %v3246
    %3839 = vmatpush.bf16.msra.mxu0 %v3239
    %3840 = vmatpush.bf16.msra.mxu0 %v3232
    %3841 = vmatpush.bf16.msra.mxu0 %v3225
    %3842 = vmatmul.bf16.gmra.mxu0 %v2186
    %v3843 = vpop.f32.mrf.mxu0
    %v3844 = vadd.f32 %v3831, %v3843
    %v3845 = vpop.f32.mrf.mxu0
    %3846 = vdwg.mxu0
    %3847 = vmatpush.bf16.msra.mxu0 %v3330
    %3848 = vmatpush.bf16.msra.mxu0 %v3323
    %3849 = vmatpush.bf16.msra.mxu0 %v3316
    %3850 = vmatpush.bf16.msra.mxu0 %v3309
    %3851 = vmatpush.bf16.msra.mxu0 %v3302
    %3852 = vmatpush.bf16.msra.mxu0 %v3295
    %3853 = vmatpush.bf16.msra.mxu0 %v3288
    %3854 = vmatpush.bf16.msra.mxu0 %v3281
    %3855 = vmatmul.bf16.gmra.mxu0 %v2187
    %v3856 = vpop.f32.mrf.mxu0
    %v3857 = vadd.f32 %v3844, %v3856
    %v3858 = vpop.f32.mrf.mxu0
    %3859 = vdwg.mxu0
    %3860 = vmatpush.bf16.msra.mxu0 %v3386
    %3861 = vmatpush.bf16.msra.mxu0 %v3379
    %3862 = vmatpush.bf16.msra.mxu0 %v3372
    %3863 = vmatpush.bf16.msra.mxu0 %v3365
    %3864 = vmatpush.bf16.msra.mxu0 %v3358
    %3865 = vmatpush.bf16.msra.mxu0 %v3351
    %3866 = vmatpush.bf16.msra.mxu0 %v3344
    %3867 = vmatpush.bf16.msra.mxu0 %v3337
    %3868 = vmatmul.bf16.gmra.mxu0 %v2188
    %v3869 = vpop.f32.mrf.mxu0
    %v3870 = vadd.f32 %v3857, %v3869
    %v3871 = vpop.f32.mrf.mxu0
    %3872 = vdwg.mxu0
    %3873 = vmatpush.bf16.msra.mxu0 %v3219
    %3874 = vmatpush.bf16.msra.mxu0 %v3212
    %3875 = vmatpush.bf16.msra.mxu0 %v3205
    %3876 = vmatpush.bf16.msra.mxu0 %v3198
    %3877 = vmatpush.bf16.msra.mxu0 %v3191
    %3878 = vmatpush.bf16.msra.mxu0 %v3184
    %3879 = vmatpush.bf16.msra.mxu0 %v3177
    %3880 = vmatpush.bf16.msra.mxu0 %v3170
    %3881 = vmatmul.bf16.gmra.mxu0 %v2185
    %v3882 = vpop.f32.mrf.mxu0
    %v3883 = vadd.f32 %v2452, %v3882
    %v3884 = vpop.f32.mrf.mxu0
    %3885 = vdwg.mxu0
    %3886 = vmatpush.bf16.msra.mxu0 %v3275
    %3887 = vmatpush.bf16.msra.mxu0 %v3268
    %3888 = vmatpush.bf16.msra.mxu0 %v3261
    %3889 = vmatpush.bf16.msra.mxu0 %v3254
    %3890 = vmatpush.bf16.msra.mxu0 %v3247
    %3891 = vmatpush.bf16.msra.mxu0 %v3240
    %3892 = vmatpush.bf16.msra.mxu0 %v3233
    %3893 = vmatpush.bf16.msra.mxu0 %v3226
    %3894 = vmatmul.bf16.gmra.mxu0 %v2186
    %v3895 = vpop.f32.mrf.mxu0
    %v3896 = vadd.f32 %v3883, %v3895
    %v3897 = vpop.f32.mrf.mxu0
    %3898 = vdwg.mxu0
    %3899 = vmatpush.bf16.msra.mxu0 %v3331
    %3900 = vmatpush.bf16.msra.mxu0 %v3324
    %3901 = vmatpush.bf16.msra.mxu0 %v3317
    %3902 = vmatpush.bf16.msra.mxu0 %v3310
    %3903 = vmatpush.bf16.msra.mxu0 %v3303
    %3904 = vmatpush.bf16.msra.mxu0 %v3296
    %3905 = vmatpush.bf16.msra.mxu0 %v3289
    %3906 = vmatpush.bf16.msra.mxu0 %v3282
    %3907 = vmatmul.bf16.gmra.mxu0 %v2187
    %v3908 = vpop.f32.mrf.mxu0
    %v3909 = vadd.f32 %v3896, %v3908
    %v3910 = vpop.f32.mrf.mxu0
    %3911 = vdwg.mxu0
    %3912 = vmatpush.bf16.msra.mxu0 %v3387
    %3913 = vmatpush.bf16.msra.mxu0 %v3380
    %3914 = vmatpush.bf16.msra.mxu0 %v3373
    %3915 = vmatpush.bf16.msra.mxu0 %v3366
    %3916 = vmatpush.bf16.msra.mxu0 %v3359
    %3917 = vmatpush.bf16.msra.mxu0 %v3352
    %3918 = vmatpush.bf16.msra.mxu0 %v3345
    %3919 = vmatpush.bf16.msra.mxu0 %v3338
    %3920 = vmatmul.bf16.gmra.mxu0 %v2188
    %v3921 = vpop.f32.mrf.mxu0
    %v3922 = vadd.f32 %v3909, %v3921
    %v3923 = vpop.f32.mrf.mxu0
    %3924 = vdwg.mxu0
    %3925 = vmatpush.bf16.msra.mxu0 %v3220
    %3926 = vmatpush.bf16.msra.mxu0 %v3213
    %3927 = vmatpush.bf16.msra.mxu0 %v3206
    %3928 = vmatpush.bf16.msra.mxu0 %v3199
    %3929 = vmatpush.bf16.msra.mxu0 %v3192
    %3930 = vmatpush.bf16.msra.mxu0 %v3185
    %3931 = vmatpush.bf16.msra.mxu0 %v3178
    %3932 = vmatpush.bf16.msra.mxu0 %v3171
    %3933 = vmatmul.bf16.gmra.mxu0 %v2185
    %v3934 = vpop.f32.mrf.mxu0
    %v3935 = vadd.f32 %v2453, %v3934
    %v3936 = vpop.f32.mrf.mxu0
    %3937 = vdwg.mxu0
    %3938 = vmatpush.bf16.msra.mxu0 %v3276
    %3939 = vmatpush.bf16.msra.mxu0 %v3269
    %3940 = vmatpush.bf16.msra.mxu0 %v3262
    %3941 = vmatpush.bf16.msra.mxu0 %v3255
    %3942 = vmatpush.bf16.msra.mxu0 %v3248
    %3943 = vmatpush.bf16.msra.mxu0 %v3241
    %3944 = vmatpush.bf16.msra.mxu0 %v3234
    %3945 = vmatpush.bf16.msra.mxu0 %v3227
    %3946 = vmatmul.bf16.gmra.mxu0 %v2186
    %v3947 = vpop.f32.mrf.mxu0
    %v3948 = vadd.f32 %v3935, %v3947
    %v3949 = vpop.f32.mrf.mxu0
    %3950 = vdwg.mxu0
    %3951 = vmatpush.bf16.msra.mxu0 %v3332
    %3952 = vmatpush.bf16.msra.mxu0 %v3325
    %3953 = vmatpush.bf16.msra.mxu0 %v3318
    %3954 = vmatpush.bf16.msra.mxu0 %v3311
    %3955 = vmatpush.bf16.msra.mxu0 %v3304
    %3956 = vmatpush.bf16.msra.mxu0 %v3297
    %3957 = vmatpush.bf16.msra.mxu0 %v3290
    %3958 = vmatpush.bf16.msra.mxu0 %v3283
    %3959 = vmatmul.bf16.gmra.mxu0 %v2187
    %v3960 = vpop.f32.mrf.mxu0
    %v3961 = vadd.f32 %v3948, %v3960
    %v3962 = vpop.f32.mrf.mxu0
    %3963 = vdwg.mxu0
    %3964 = vmatpush.bf16.msra.mxu0 %v3388
    %3965 = vmatpush.bf16.msra.mxu0 %v3381
    %3966 = vmatpush.bf16.msra.mxu0 %v3374
    %3967 = vmatpush.bf16.msra.mxu0 %v3367
    %3968 = vmatpush.bf16.msra.mxu0 %v3360
    %3969 = vmatpush.bf16.msra.mxu0 %v3353
    %3970 = vmatpush.bf16.msra.mxu0 %v3346
    %3971 = vmatpush.bf16.msra.mxu0 %v3339
    %3972 = vmatmul.bf16.gmra.mxu0 %v2188
    %v3973 = vpop.f32.mrf.mxu0
    %v3974 = vadd.f32 %v3961, %v3973
    %v3975 = vpop.f32.mrf.mxu0
    %3976 = vdwg.mxu0
    %v3977 = vxor.u32 %v3662, 2147483648
    %v3978 = vxor.u32 %v3714, 2147483648
    %v3979 = vxor.u32 %v3766, 2147483648
    %v3980 = vxor.u32 %v3818, 2147483648
    %v3981 = vxor.u32 %v3870, 2147483648
    %v3982 = vxor.u32 %v3922, 2147483648
    %v3983 = vxor.u32 %v3974, 2147483648
    %v3984 = vmul.f32 %v3977, 1.442695
    %v3985 = vpow.pop %v3984
    %v3986 = vmul.f32 %v3978, 1.442695
    %v3987 = vpow.pop %v3986
    %v3988 = vmul.f32 %v3979, 1.442695
    %v3989 = vpow.pop %v3988
    %v3990 = vmul.f32 %v3980, 1.442695
    %v3991 = vpow.pop %v3990
    %v3992 = vmul.f32 %v3981, 1.442695
    %v3993 = vpow.pop %v3992
    %v3994 = vmul.f32 %v3982, 1.442695
    %v3995 = vpow.pop %v3994
    %v3996 = vmul.f32 %v3983, 1.442695
    %v3997 = vpow.pop %v3996
    %v3998 = vadd.f32 %v3985, 1.0
    %v3999 = vadd.f32 %v3987, 1.0
    %v4000 = vadd.f32 %v3989, 1.0
    %v4001 = vadd.f32 %v3991, 1.0
    %v4002 = vadd.f32 %v3993, 1.0
    %v4003 = vadd.f32 %v3995, 1.0
    %v4004 = vadd.f32 %v3997, 1.0
    %v4005 = vrcp.pop %v3998
    %v4006 = vmul.f32 %v3998, %v4005
    %v4007 = vsub.f32 1.0, %v4006
    %v4008 = vmul.f32 %v4005, %v4007
    %v4009 = vadd.f32 %v4005, %v4008
    %vm4010 = vweird.f32 %v3998
    %vm4011 = vweird.f32 %v4005
    %vm4012 = vmor %vm4010, %vm4011
    %v4013 = vsel %vm4012, %v4005, %v4009
    %v4014 = vand.u32 2147483647, %v3998
    %vm4015 = vcmp.eq.f32.partialorder %v4014, 8.507059e+37
    %v4016 = vand.u32 %v3998, 2147483648
    %v4017 = vor.u32 1.1754944e-38, %v4016
    %v4018 = vsel %vm4015, %v4017, %v4013
    %v4019 = vmul.f32 1.0, %v4018
    %v4020 = vrcp.pop %v3999
    %v4021 = vmul.f32 %v3999, %v4020
    %v4022 = vsub.f32 1.0, %v4021
    %v4023 = vmul.f32 %v4020, %v4022
    %v4024 = vadd.f32 %v4020, %v4023
    %vm4025 = vweird.f32 %v3999
    %vm4026 = vweird.f32 %v4020
    %vm4027 = vmor %vm4025, %vm4026
    %v4028 = vsel %vm4027, %v4020, %v4024
    %v4029 = vand.u32 2147483647, %v3999
    %vm4030 = vcmp.eq.f32.partialorder %v4029, 8.507059e+37
    %v4031 = vand.u32 %v3999, 2147483648
    %v4032 = vor.u32 1.1754944e-38, %v4031
    %v4033 = vsel %vm4030, %v4032, %v4028
    %v4034 = vmul.f32 1.0, %v4033
    %v4035 = vrcp.pop %v4000
    %v4036 = vmul.f32 %v4000, %v4035
    %v4037 = vsub.f32 1.0, %v4036
    %v4038 = vmul.f32 %v4035, %v4037
    %v4039 = vadd.f32 %v4035, %v4038
    %vm4040 = vweird.f32 %v4000
    %vm4041 = vweird.f32 %v4035
    %vm4042 = vmor %vm4040, %vm4041
    %v4043 = vsel %vm4042, %v4035, %v4039
    %v4044 = vand.u32 2147483647, %v4000
    %vm4045 = vcmp.eq.f32.partialorder %v4044, 8.507059e+37
    %v4046 = vand.u32 %v4000, 2147483648
    %v4047 = vor.u32 1.1754944e-38, %v4046
    %v4048 = vsel %vm4045, %v4047, %v4043
    %v4049 = vmul.f32 1.0, %v4048
    %v4050 = vrcp.pop %v4001
    %v4051 = vmul.f32 %v4001, %v4050
    %v4052 = vsub.f32 1.0, %v4051
    %v4053 = vmul.f32 %v4050, %v4052
    %v4054 = vadd.f32 %v4050, %v4053
    %vm4055 = vweird.f32 %v4001
    %vm4056 = vweird.f32 %v4050
    %vm4057 = vmor %vm4055, %vm4056
    %v4058 = vsel %vm4057, %v4050, %v4054
    %v4059 = vand.u32 2147483647, %v4001
    %vm4060 = vcmp.eq.f32.partialorder %v4059, 8.507059e+37
    %v4061 = vand.u32 %v4001, 2147483648
    %v4062 = vor.u32 1.1754944e-38, %v4061
    %v4063 = vsel %vm4060, %v4062, %v4058
    %v4064 = vmul.f32 1.0, %v4063
    %v4065 = vrcp.pop %v4002
    %v4066 = vmul.f32 %v4002, %v4065
    %v4067 = vsub.f32 1.0, %v4066
    %v4068 = vmul.f32 %v4065, %v4067
    %v4069 = vadd.f32 %v4065, %v4068
    %vm4070 = vweird.f32 %v4002
    %vm4071 = vweird.f32 %v4065
    %vm4072 = vmor %vm4070, %vm4071
    %v4073 = vsel %vm4072, %v4065, %v4069
    %v4074 = vand.u32 2147483647, %v4002
    %vm4075 = vcmp.eq.f32.partialorder %v4074, 8.507059e+37
    %v4076 = vand.u32 %v4002, 2147483648
    %v4077 = vor.u32 1.1754944e-38, %v4076
    %v4078 = vsel %vm4075, %v4077, %v4073
    %v4079 = vmul.f32 1.0, %v4078
    %v4080 = vrcp.pop %v4003
    %v4081 = vmul.f32 %v4003, %v4080
    %v4082 = vsub.f32 1.0, %v4081
    %v4083 = vmul.f32 %v4080, %v4082
    %v4084 = vadd.f32 %v4080, %v4083
    %vm4085 = vweird.f32 %v4003
    %vm4086 = vweird.f32 %v4080
    %vm4087 = vmor %vm4085, %vm4086
    %v4088 = vsel %vm4087, %v4080, %v4084
    %v4089 = vand.u32 2147483647, %v4003
    %vm4090 = vcmp.eq.f32.partialorder %v4089, 8.507059e+37
    %v4091 = vand.u32 %v4003, 2147483648
    %v4092 = vor.u32 1.1754944e-38, %v4091
    %v4093 = vsel %vm4090, %v4092, %v4088
    %v4094 = vmul.f32 1.0, %v4093
    %v4095 = vrcp.pop %v4004
    %v4096 = vmul.f32 %v4004, %v4095
    %v4097 = vsub.f32 1.0, %v4096
    %v4098 = vmul.f32 %v4095, %v4097
    %v4099 = vadd.f32 %v4095, %v4098
    %vm4100 = vweird.f32 %v4004
    %vm4101 = vweird.f32 %v4095
    %vm4102 = vmor %vm4100, %vm4101
    %v4103 = vsel %vm4102, %v4095, %v4099
    %v4104 = vand.u32 2147483647, %v4004
    %vm4105 = vcmp.eq.f32.partialorder %v4104, 8.507059e+37
    %v4106 = vand.u32 %v4004, 2147483648
    %v4107 = vor.u32 1.1754944e-38, %v4106
    %v4108 = vsel %vm4105, %v4107, %v4103
    %v4109 = vmul.f32 1.0, %v4108
    %v4110 = vpack.c.bf16 %v4034, %v4019
    %v4111 = vpack.c.bf16 %v4064, %v4049
    %v4112 = vpack.c.bf16 %v4094, %v4079
    %v4113 = vpack.c.bf16 %v4109, %v4109
    %v4118 = vrot.slane %v4110, 3
    %v4119 = vrot.slane %v4111, 6
    %v4120 = vrot.slane %v4111, 1
    %v4121 = vrot.slane %v4112, 4
    %v4122 = vrot.slane %v4112, 7
    %v4123 = vrot.slane %v4113, 2
    %v4124 = vrot.slane %v4113, 5
    %vm4125 = vcmask 1040384
    %v4128 = vsel %vm4125, %v4110, %v4118
    %vm4129 = vcmask 1042434
    %v4132 = vsel %vm4129, %v4119, %v4120
    %vm4133 = vcmask 1041408
    %v4134 = vsel %vm4133, %v4128, %v4132
    %vm4135 = vcmask 1044484
    %v4138 = vsel %vm4135, %v4121, %v4122
    %vm4139 = vcmask 1046534
    %v4142 = vsel %vm4139, %v4123, %v4124
    %vm4143 = vcmask 1045508
    %v4144 = vsel %vm4143, %v4138, %v4142
    %vm4145 = vcmask 1043456
    %v4146 = vsel %vm4145, %v4134, %v4144
    %vm4148 = vcmask 1041409
    %vm4149 = vmor %vm4148, %vm4125
    %vm4150 = vmor %vm4129, %vm4149
    %vm4151 = vcmask 1043459
    %vm4152 = vmor %vm4151, %vm4150
    %vm4153 = vmor %vm4135, %vm4152
    %vm4154 = vcmask 1045509
    %vm4155 = vmor %vm4154, %vm4153
    %vm4156 = vcmask 129030
    %vm4157 = vmor %vm4156, %vm4155
    %4158 = vst.msk [vmem:[#allocation2] sm:$0x7f] %vm4157, %v4146
    %4159 = vst [vmem:[#allocation4] sm:$0x3] %v1923
    // Predicated region
    $region38: #{wae_forward.1} parent=1 // pred_check
      _
    $region39: #{wae_forward.1} parent=1 // pred_check_branch
      %4161 = sbr.rel (0) target = $region41
    $region40: #{wae_forward.1} parent=1 // pred_region
      %4163 = vsyncadd [#allocation3], 0
      %s4165 = sshll.u32 [#allocation2], 4
      %s4166 = int_to_ptr.vmem [resolvable:$true] %s4165
      %s4167 = sshll.u32 %s9, 4
      %s4168 = int_to_ptr.hbm [resolvable:$true] %s4167
      %4170 = dma.vmem_to_hbm [thread:$0]  %s4166, 112, %s4168, [#allocation3]
    $region41: #{wae_forward.1} parent=1 // pred_fallthru
      _
    // Predicated region
    $region42: #{wae_forward.1} parent=1 // pred_check
      _
    $region43: #{wae_forward.1} parent=1 // pred_check_branch
      %4172 = sbr.rel (0) target = $region45
    $region44: #{wae_forward.1} parent=1 // pred_region
      %4174 = vsyncadd [#allocation5], 0
      %s4176 = sshll.u32 [#allocation4], 4
      %s4177 = int_to_ptr.vmem [resolvable:$true] %s4176
      %s4178 = sshll.u32 %s10, 4
      %s4179 = int_to_ptr.hbm [resolvable:$true] %s4178
      %4181 = dma.vmem_to_hbm [thread:$0]  %s4177, 32, %s4179, [#allocation5]
    $region45: #{wae_forward.1} parent=1 // pred_fallthru
      _
    // Predicated region
    $region46: #{wae_forward.1} parent=1 // pred_check
      _
    $region47: #{wae_forward.1} parent=1 // pred_check_branch
      %4183 = sbr.rel (0) target = $region49
    $region48: #{wae_forward.1} parent=1 // pred_region
      %4185 = dma.done [#allocation3], 112
    $region49: #{wae_forward.1} parent=1 // pred_fallthru
      _
    // Predicated region
    $region50: #{wae_forward.1} parent=1 // pred_check
      _
    $region51: #{wae_forward.1} parent=1 // pred_check_branch
      %4187 = sbr.rel (0) target = $region53
    $region52: #{wae_forward.1} parent=1 // pred_region
      %4189 = dma.done [#allocation5], 32
    $region53: #{wae_forward.1} parent=1 // pred_fallthru
      _
    %4190 = vsyncpa [#allocation3], 1
    %4191 = vsyncpa [#allocation5], 1

</llo_original>
